<compile_context>
chip_gen: v7x
topology: tpu7x:2x2x1
jax: 0.10.0
libtpu: 0.0.40
codegen_flags: <defaults>
</compile_context>

<pallas_src>
import jax
import jax.numpy as jnp
import numpy as np
from jax.experimental import pallas as pl
from jax.experimental.pallas import tpu as pltpu

POOL_KS = (5, 9, 13)          # SPP max-pool kernel sizes (stride 1, pad k//2)
PH = max(POOL_KS) // 2        # = 6, -inf halo rows for the H (row) pass
PW = 8                        # -inf halo cols for the W pass (>= 6, rounded up
                              # to a sublane multiple so halo stores are aligned)


def _leaky(v):
    return jnp.where(v > 0, v, 0.1 * v)


def spp_kernel(x_ref, w1_ref, b1_ref, w2_ref, b2_ref, o_ref, padh_ref, padw_ref):
    # x_ref:  (1, H, W, C1)  bf16, one batch element, NHWC
    # w1_ref: (C1, Cm) bf16, b1_ref: (1, Cm) f32      fused cv1 conv+BN
    # w2_ref: (4, Cm, C2) bf16, b2_ref: (1, C2) f32   fused cv2 conv+BN
    #         leading dim of w2 = concat branch (identity, pool5, pool9, pool13)
    # o_ref:  (1, H, W, C2) f32
    # padh_ref: VMEM (H + 2*PH, W, Cm) f32   -inf-haloed rows, H (row) max pass
    # padw_ref: VMEM (H, W + 2*PW, Cm) f32   -inf-haloed cols, W (col) max pass
    _, H, W, C1 = x_ref.shape
    Cm = w1_ref.shape[1]
    C2 = w2_ref.shape[2]
    HW = H * W

    # --- halo init: only the margins, never the full buffers. ---
    padh_ref[0:PH, :, :] = jnp.full((PH, W, Cm), -jnp.inf, jnp.float32)
    padh_ref[PH + H:2 * PH + H, :, :] = jnp.full((PH, W, Cm), -jnp.inf, jnp.float32)
    padw_ref[:, 0:PW, :] = jnp.full((H, PW, Cm), -jnp.inf, jnp.float32)
    padw_ref[:, PW + W:2 * PW + W, :] = jnp.full((H, PW, Cm), -jnp.inf, jnp.float32)

    # --- cv1: 1x1 conv (+folded BN) + LeakyReLU; bf16 matmul, f32 accumulate ---
    x2 = x_ref[...].reshape(HW, C1)                     # W % 8 == 0 -> cheap reshape
    y = jnp.dot(x2, w1_ref[...], preferred_element_type=jnp.float32) + b1_ref[...]
    y = _leaky(y)                                       # (HW, Cm) f32
    y3 = y.reshape(H, W, Cm)

    # --- cv2 identity branch immediately: MXU work overlaps the pooling below ---
    w2 = w2_ref[...]                                    # (4, Cm, C2) bf16
    acc = jnp.dot(y.astype(jnp.bfloat16), w2[0],
                  preferred_element_type=jnp.float32) + b2_ref[...]

    # --- H (row) pass: dilated max cascade; every shift slices the untiled
    #     leading axis of padh_ref, so alignment never matters. ---
    padh_ref[PH:PH + H, :, :] = y3
    # rm5_ext[r + 4] = max over rows r-2..r+2, for output rows r in [-4, H+4)
    rm5_ext = padh_ref[0:H + 8, :, :]
    for s in range(1, 5):
        rm5_ext = jnp.maximum(rm5_ext, padh_ref[s:s + H + 8, :, :])
    # rm9_ext[r + 2] = max over rows r-4..r+4 = max(rm5[r-2], rm5[r+2])
    rm9_ext = jnp.maximum(rm5_ext[0:H + 4], rm5_ext[4:H + 8])
    # rm13[r]        = max over rows r-6..r+6 = max(rm9[r-2], rm9[r+2])
    rm13 = jnp.maximum(rm9_ext[0:H], rm9_ext[4:H + 4])
    row_maxes = (rm5_ext[4:4 + H], rm9_ext[2:2 + H], rm13)

    # --- W (col) pass per branch: padded value has a -inf halo of PW >= 6 on
    #     each side, so plain XLU rotations never wrap garbage into the
    #     interior -> no masks, no unaligned sublane slices. Each branch feeds
    #     its cv2 partial matmul right away (interleaving + tiny live set). ---
    def shift_w(v, s):   # shifted-by-|s| view along W (used in symmetric pairs)
        return pltpu.roll(v, shift=(-s) % v.shape[1], axis=1)

    for i, rm in enumerate(row_maxes):
        padw_ref[:, PW:PW + W, :] = rm
        vp = padw_ref[...]                               # (H, W + 2*PW, Cm) f32
        c3 = jnp.maximum(jnp.maximum(shift_w(vp, -1), vp), shift_w(vp, 1))
        c = jnp.maximum(shift_w(c3, -1), shift_w(c3, 1))     # width-5 column max
        if i >= 1:
            c = jnp.maximum(shift_w(c, -2), shift_w(c, 2))   # width-9
        if i >= 2:
            c = jnp.maximum(shift_w(c, -2), shift_w(c, 2))   # width-13
        feat = c[:, PW:PW + W, :].reshape(HW, Cm)            # aligned slice (PW = 8)
        acc = acc + jnp.dot(feat.astype(jnp.bfloat16), w2[i + 1],
                            preferred_element_type=jnp.float32)

    o_ref[...] = _leaky(acc).reshape(1, H, W, C2).astype(o_ref.dtype)


def spp_pallas(x_nchw, w1, b1, w2, b2):
    N, C1, H, W = x_nchw.shape
    Cm = w1.shape[1]
    C2 = w2.shape[1]

    # TODO(synk): fold these NCHW<->NHWC transposes into the kernel.
    x = jnp.transpose(x_nchw, (0, 2, 3, 1)).astype(jnp.bfloat16)   # NHWC, bf16
    w1b = w1.astype(jnp.bfloat16)
    # (4*Cm, C2) -> (4, Cm, C2): branch selection becomes a free leading-dim
    # index in-kernel instead of a sublane slice at offsets of Cm.
    w2b = w2.reshape(4, Cm, C2).astype(jnp.bfloat16)
    b1f = b1.astype(jnp.float32)
    b2f = b2.astype(jnp.float32)

    out = pl.pallas_call(
        spp_kernel,
        out_shape=jax.ShapeDtypeStruct((N, H, W, C2), jnp.float32),
        grid_spec=pltpu.PrefetchScalarGridSpec(
            num_scalar_prefetch=0,
            grid=(N,),
            in_specs=[
                pl.BlockSpec((1, H, W, C1), lambda n: (n, 0, 0, 0)),
                pl.BlockSpec((C1, Cm), lambda n: (0, 0)),
                pl.BlockSpec((1, Cm), lambda n: (0, 0)),
                pl.BlockSpec((4, Cm, C2), lambda n: (0, 0, 0)),
                pl.BlockSpec((1, C2), lambda n: (0, 0)),
            ],
            out_specs=pl.BlockSpec((1, H, W, C2), lambda n: (n, 0, 0, 0)),
            scratch_shapes=[
                pltpu.VMEM((H + 2 * PH, W, Cm), jnp.float32),
                pltpu.VMEM((H, W + 2 * PW, Cm), jnp.float32),
            ],
        ),
        compiler_params=pltpu.CompilerParams(
            dimension_semantics=("parallel",),
            vmem_limit_bytes=32 * 1024 * 1024,
        ),
    )(x, w1b, b1f, w2b, b2f)

    return jnp.transpose(out, (0, 3, 1, 2))    # back to NCHW


def spp_reference(x_nchw, w1, b1, w2, b2):
    # Pure-JAX f32 reference (NCHW in/out), mirrors the PyTorch forward.
    x = jnp.transpose(x_nchw, (0, 2, 3, 1))
    y = _leaky(jnp.einsum('nhwc,cd->nhwd', x, w1) + b1)

    def mp(v, k):
        p = k // 2
        return jax.lax.reduce_window(
            v, -jnp.inf, jax.lax.max,
            window_dimensions=(1, k, k, 1),
            window_strides=(1, 1, 1, 1),
            padding=[(0, 0), (p, p), (p, p), (0, 0)])

    cat = jnp.concatenate([y] + [mp(y, k) for k in POOL_KS], axis=-1)
    z = _leaky(jnp.einsum('nhwc,cd->nhwd', cat, w2) + b2)
    return jnp.transpose(z, (0, 3, 1, 2))


if __name__ == "__main__":
    N, C1, H, W = 2, 4, 16, 16       # SPP(c1=4, c2=8): c_ = c1 // 2 = 2
    C2 = 8
    Cm = C1 // 2

    key = jax.random.PRNGKey(0)
    ks = jax.random.split(key, 11)
    x = jax.random.normal(ks[0], (N, C1, H, W), jnp.float32)

    # cv1 parameters (conv weight + BN) -> fused effective weight/bias
    w1_raw = 0.3 * jax.random.normal(ks[1], (C1, Cm), jnp.float32)
    g1 = 1.0 + 0.1 * jax.random.normal(ks[2], (Cm,), jnp.float32)
    be1 = 0.1 * jax.random.normal(ks[3], (Cm,), jnp.float32)
    mu1 = 0.1 * jax.random.normal(ks[4], (Cm,), jnp.float32)
    var1 = 0.5 + jnp.abs(jax.random.normal(ks[5], (Cm,), jnp.float32))
    s1 = g1 / jnp.sqrt(var1 + 1e-5)
    w1 = w1_raw * s1[None, :]
    b1 = (be1 - mu1 * s1)[None, :]

    # cv2 parameters
    w2_raw = 0.3 * jax.random.normal(ks[6], (4 * Cm, C2), jnp.float32)
    g2 = 1.0 + 0.1 * jax.random.normal(ks[7], (C2,), jnp.float32)
    be2 = 0.1 * jax.random.normal(ks[8], (C2,), jnp.float32)
    mu2 = 0.1 * jax.random.normal(ks[9], (C2,), jnp.float32)
    var2 = 0.5 + jnp.abs(jax.random.normal(ks[10], (C2,), jnp.float32))
    s2 = g2 / jnp.sqrt(var2 + 1e-5)
    w2 = w2_raw * s2[None, :]
    b2 = (be2 - mu2 * s2)[None, :]

    out = spp_pallas(x, w1, b1, w2, b2)
    out = jax.block_until_ready(out)

    ref = spp_reference(x, w1, b1, w2, b2)
    # bf16 matmul inputs (f32 accumulation) vs. f32 reference -> loosened tol.
    np.testing.assert_allclose(np.asarray(out), np.asarray(ref),
                               rtol=5e-2, atol=5e-2)
    print("KERNEL_OK")
</pallas_src>

<mosaic_0001>
module attributes {stable_mosaic.version = 11 : i64} {
  func.func @spp_kernel(%arg0: i32, %arg1: memref<1x16x16x4xbf16, #tpu.memory_space<vmem>>, %arg2: memref<4x2xbf16, #tpu.memory_space<vmem>>, %arg3: memref<1x2xf32, #tpu.memory_space<vmem>>, %arg4: memref<4x2x8xbf16, #tpu.memory_space<vmem>>, %arg5: memref<1x8xf32, #tpu.memory_space<vmem>>, %arg6: memref<1x16x16x8xf32, #tpu.memory_space<vmem>>, %arg7: memref<28x16x2xf32, #tpu.memory_space<vmem>>, %arg8: memref<16x32x2xf32, #tpu.memory_space<vmem>>) attributes {dimension_semantics = [#tpu.dimension_semantics<parallel>], iteration_bounds = array<i64: 2>, scalar_prefetch = 0 : i64, scratch_operands = 2 : i64, tpu.core_type = #tpu.core_type<tc>, window_params = [{transform_indices = @transform_0, window_bounds = array<i64: 1, 16, 16, 4>}, {pipeline_mode = #tpu.pipeline_mode<synchronous>, transform_indices = @transform_1, window_bounds = array<i64: 4, 2>}, {pipeline_mode = #tpu.pipeline_mode<synchronous>, transform_indices = @transform_2, window_bounds = array<i64: 1, 2>}, {pipeline_mode = #tpu.pipeline_mode<synchronous>, transform_indices = @transform_3, window_bounds = array<i64: 4, 2, 8>}, {pipeline_mode = #tpu.pipeline_mode<synchronous>, transform_indices = @transform_4, window_bounds = array<i64: 1, 8>}, {transform_indices = @transform_5, window_bounds = array<i64: 1, 16, 16, 8>}]} {
    %cst = arith.constant 0xFF800000 : f32
    %0 = vector.broadcast %cst : f32 to vector<6x16x2xf32>
    %c0 = arith.constant 0 : index
    %c0_0 = arith.constant 0 : index
    %c0_1 = arith.constant 0 : index
    %1 = vector.load %arg7[%c0, %c0_0, %c0_1] : memref<28x16x2xf32, #tpu.memory_space<vmem>>, vector<6x16x2xf32>
    tpu.vector_store %arg7[%c0, %c0_0, %c0_1], %0 {strides = array<i32>} : memref<28x16x2xf32, #tpu.memory_space<vmem>>, vector<6x16x2xf32>,
    %cst_2 = arith.constant 0xFF800000 : f32
    %2 = vector.broadcast %cst_2 : f32 to vector<6x16x2xf32>
    %c22 = arith.constant 22 : index
    %c0_3 = arith.constant 0 : index
    %c0_4 = arith.constant 0 : index
    %3 = vector.load %arg7[%c22, %c0_3, %c0_4] : memref<28x16x2xf32, #tpu.memory_space<vmem>>, vector<6x16x2xf32>
    tpu.vector_store %arg7[%c22, %c0_3, %c0_4], %2 {strides = array<i32>} : memref<28x16x2xf32, #tpu.memory_space<vmem>>, vector<6x16x2xf32>,
    %cst_5 = arith.constant 0xFF800000 : f32
    %4 = vector.broadcast %cst_5 : f32 to vector<16x8x2xf32>
    %c0_6 = arith.constant 0 : index
    %c0_7 = arith.constant 0 : index
    %c0_8 = arith.constant 0 : index
    %5 = vector.load %arg8[%c0_6, %c0_7, %c0_8] : memref<16x32x2xf32, #tpu.memory_space<vmem>>, vector<16x8x2xf32>
    tpu.vector_store %arg8[%c0_6, %c0_7, %c0_8], %4 {strides = array<i32>} : memref<16x32x2xf32, #tpu.memory_space<vmem>>, vector<16x8x2xf32>,
    %cst_9 = arith.constant 0xFF800000 : f32
    %6 = vector.broadcast %cst_9 : f32 to vector<16x8x2xf32>
    %c0_10 = arith.constant 0 : index
    %c24 = arith.constant 24 : index
    %c0_11 = arith.constant 0 : index
    %7 = vector.load %arg8[%c0_10, %c24, %c0_11] : memref<16x32x2xf32, #tpu.memory_space<vmem>>, vector<16x8x2xf32>
    tpu.vector_store %arg8[%c0_10, %c24, %c0_11], %6 {strides = array<i32>} : memref<16x32x2xf32, #tpu.memory_space<vmem>>, vector<16x8x2xf32>,
    %c0_12 = arith.constant 0 : index
    %c0_13 = arith.constant 0 : index
    %c0_14 = arith.constant 0 : index
    %c0_15 = arith.constant 0 : index
    %8 = vector.load %arg1[%c0_12, %c0_13, %c0_14, %c0_15] : memref<1x16x16x4xbf16, #tpu.memory_space<vmem>>, vector<1x16x16x4xbf16>
    %9 = vector.shape_cast %8 : vector<1x16x16x4xbf16> to vector<256x4xbf16>
    %c0_16 = arith.constant 0 : index
    %c0_17 = arith.constant 0 : index
    %10 = vector.load %arg2[%c0_16, %c0_17] : memref<4x2xbf16, #tpu.memory_space<vmem>>, vector<4x2xbf16>
    %cst_18 = arith.constant dense<0.000000e+00> : vector<256x2xf32>
    %11 = tpu.matmul %9, %10, %cst_18 {dimension_numbers = #tpu.dot_dimension_numbers<[1], [0], [0], [1], [0, 0, 1, 1], [], []>} : vector<256x4xbf16>, vector<4x2xbf16>, vector<256x2xf32> -> vector<256x2xf32>
    %c0_19 = arith.constant 0 : index
    %c0_20 = arith.constant 0 : index
    %12 = vector.load %arg3[%c0_19, %c0_20] : memref<1x2xf32, #tpu.memory_space<vmem>>, vector<1x2xf32>
    %13 = vector.broadcast %12 : vector<1x2xf32> to vector<256x2xf32>
    %14 = arith.addf %11, %13 : vector<256x2xf32>
    %cst_21 = arith.constant 0.000000e+00 : f32
    %15 = vector.broadcast %cst_21 : f32 to vector<256x2xf32>
    %16 = arith.cmpf ogt, %14, %15 : vector<256x2xf32>
    %cst_22 = arith.constant 1.000000e-01 : f32
    %17 = vector.broadcast %cst_22 : f32 to vector<256x2xf32>
    %18 = arith.mulf %17, %14 : vector<256x2xf32>
    %19 = arith.select %16, %14, %18 : vector<256x2xi1>, vector<256x2xf32>
    %20 = vector.shape_cast %19 : vector<256x2xf32> to vector<16x16x2xf32>
    %c0_23 = arith.constant 0 : index
    %c0_24 = arith.constant 0 : index
    %c0_25 = arith.constant 0 : index
    %21 = vector.load %arg4[%c0_23, %c0_24, %c0_25] : memref<4x2x8xbf16, #tpu.memory_space<vmem>>, vector<4x2x8xbf16>
    %22 = arith.truncf %19 : vector<256x2xf32> to vector<256x2xbf16>
    %23 = vector.extract_strided_slice %21 {offsets = [0, 0, 0], sizes = [1, 2, 8], strides = [1, 1, 1]} : vector<4x2x8xbf16> to vector<1x2x8xbf16>
    %24 = vector.shape_cast %23 : vector<1x2x8xbf16> to vector<2x8xbf16>
    %cst_26 = arith.constant dense<0.000000e+00> : vector<256x8xf32>
    %25 = tpu.matmul %22, %24, %cst_26 {dimension_numbers = #tpu.dot_dimension_numbers<[1], [0], [0], [1], [0, 0, 1, 1], [], []>} : vector<256x2xbf16>, vector<2x8xbf16>, vector<256x8xf32> -> vector<256x8xf32>
    %c0_27 = arith.constant 0 : index
    %c0_28 = arith.constant 0 : index
    %26 = vector.load %arg5[%c0_27, %c0_28] : memref<1x8xf32, #tpu.memory_space<vmem>>, vector<1x8xf32>
    %27 = vector.broadcast %26 : vector<1x8xf32> to vector<256x8xf32>
    %28 = arith.addf %25, %27 : vector<256x8xf32>
    %c6 = arith.constant 6 : index
    %c0_29 = arith.constant 0 : index
    %c0_30 = arith.constant 0 : index
    %29 = vector.load %arg7[%c6, %c0_29, %c0_30] : memref<28x16x2xf32, #tpu.memory_space<vmem>>, vector<16x16x2xf32>
    tpu.vector_store %arg7[%c6, %c0_29, %c0_30], %20 {strides = array<i32>} : memref<28x16x2xf32, #tpu.memory_space<vmem>>, vector<16x16x2xf32>,
    %c0_31 = arith.constant 0 : index
    %c0_32 = arith.constant 0 : index
    %c0_33 = arith.constant 0 : index
    %30 = vector.load %arg7[%c0_31, %c0_32, %c0_33] : memref<28x16x2xf32, #tpu.memory_space<vmem>>, vector<24x16x2xf32>
    %c1 = arith.constant 1 : index
    %c0_34 = arith.constant 0 : index
    %c0_35 = arith.constant 0 : index
    %31 = vector.load %arg7[%c1, %c0_34, %c0_35] : memref<28x16x2xf32, #tpu.memory_space<vmem>>, vector<24x16x2xf32>
    %32 = arith.maximumf %30, %31 : vector<24x16x2xf32>
    %c2 = arith.constant 2 : index
    %c0_36 = arith.constant 0 : index
    %c0_37 = arith.constant 0 : index
    %33 = vector.load %arg7[%c2, %c0_36, %c0_37] : memref<28x16x2xf32, #tpu.memory_space<vmem>>, vector<24x16x2xf32>
    %34 = arith.maximumf %32, %33 : vector<24x16x2xf32>
    %c3 = arith.constant 3 : index
    %c0_38 = arith.constant 0 : index
    %c0_39 = arith.constant 0 : index
    %35 = vector.load %arg7[%c3, %c0_38, %c0_39] : memref<28x16x2xf32, #tpu.memory_space<vmem>>, vector<24x16x2xf32>
    %36 = arith.maximumf %34, %35 : vector<24x16x2xf32>
    %c4 = arith.constant 4 : index
    %c0_40 = arith.constant 0 : index
    %c0_41 = arith.constant 0 : index
    %37 = vector.load %arg7[%c4, %c0_40, %c0_41] : memref<28x16x2xf32, #tpu.memory_space<vmem>>, vector<24x16x2xf32>
    %38 = arith.maximumf %36, %37 : vector<24x16x2xf32>
    %39 = vector.extract_strided_slice %38 {offsets = [0, 0, 0], sizes = [20, 16, 2], strides = [1, 1, 1]} : vector<24x16x2xf32> to vector<20x16x2xf32>
    %40 = vector.extract_strided_slice %38 {offsets = [4, 0, 0], sizes = [20, 16, 2], strides = [1, 1, 1]} : vector<24x16x2xf32> to vector<20x16x2xf32>
    %41 = arith.maximumf %39, %40 : vector<20x16x2xf32>
    %42 = vector.extract_strided_slice %41 {offsets = [0, 0, 0], sizes = [16, 16, 2], strides = [1, 1, 1]} : vector<20x16x2xf32> to vector<16x16x2xf32>
    %43 = vector.extract_strided_slice %41 {offsets = [4, 0, 0], sizes = [16, 16, 2], strides = [1, 1, 1]} : vector<20x16x2xf32> to vector<16x16x2xf32>
    %44 = arith.maximumf %42, %43 : vector<16x16x2xf32>
    %45 = vector.extract_strided_slice %38 {offsets = [4, 0, 0], sizes = [16, 16, 2], strides = [1, 1, 1]} : vector<24x16x2xf32> to vector<16x16x2xf32>
    %46 = vector.extract_strided_slice %41 {offsets = [2, 0, 0], sizes = [16, 16, 2], strides = [1, 1, 1]} : vector<20x16x2xf32> to vector<16x16x2xf32>
    %c0_42 = arith.constant 0 : index
    %c8 = arith.constant 8 : index
    %c0_43 = arith.constant 0 : index
    %47 = vector.load %arg8[%c0_42, %c8, %c0_43] : memref<16x32x2xf32, #tpu.memory_space<vmem>>, vector<16x16x2xf32>
    tpu.vector_store %arg8[%c0_42, %c8, %c0_43], %45 {strides = array<i32>} : memref<16x32x2xf32, #tpu.memory_space<vmem>>, vector<16x16x2xf32>,
    %c0_44 = arith.constant 0 : index
    %c0_45 = arith.constant 0 : index
    %c0_46 = arith.constant 0 : index
    %48 = vector.load %arg8[%c0_44, %c0_45, %c0_46] : memref<16x32x2xf32, #tpu.memory_space<vmem>>, vector<16x32x2xf32>
    %c1_i32 = arith.constant 1 : i32
    %49 = tpu.dynamic_rotate %48 by %c1_i32 dim 1 : vector<16x32x2xf32>, i32 -> vector<16x32x2xf32>
    %50 = arith.maximumf %49, %48 : vector<16x32x2xf32>
    %c31_i32 = arith.constant 31 : i32
    %51 = tpu.dynamic_rotate %48 by %c31_i32 dim 1 : vector<16x32x2xf32>, i32 -> vector<16x32x2xf32>
    %52 = arith.maximumf %50, %51 : vector<16x32x2xf32>
    %c1_i32_47 = arith.constant 1 : i32
    %53 = tpu.dynamic_rotate %52 by %c1_i32_47 dim 1 : vector<16x32x2xf32>, i32 -> vector<16x32x2xf32>
    %c31_i32_48 = arith.constant 31 : i32
    %54 = tpu.dynamic_rotate %52 by %c31_i32_48 dim 1 : vector<16x32x2xf32>, i32 -> vector<16x32x2xf32>
    %55 = arith.maximumf %53, %54 : vector<16x32x2xf32>
    %56 = vector.extract_strided_slice %55 {offsets = [0, 8, 0], sizes = [16, 16, 2], strides = [1, 1, 1]} : vector<16x32x2xf32> to vector<16x16x2xf32>
    %57 = vector.shape_cast %56 : vector<16x16x2xf32> to vector<256x2xf32>
    %58 = arith.truncf %57 : vector<256x2xf32> to vector<256x2xbf16>
    %59 = vector.extract_strided_slice %21 {offsets = [1, 0, 0], sizes = [1, 2, 8], strides = [1, 1, 1]} : vector<4x2x8xbf16> to vector<1x2x8xbf16>
    %60 = vector.shape_cast %59 : vector<1x2x8xbf16> to vector<2x8xbf16>
    %cst_49 = arith.constant dense<0.000000e+00> : vector<256x8xf32>
    %61 = tpu.matmul %58, %60, %cst_49 {dimension_numbers = #tpu.dot_dimension_numbers<[1], [0], [0], [1], [0, 0, 1, 1], [], []>} : vector<256x2xbf16>, vector<2x8xbf16>, vector<256x8xf32> -> vector<256x8xf32>
    %62 = arith.addf %28, %61 : vector<256x8xf32>
    %c0_50 = arith.constant 0 : index
    %c8_51 = arith.constant 8 : index
    %c0_52 = arith.constant 0 : index
    %63 = vector.load %arg8[%c0_50, %c8_51, %c0_52] : memref<16x32x2xf32, #tpu.memory_space<vmem>>, vector<16x16x2xf32>
    tpu.vector_store %arg8[%c0_50, %c8_51, %c0_52], %46 {strides = array<i32>} : memref<16x32x2xf32, #tpu.memory_space<vmem>>, vector<16x16x2xf32>,
    %c0_53 = arith.constant 0 : index
    %c0_54 = arith.constant 0 : index
    %c0_55 = arith.constant 0 : index
    %64 = vector.load %arg8[%c0_53, %c0_54, %c0_55] : memref<16x32x2xf32, #tpu.memory_space<vmem>>, vector<16x32x2xf32>
    %c1_i32_56 = arith.constant 1 : i32
    %65 = tpu.dynamic_rotate %64 by %c1_i32_56 dim 1 : vector<16x32x2xf32>, i32 -> vector<16x32x2xf32>
    %66 = arith.maximumf %65, %64 : vector<16x32x2xf32>
    %c31_i32_57 = arith.constant 31 : i32
    %67 = tpu.dynamic_rotate %64 by %c31_i32_57 dim 1 : vector<16x32x2xf32>, i32 -> vector<16x32x2xf32>
    %68 = arith.maximumf %66, %67 : vector<16x32x2xf32>
    %c1_i32_58 = arith.constant 1 : i32
    %69 = tpu.dynamic_rotate %68 by %c1_i32_58 dim 1 : vector<16x32x2xf32>, i32 -> vector<16x32x2xf32>
    %c31_i32_59 = arith.constant 31 : i32
    %70 = tpu.dynamic_rotate %68 by %c31_i32_59 dim 1 : vector<16x32x2xf32>, i32 -> vector<16x32x2xf32>
    %71 = arith.maximumf %69, %70 : vector<16x32x2xf32>
    %c2_i32 = arith.constant 2 : i32
    %72 = tpu.dynamic_rotate %71 by %c2_i32 dim 1 : vector<16x32x2xf32>, i32 -> vector<16x32x2xf32>
    %c30_i32 = arith.constant 30 : i32
    %73 = tpu.dynamic_rotate %71 by %c30_i32 dim 1 : vector<16x32x2xf32>, i32 -> vector<16x32x2xf32>
    %74 = arith.maximumf %72, %73 : vector<16x32x2xf32>
    %75 = vector.extract_strided_slice %74 {offsets = [0, 8, 0], sizes = [16, 16, 2], strides = [1, 1, 1]} : vector<16x32x2xf32> to vector<16x16x2xf32>
    %76 = vector.shape_cast %75 : vector<16x16x2xf32> to vector<256x2xf32>
    %77 = arith.truncf %76 : vector<256x2xf32> to vector<256x2xbf16>
    %78 = vector.extract_strided_slice %21 {offsets = [2, 0, 0], sizes = [1, 2, 8], strides = [1, 1, 1]} : vector<4x2x8xbf16> to vector<1x2x8xbf16>
    %79 = vector.shape_cast %78 : vector<1x2x8xbf16> to vector<2x8xbf16>
    %cst_60 = arith.constant dense<0.000000e+00> : vector<256x8xf32>
    %80 = tpu.matmul %77, %79, %cst_60 {dimension_numbers = #tpu.dot_dimension_numbers<[1], [0], [0], [1], [0, 0, 1, 1], [], []>} : vector<256x2xbf16>, vector<2x8xbf16>, vector<256x8xf32> -> vector<256x8xf32>
    %81 = arith.addf %62, %80 : vector<256x8xf32>
    %c0_61 = arith.constant 0 : index
    %c8_62 = arith.constant 8 : index
    %c0_63 = arith.constant 0 : index
    %82 = vector.load %arg8[%c0_61, %c8_62, %c0_63] : memref<16x32x2xf32, #tpu.memory_space<vmem>>, vector<16x16x2xf32>
    tpu.vector_store %arg8[%c0_61, %c8_62, %c0_63], %44 {strides = array<i32>} : memref<16x32x2xf32, #tpu.memory_space<vmem>>, vector<16x16x2xf32>,
    %c0_64 = arith.constant 0 : index
    %c0_65 = arith.constant 0 : index
    %c0_66 = arith.constant 0 : index
    %83 = vector.load %arg8[%c0_64, %c0_65, %c0_66] : memref<16x32x2xf32, #tpu.memory_space<vmem>>, vector<16x32x2xf32>
    %c1_i32_67 = arith.constant 1 : i32
    %84 = tpu.dynamic_rotate %83 by %c1_i32_67 dim 1 : vector<16x32x2xf32>, i32 -> vector<16x32x2xf32>
    %85 = arith.maximumf %84, %83 : vector<16x32x2xf32>
    %c31_i32_68 = arith.constant 31 : i32
    %86 = tpu.dynamic_rotate %83 by %c31_i32_68 dim 1 : vector<16x32x2xf32>, i32 -> vector<16x32x2xf32>
    %87 = arith.maximumf %85, %86 : vector<16x32x2xf32>
    %c1_i32_69 = arith.constant 1 : i32
    %88 = tpu.dynamic_rotate %87 by %c1_i32_69 dim 1 : vector<16x32x2xf32>, i32 -> vector<16x32x2xf32>
    %c31_i32_70 = arith.constant 31 : i32
    %89 = tpu.dynamic_rotate %87 by %c31_i32_70 dim 1 : vector<16x32x2xf32>, i32 -> vector<16x32x2xf32>
    %90 = arith.maximumf %88, %89 : vector<16x32x2xf32>
    %c2_i32_71 = arith.constant 2 : i32
    %91 = tpu.dynamic_rotate %90 by %c2_i32_71 dim 1 : vector<16x32x2xf32>, i32 -> vector<16x32x2xf32>
    %c30_i32_72 = arith.constant 30 : i32
    %92 = tpu.dynamic_rotate %90 by %c30_i32_72 dim 1 : vector<16x32x2xf32>, i32 -> vector<16x32x2xf32>
    %93 = arith.maximumf %91, %92 : vector<16x32x2xf32>
    %c2_i32_73 = arith.constant 2 : i32
    %94 = tpu.dynamic_rotate %93 by %c2_i32_73 dim 1 : vector<16x32x2xf32>, i32 -> vector<16x32x2xf32>
    %c30_i32_74 = arith.constant 30 : i32
    %95 = tpu.dynamic_rotate %93 by %c30_i32_74 dim 1 : vector<16x32x2xf32>, i32 -> vector<16x32x2xf32>
    %96 = arith.maximumf %94, %95 : vector<16x32x2xf32>
    %97 = vector.extract_strided_slice %96 {offsets = [0, 8, 0], sizes = [16, 16, 2], strides = [1, 1, 1]} : vector<16x32x2xf32> to vector<16x16x2xf32>
    %98 = vector.shape_cast %97 : vector<16x16x2xf32> to vector<256x2xf32>
    %99 = arith.truncf %98 : vector<256x2xf32> to vector<256x2xbf16>
    %100 = vector.extract_strided_slice %21 {offsets = [3, 0, 0], sizes = [1, 2, 8], strides = [1, 1, 1]} : vector<4x2x8xbf16> to vector<1x2x8xbf16>
    %101 = vector.shape_cast %100 : vector<1x2x8xbf16> to vector<2x8xbf16>
    %cst_75 = arith.constant dense<0.000000e+00> : vector<256x8xf32>
    %102 = tpu.matmul %99, %101, %cst_75 {dimension_numbers = #tpu.dot_dimension_numbers<[1], [0], [0], [1], [0, 0, 1, 1], [], []>} : vector<256x2xbf16>, vector<2x8xbf16>, vector<256x8xf32> -> vector<256x8xf32>
    %103 = arith.addf %81, %102 : vector<256x8xf32>
    %cst_76 = arith.constant 0.000000e+00 : f32
    %104 = vector.broadcast %cst_76 : f32 to vector<256x8xf32>
    %105 = arith.cmpf ogt, %103, %104 : vector<256x8xf32>
    %cst_77 = arith.constant 1.000000e-01 : f32
    %106 = vector.broadcast %cst_77 : f32 to vector<256x8xf32>
    %107 = arith.mulf %106, %103 : vector<256x8xf32>
    %108 = arith.select %105, %103, %107 : vector<256x8xi1>, vector<256x8xf32>
    %109 = vector.shape_cast %108 : vector<256x8xf32> to vector<1x16x16x8xf32>
    %c0_78 = arith.constant 0 : index
    %c0_79 = arith.constant 0 : index
    %c0_80 = arith.constant 0 : index
    %c0_81 = arith.constant 0 : index
    %110 = vector.load %arg6[%c0_78, %c0_79, %c0_80, %c0_81] : memref<1x16x16x8xf32, #tpu.memory_space<vmem>>, vector<1x16x16x8xf32>
    tpu.vector_store %arg6[%c0_78, %c0_79, %c0_80, %c0_81], %109 {strides = array<i32>} : memref<1x16x16x8xf32, #tpu.memory_space<vmem>>, vector<1x16x16x8xf32>,
    return
  }
  func.func @transform_0(%arg0: i32) -> (i32, i32, i32, i32) {
    %c0_i32 = arith.constant 0 : i32
    %c0_i32_0 = arith.constant 0 : i32
    %c0_i32_1 = arith.constant 0 : i32
    %c0_i32_2 = arith.constant 0 : i32
    return %arg0, %c0_i32, %c0_i32_0, %c0_i32_1 : i32, i32, i32, i32
  }
  func.func @transform_1(%arg0: i32) -> (i32, i32) {
    %c0_i32 = arith.constant 0 : i32
    %c0_i32_0 = arith.constant 0 : i32
    %c0_i32_1 = arith.constant 0 : i32
    return %c0_i32, %c0_i32_0 : i32, i32
  }
  func.func @transform_2(%arg0: i32) -> (i32, i32) {
    %c0_i32 = arith.constant 0 : i32
    %c0_i32_0 = arith.constant 0 : i32
    %c0_i32_1 = arith.constant 0 : i32
    return %c0_i32, %c0_i32_0 : i32, i32
  }
  func.func @transform_3(%arg0: i32) -> (i32, i32, i32) {
    %c0_i32 = arith.constant 0 : i32
    %c0_i32_0 = arith.constant 0 : i32
    %c0_i32_1 = arith.constant 0 : i32
    %c0_i32_2 = arith.constant 0 : i32
    return %c0_i32, %c0_i32_0, %c0_i32_1 : i32, i32, i32
  }
  func.func @transform_4(%arg0: i32) -> (i32, i32) {
    %c0_i32 = arith.constant 0 : i32
    %c0_i32_0 = arith.constant 0 : i32
    %c0_i32_1 = arith.constant 0 : i32
    return %c0_i32, %c0_i32_0 : i32, i32
  }
  func.func @transform_5(%arg0: i32) -> (i32, i32, i32, i32) {
    %c0_i32 = arith.constant 0 : i32
    %c0_i32_0 = arith.constant 0 : i32
    %c0_i32_1 = arith.constant 0 : i32
    %c0_i32_2 = arith.constant 0 : i32
    return %arg0, %c0_i32, %c0_i32_0, %c0_i32_1 : i32, i32, i32, i32
  }
}

</mosaic_0001>

<llo_original>
// kernel: tpu_custom_call.1
$region0: #{tpu_custom_call.1}
  #allocation0 [shape = 'u32[]', space=smem, size = 0x4, offset = 0x4, fixed_abs, tag = 'smem constant byte address 0x4 - core index']
  #allocation1 [shape = 'u32[144,128]{1,0:T(1,128)}', space=vmem, size = 0x12000, scoped, tag = 'internal scratch']
  #allocation2 [shape = 'f32[28,16,2]{2,1,0:T(8,128)}', space=vmem, size = 0x38000, scoped, tag = 'scratch operand']
  #allocation3 [shape = 'f32[16,32,2]{2,1,0:T(8,128)}', space=vmem, size = 0x40000, scoped, tag = 'scratch operand']
  %s0 = inlined_call_operand.vmem [shape: bf16[2,16,16,4], index: 0, kind: input, shape index: {}]
  %s1 = inlined_call_operand.vmem [shape: bf16[4,2], index: 1, kind: input, shape index: {}]
  %s2 = inlined_call_operand.vmem [shape: f32[1,2], index: 2, kind: input, shape index: {}]
  %s3 = inlined_call_operand.vmem [shape: bf16[4,2,8], index: 3, kind: input, shape index: {}]
  %s4 = inlined_call_operand.vmem [shape: f32[1,8], index: 4, kind: input, shape index: {}]
  %s5 = inlined_call_operand.vmem [shape: f32[2,16,16,8], index: 5, kind: output, shape index: {}]
  %s6 = sld [smem:[#allocation0]]
  $region53: #{tpu_custom_call.1} parent=0
    _
  %s8 = ssub.s32 1, %s6
  %s9 = scalar_select 0, %s8, %s6
  loop: start=0, step=1, limit=4
  $region2: #{tpu_custom_call.1} parent=0 // loop_pre_header
    _
  $region3: #{tpu_custom_call.1} parent=0 // loop_header
    %s11 = sphi 0, %s15
    %p12 = scmp.ge.s32.totalorder %s11, 4
    %s21 = sphi 0, %s23
    %s24 = sphi 0, %s21
    %s25 = sphi 0, %s24
    %s41 = sphi 0, %s25
    %s45 = sphi 0, %s45
    %s47 = sphi 0, %s45
    %s48 = sphi 0, %s47
    %s62 = sphi 0, %s48
    %s66 = sphi 0, %s66
    %s68 = sphi 0, %s66
    %s69 = sphi 0, %s68
    %s83 = sphi 0, %s69
    %s87 = sphi 0, %s87
    %s89 = sphi 0, %s87
    %s90 = sphi 0, %s89
    %s104 = sphi 0, %s90
    %s108 = sphi 0, %s108
    %s110 = sphi 0, %s108
    %s111 = sphi 0, %s110
    %s125 = sphi 0, %s111
    %s131 = sphi 0, %s133
    %s134 = sphi 0, %s131
    %s135 = sphi 0, %s134
    %s151 = sphi 0, %s135
  $region4: #{tpu_custom_call.1} parent=0 // loop_header_branch
    %14 = sbr.rel (%p12) target = $region8
  $region5: #{tpu_custom_call.1} parent=0 // loop_body
    %s16 = ssub.s32 %s11, 1
    %s17 = ssub.s32 %s11, 2
    %s18 = sadd.s32 %s11, 1
    %s19 = ssub.s32 %s11, %s18
    %p20 = scmp.eq.s32.totalorder %s19, 0
    %s22 = sadd.s32 %s21, 1
    %s23 = scalar_select %p20, %s21, %s22
    %p26 = pneg %p20
    %p27 = scmp.eq.s32.totalorder %s11, 1
    %p28 = por %p26, %p27
    %p29 = scmp.ne.s32.totalorder %s21, %s24
    %p30 = scmp.eq.s32.totalorder %s11, 0
    %p31 = por %p29, %p30
    %p32 = scmp.ne.s32.totalorder %s21, %s24
    %p33 = scmp.eq.s32.totalorder %s16, 1
    %p34 = por %p32, %p33
    %p35 = scmp.ne.s32.totalorder %s24, %s25
    %p36 = scmp.eq.s32.totalorder %s16, 0
    %p37 = por %p35, %p36
    %p38 = scmp.ne.s32.totalorder %s24, %s25
    %p39 = scmp.eq.s32.totalorder %s17, 1
    %p40 = por %p38, %p39
    %p42 = scmp.ne.s32.totalorder %s25, %s41
    %p43 = scmp.eq.s32.totalorder %s17, 0
    %p44 = por %p42, %p43
    %s46 = sadd.s32 %s45, 1
    %p49 = scmp.eq.s32.totalorder %s11, 1
    %p50 = scmp.ne.s32.totalorder %s45, %s47
    %p51 = scmp.eq.s32.totalorder %s11, 0
    %p52 = por %p50, %p51
    %p53 = scmp.ne.s32.totalorder %s45, %s47
    %p54 = scmp.eq.s32.totalorder %s16, 1
    %p55 = por %p53, %p54
    %p56 = scmp.ne.s32.totalorder %s47, %s48
    %p57 = scmp.eq.s32.totalorder %s16, 0
    %p58 = por %p56, %p57
    %p59 = scmp.ne.s32.totalorder %s47, %s48
    %p60 = scmp.eq.s32.totalorder %s17, 1
    %p61 = por %p59, %p60
    %p63 = scmp.ne.s32.totalorder %s48, %s62
    %p64 = scmp.eq.s32.totalorder %s17, 0
    %p65 = por %p63, %p64
    %s67 = sadd.s32 %s66, 1
    %p70 = scmp.eq.s32.totalorder %s11, 1
    %p71 = scmp.ne.s32.totalorder %s66, %s68
    %p72 = scmp.eq.s32.totalorder %s11, 0
    %p73 = por %p71, %p72
    %p74 = scmp.ne.s32.totalorder %s66, %s68
    %p75 = scmp.eq.s32.totalorder %s16, 1
    %p76 = por %p74, %p75
    %p77 = scmp.ne.s32.totalorder %s68, %s69
    %p78 = scmp.eq.s32.totalorder %s16, 0
    %p79 = por %p77, %p78
    %p80 = scmp.ne.s32.totalorder %s68, %s69
    %p81 = scmp.eq.s32.totalorder %s17, 1
    %p82 = por %p80, %p81
    %p84 = scmp.ne.s32.totalorder %s69, %s83
    %p85 = scmp.eq.s32.totalorder %s17, 0
    %p86 = por %p84, %p85
    %s88 = sadd.s32 %s87, 1
    %p91 = scmp.eq.s32.totalorder %s11, 1
    %p92 = scmp.ne.s32.totalorder %s87, %s89
    %p93 = scmp.eq.s32.totalorder %s11, 0
    %p94 = por %p92, %p93
    %p95 = scmp.ne.s32.totalorder %s87, %s89
    %p96 = scmp.eq.s32.totalorder %s16, 1
    %p97 = por %p95, %p96
    %p98 = scmp.ne.s32.totalorder %s89, %s90
    %p99 = scmp.eq.s32.totalorder %s16, 0
    %p100 = por %p98, %p99
    %p101 = scmp.ne.s32.totalorder %s89, %s90
    %p102 = scmp.eq.s32.totalorder %s17, 1
    %p103 = por %p101, %p102
    %p105 = scmp.ne.s32.totalorder %s90, %s104
    %p106 = scmp.eq.s32.totalorder %s17, 0
    %p107 = por %p105, %p106
    %s109 = sadd.s32 %s108, 1
    %p112 = scmp.eq.s32.totalorder %s11, 1
    %p113 = scmp.ne.s32.totalorder %s108, %s110
    %p114 = scmp.eq.s32.totalorder %s11, 0
    %p115 = por %p113, %p114
    %p116 = scmp.ne.s32.totalorder %s108, %s110
    %p117 = scmp.eq.s32.totalorder %s16, 1
    %p118 = por %p116, %p117
    %p119 = scmp.ne.s32.totalorder %s110, %s111
    %p120 = scmp.eq.s32.totalorder %s16, 0
    %p121 = por %p119, %p120
    %p122 = scmp.ne.s32.totalorder %s110, %s111
    %p123 = scmp.eq.s32.totalorder %s17, 1
    %p124 = por %p122, %p123
    %p126 = scmp.ne.s32.totalorder %s111, %s125
    %p127 = scmp.eq.s32.totalorder %s17, 0
    %p128 = por %p126, %p127
    %s129 = ssub.s32 %s11, %s18
    %p130 = scmp.eq.s32.totalorder %s129, 0
    %s132 = sadd.s32 %s131, 1
    %s133 = scalar_select %p130, %s131, %s132
    %p136 = pneg %p130
    %p137 = scmp.eq.s32.totalorder %s11, 1
    %p138 = por %p136, %p137
    %p139 = scmp.ne.s32.totalorder %s131, %s134
    %p140 = scmp.eq.s32.totalorder %s11, 0
    %p141 = por %p139, %p140
    %p142 = scmp.ne.s32.totalorder %s131, %s134
    %p143 = scmp.eq.s32.totalorder %s16, 1
    %p144 = por %p142, %p143
    %p145 = scmp.ne.s32.totalorder %s134, %s135
    %p146 = scmp.eq.s32.totalorder %s16, 0
    %p147 = por %p145, %p146
    %p148 = scmp.ne.s32.totalorder %s134, %s135
    %p149 = scmp.eq.s32.totalorder %s17, 1
    %p150 = por %p148, %p149
    %p152 = scmp.ne.s32.totalorder %s135, %s151
    %p153 = scmp.eq.s32.totalorder %s17, 0
    %p154 = por %p152, %p153
    %p155 = scmp.le.s32.totalorder 1, %s11
    %p156 = scmp.lt.s32.totalorder %s11, 3
    %p157 = pnand %p155, %p156
    %p158 = pneg %p157
    // Predicated region
    $region9: #{tpu_custom_call.1} parent=5 // pred_check
      _
    $region10: #{tpu_custom_call.1} parent=5 // pred_check_branch
      %160 = sbr.rel (%p157) target = $region12
    $region11: #{tpu_custom_call.1} parent=5 // pred_region
      %s161 = ssub.s32 %s11, 1
      // Predicated region
      $region13: #{tpu_custom_call.1} parent=11 // pred_check
        %p162 = pneg %p58
      $region14: #{tpu_custom_call.1} parent=11 // pred_check_branch
        %164 = sbr.rel (%p162) target = $region16
      $region15: #{tpu_custom_call.1} parent=11 // pred_region
        _
      $region16: #{tpu_custom_call.1} parent=11 // pred_fallthru
        _
      // Predicated region
      $region17: #{tpu_custom_call.1} parent=11 // pred_check
        %p165 = pneg %p79
      $region18: #{tpu_custom_call.1} parent=11 // pred_check_branch
        %167 = sbr.rel (%p165) target = $region20
      $region19: #{tpu_custom_call.1} parent=11 // pred_region
        _
      $region20: #{tpu_custom_call.1} parent=11 // pred_fallthru
        _
      // Predicated region
      $region21: #{tpu_custom_call.1} parent=11 // pred_check
        %p168 = pneg %p100
      $region22: #{tpu_custom_call.1} parent=11 // pred_check_branch
        %170 = sbr.rel (%p168) target = $region24
      $region23: #{tpu_custom_call.1} parent=11 // pred_region
        _
      $region24: #{tpu_custom_call.1} parent=11 // pred_fallthru
        _
      // Predicated region
      $region25: #{tpu_custom_call.1} parent=11 // pred_check
        %p171 = pneg %p121
      $region26: #{tpu_custom_call.1} parent=11 // pred_check_branch
        %173 = sbr.rel (%p171) target = $region28
      $region27: #{tpu_custom_call.1} parent=11 // pred_region
        _
      $region28: #{tpu_custom_call.1} parent=11 // pred_fallthru
        _
    $region12: #{tpu_custom_call.1} parent=5 // pred_fallthru
      _
    %p174 = scmp.lt.s32.totalorder %s11, 2
    // Predicated region
    $region29: #{tpu_custom_call.1} parent=5 // pred_check
      %p175 = pneg %p174
    $region30: #{tpu_custom_call.1} parent=5 // pred_check_branch
      %177 = sbr.rel (%p175) target = $region32
    $region31: #{tpu_custom_call.1} parent=5 // pred_region
      // Predicated region
      $region33: #{tpu_custom_call.1} parent=31 // pred_check
        %p178 = pneg %p31
      $region34: #{tpu_custom_call.1} parent=31 // pred_check_branch
        %180 = sbr.rel (%p178) target = $region36
      $region35: #{tpu_custom_call.1} parent=31 // pred_region
        %p181 = scmp.lt.s32.totalorder %s11, 1
        %s182 = scalar_select %p181, %s11, 1
        %s183 = smul.addr %s182, 32
        %s184 = smul.addr %s183, 4
        %s185 = scalar_lea.vmem %s0, %s184
      $region36: #{tpu_custom_call.1} parent=31 // pred_fallthru
        _
    $region32: #{tpu_custom_call.1} parent=5 // pred_fallthru
      _
    %p186 = scmp.le.s32.totalorder 1, %s11
    %p187 = scmp.lt.s32.totalorder %s11, 3
    %p188 = pnand %p186, %p187
    %p189 = pneg %p188
    // Predicated region
    $region37: #{tpu_custom_call.1} parent=5 // pred_check
      _
    $region38: #{tpu_custom_call.1} parent=5 // pred_check_branch
      %191 = sbr.rel (%p188) target = $region40
    $region39: #{tpu_custom_call.1} parent=5 // pred_region
      %s192 = ssub.s32 %s11, 1
      %p193 = scmp.lt.s32.totalorder %s16, 1
      %s194 = scalar_select %p193, %s16, 1
      %s195 = smul.addr %s194, 32
      %s196 = smul.addr %s195, 4
      %s197 = scalar_lea.vmem %s0, %s196
      %p198 = pneg %p37
      %p199 = pneg %p34
      %p200 = pneg %p58
      %p201 = pneg %p55
      %p202 = pneg %p79
      %p203 = pneg %p76
      %p204 = pneg %p100
      %p205 = pneg %p97
      %p206 = pneg %p121
      %p207 = pneg %p118
      %p208 = pneg %p147
      %p209 = pneg %p144
      %p210 = scmp.lt.s32.totalorder %s16, 1
      %s211 = scalar_select %p210, %s16, 1
      %s212 = smul.addr %s211, 32
      %s213 = smul.addr %s212, 8
      %s214 = scalar_lea.vmem %s5, %s213
      %p215 = scmp.lt.s32.totalorder %s16, 1
      %s216 = scalar_select %p215, %s16, 1
      %s217 = smul.addr %s216, 32
      %s218 = smul.addr %s217, 4
      %s219 = scalar_lea.vmem %s0, %s218
      %p220 = scmp.lt.s32.totalorder %s16, 1
      %s221 = scalar_select %p220, %s16, 1
      %s222 = smul.addr %s221, 32
      %s223 = smul.addr %s222, 8
      %s224 = scalar_lea.vmem %s5, %s223
      %vm226 = vcmask 15360
      %227 = vst.msk [vmem:[#allocation2] sm:$0xff] %vm226, -inf
      %228 = vst.msk [vmem:[#allocation2 + $0x8] sm:$0xff] %vm226, -inf
      %229 = vst.msk [vmem:[#allocation2 + $0x10] sm:$0xff] %vm226, -inf
      %230 = vst.msk [vmem:[#allocation2 + $0x18] sm:$0xff] %vm226, -inf
      %231 = vst.msk [vmem:[#allocation2 + $0x20] sm:$0xff] %vm226, -inf
      %232 = vst.msk [vmem:[#allocation2 + $0x28] sm:$0xff] %vm226, -inf
      %233 = vst.msk [vmem:[#allocation2 + $0x30] sm:$0xff] %vm226, -inf
      %234 = vst.msk [vmem:[#allocation2 + $0x38] sm:$0xff] %vm226, -inf
      %235 = vst.msk [vmem:[#allocation2 + $0x40] sm:$0xff] %vm226, -inf
      %236 = vst.msk [vmem:[#allocation2 + $0x48] sm:$0xff] %vm226, -inf
      %237 = vst.msk [vmem:[#allocation2 + $0x50] sm:$0xff] %vm226, -inf
      %238 = vst.msk [vmem:[#allocation2 + $0x58] sm:$0xff] %vm226, -inf
      %s239 = scalar_lea.vmem [#allocation2], 352
      %240 = vst.msk [vmem:[%s239] sm:$0xff] %vm226, -inf
      %241 = vst.msk [vmem:[%s239 + $0x8] sm:$0xff] %vm226, -inf
      %242 = vst.msk [vmem:[%s239 + $0x10] sm:$0xff] %vm226, -inf
      %243 = vst.msk [vmem:[%s239 + $0x18] sm:$0xff] %vm226, -inf
      %244 = vst.msk [vmem:[%s239 + $0x20] sm:$0xff] %vm226, -inf
      %245 = vst.msk [vmem:[%s239 + $0x28] sm:$0xff] %vm226, -inf
      %246 = vst.msk [vmem:[%s239 + $0x30] sm:$0xff] %vm226, -inf
      %247 = vst.msk [vmem:[%s239 + $0x38] sm:$0xff] %vm226, -inf
      %248 = vst.msk [vmem:[%s239 + $0x40] sm:$0xff] %vm226, -inf
      %249 = vst.msk [vmem:[%s239 + $0x48] sm:$0xff] %vm226, -inf
      %250 = vst.msk [vmem:[%s239 + $0x50] sm:$0xff] %vm226, -inf
      %251 = vst.msk [vmem:[%s239 + $0x58] sm:$0xff] %vm226, -inf
      %252 = vst.msk [vmem:[#allocation3] sm:$0xff] %vm226, -inf
      %253 = vst.msk [vmem:[#allocation3 + $0x20] sm:$0xff] %vm226, -inf
      %254 = vst.msk [vmem:[#allocation3 + $0x40] sm:$0xff] %vm226, -inf
      %255 = vst.msk [vmem:[#allocation3 + $0x60] sm:$0xff] %vm226, -inf
      %256 = vst.msk [vmem:[#allocation3 + $0x80] sm:$0xff] %vm226, -inf
      %257 = vst.msk [vmem:[#allocation3 + $0xa0] sm:$0xff] %vm226, -inf
      %258 = vst.msk [vmem:[#allocation3 + $0xc0] sm:$0xff] %vm226, -inf
      %259 = vst.msk [vmem:[#allocation3 + $0xe0] sm:$0xff] %vm226, -inf
      %260 = vst.msk [vmem:[#allocation3 + $0x100] sm:$0xff] %vm226, -inf
      %261 = vst.msk [vmem:[#allocation3 + $0x120] sm:$0xff] %vm226, -inf
      %262 = vst.msk [vmem:[#allocation3 + $0x140] sm:$0xff] %vm226, -inf
      %263 = vst.msk [vmem:[#allocation3 + $0x160] sm:$0xff] %vm226, -inf
      %264 = vst.msk [vmem:[#allocation3 + $0x180] sm:$0xff] %vm226, -inf
      %265 = vst.msk [vmem:[#allocation3 + $0x1a0] sm:$0xff] %vm226, -inf
      %266 = vst.msk [vmem:[#allocation3 + $0x1c0] sm:$0xff] %vm226, -inf
      %267 = vst.msk [vmem:[#allocation3 + $0x1e0] sm:$0xff] %vm226, -inf
      %268 = vst.msk [vmem:[#allocation3 + $0x18] sm:$0xff] %vm226, -inf
      %269 = vst.msk [vmem:[#allocation3 + $0x38] sm:$0xff] %vm226, -inf
      %270 = vst.msk [vmem:[#allocation3 + $0x58] sm:$0xff] %vm226, -inf
      %271 = vst.msk [vmem:[#allocation3 + $0x78] sm:$0xff] %vm226, -inf
      %272 = vst.msk [vmem:[#allocation3 + $0x98] sm:$0xff] %vm226, -inf
      %273 = vst.msk [vmem:[#allocation3 + $0xb8] sm:$0xff] %vm226, -inf
      %274 = vst.msk [vmem:[#allocation3 + $0xd8] sm:$0xff] %vm226, -inf
      %275 = vst.msk [vmem:[#allocation3 + $0xf8] sm:$0xff] %vm226, -inf
      %276 = vst.msk [vmem:[#allocation3 + $0x118] sm:$0xff] %vm226, -inf
      %277 = vst.msk [vmem:[#allocation3 + $0x138] sm:$0xff] %vm226, -inf
      %278 = vst.msk [vmem:[#allocation3 + $0x158] sm:$0xff] %vm226, -inf
      %279 = vst.msk [vmem:[#allocation3 + $0x178] sm:$0xff] %vm226, -inf
      %280 = vst.msk [vmem:[#allocation3 + $0x198] sm:$0xff] %vm226, -inf
      %281 = vst.msk [vmem:[#allocation3 + $0x1b8] sm:$0xff] %vm226, -inf
      %282 = vst.msk [vmem:[#allocation3 + $0x1d8] sm:$0xff] %vm226, -inf
      %283 = vst.msk [vmem:[#allocation3 + $0x1f8] sm:$0xff] %vm226, -inf
      %v284 = vld [vmem:[%s219] sm:$0xf]
      %v285 = vld [vmem:[%s219 + $0x4] sm:$0xf]
      %v286 = vld [vmem:[%s219 + $0x8] sm:$0xf]
      %v287 = vld [vmem:[%s219 + $0xc] sm:$0xf]
      %v288 = vld [vmem:[%s219 + $0x10] sm:$0xf]
      %v289 = vld [vmem:[%s219 + $0x14] sm:$0xf]
      %v290 = vld [vmem:[%s219 + $0x18] sm:$0xf]
      %v291 = vld [vmem:[%s219 + $0x1c] sm:$0xf]
      %v292 = vld [vmem:[%s219 + $0x20] sm:$0xf]
      %v293 = vld [vmem:[%s219 + $0x24] sm:$0xf]
      %v294 = vld [vmem:[%s219 + $0x28] sm:$0xf]
      %v295 = vld [vmem:[%s219 + $0x2c] sm:$0xf]
      %v296 = vld [vmem:[%s219 + $0x30] sm:$0xf]
      %v297 = vld [vmem:[%s219 + $0x34] sm:$0xf]
      %v298 = vld [vmem:[%s219 + $0x38] sm:$0xf]
      %v299 = vld [vmem:[%s219 + $0x3c] sm:$0xf]
      %v300 = vld [vmem:[%s219 + $0x40] sm:$0xf]
      %v301 = vld [vmem:[%s219 + $0x44] sm:$0xf]
      %v302 = vld [vmem:[%s219 + $0x48] sm:$0xf]
      %v303 = vld [vmem:[%s219 + $0x4c] sm:$0xf]
      %v304 = vld [vmem:[%s219 + $0x50] sm:$0xf]
      %v305 = vld [vmem:[%s219 + $0x54] sm:$0xf]
      %v306 = vld [vmem:[%s219 + $0x58] sm:$0xf]
      %v307 = vld [vmem:[%s219 + $0x5c] sm:$0xf]
      %v308 = vld [vmem:[%s219 + $0x60] sm:$0xf]
      %v309 = vld [vmem:[%s219 + $0x64] sm:$0xf]
      %v310 = vld [vmem:[%s219 + $0x68] sm:$0xf]
      %v311 = vld [vmem:[%s219 + $0x6c] sm:$0xf]
      %v312 = vld [vmem:[%s219 + $0x70] sm:$0xf]
      %v313 = vld [vmem:[%s219 + $0x74] sm:$0xf]
      %v314 = vld [vmem:[%s219 + $0x78] sm:$0xf]
      %v315 = vld [vmem:[%s219 + $0x7c] sm:$0xf]
      %v316 = vld [vmem:[%s1] sm:$0x3]
      %v317 = vld [vmem:[%s2] sm:$0x1]
      %v319 = vlaneseq
      %v320 = vshrl.u32 %v319, 7
      %v321 = vsub.s32 0, %v320
      %v322 = vrot.slane %v317, %v321
      %v356 = vunpack.c.l.b16 %v284
      %v357 = vunpack.c.l.b16 %v285
      %v358 = vunpack.c.l.b16 %v286
      %v359 = vunpack.c.l.b16 %v287
      %v360 = vunpack.c.l.b16 %v288
      %v361 = vunpack.c.l.b16 %v289
      %v362 = vunpack.c.l.b16 %v290
      %v363 = vunpack.c.l.b16 %v291
      %v364 = vunpack.c.l.b16 %v292
      %v365 = vunpack.c.l.b16 %v293
      %v366 = vunpack.c.l.b16 %v294
      %v367 = vunpack.c.l.b16 %v295
      %v368 = vunpack.c.l.b16 %v296
      %v369 = vunpack.c.l.b16 %v297
      %v370 = vunpack.c.l.b16 %v298
      %v371 = vunpack.c.l.b16 %v299
      %v372 = vunpack.c.l.b16 %v300
      %v373 = vunpack.c.l.b16 %v301
      %v374 = vunpack.c.l.b16 %v302
      %v375 = vunpack.c.l.b16 %v303
      %v376 = vunpack.c.l.b16 %v304
      %v377 = vunpack.c.l.b16 %v305
      %v378 = vunpack.c.l.b16 %v306
      %v379 = vunpack.c.l.b16 %v307
      %v380 = vunpack.c.l.b16 %v308
      %v381 = vunpack.c.l.b16 %v309
      %v382 = vunpack.c.l.b16 %v310
      %v383 = vunpack.c.l.b16 %v311
      %v384 = vunpack.c.l.b16 %v312
      %v385 = vunpack.c.l.b16 %v313
      %v386 = vunpack.c.l.b16 %v314
      %v387 = vunpack.c.l.b16 %v315
      %v388 = vpack.c.b16 %v357, %v356
      %v389 = vpack.c.b16 %v359, %v358
      %v390 = vpack.c.b16 %v361, %v360
      %v391 = vpack.c.b16 %v363, %v362
      %v392 = vpack.c.b16 %v365, %v364
      %v393 = vpack.c.b16 %v367, %v366
      %v394 = vpack.c.b16 %v369, %v368
      %v395 = vpack.c.b16 %v371, %v370
      %v396 = vpack.c.b16 %v373, %v372
      %v397 = vpack.c.b16 %v375, %v374
      %v398 = vpack.c.b16 %v377, %v376
      %v399 = vpack.c.b16 %v379, %v378
      %v400 = vpack.c.b16 %v381, %v380
      %v401 = vpack.c.b16 %v383, %v382
      %v402 = vpack.c.b16 %v385, %v384
      %v403 = vpack.c.b16 %v387, %v386
      %vm404 = vcmask 31744
      %v406 = vsel %vm404, %v388, 0
      %v409 = vsel %vm404, %v389, 0
      %v412 = vsel %vm404, %v390, 0
      %v415 = vsel %vm404, %v391, 0
      %v418 = vsel %vm404, %v392, 0
      %v421 = vsel %vm404, %v393, 0
      %v424 = vsel %vm404, %v394, 0
      %v427 = vsel %vm404, %v395, 0
      %v430 = vsel %vm404, %v396, 0
      %v433 = vsel %vm404, %v397, 0
      %v436 = vsel %vm404, %v398, 0
      %v439 = vsel %vm404, %v399, 0
      %v442 = vsel %vm404, %v400, 0
      %v445 = vsel %vm404, %v401, 0
      %v448 = vsel %vm404, %v402, 0
      %v451 = vsel %vm404, %v403, 0
      %vm453 = vcmask 1041408
      %v455 = vsel %vm453, %v316, 0
      %457 = vmatprep.subr.bf16.mxu0 0
      %458 = vmatpush1.bf16.msra.mxu0 %v455
      %459 = vmatprep.subr.bf16.mxu0 0
      %460 = vmatpush1.bf16.msra.mxu0 0
      %461 = vmatprep.subr.bf16.mxu0 0
      %462 = vmatpush1.bf16.msra.mxu0 0
      %463 = vmatprep.subr.bf16.mxu0 0
      %464 = vmatpush1.bf16.msra.mxu0 0
      %465 = vmatprep.subr.bf16.mxu0 0
      %466 = vmatpush1.bf16.msra.mxu0 0
      %467 = vmatprep.subr.bf16.mxu0 0
      %468 = vmatpush1.bf16.msra.mxu0 0
      %469 = vmatprep.subr.bf16.mxu0 0
      %470 = vmatpush1.bf16.msra.mxu0 0
      %471 = vmatprep.subr.bf16.mxu0 0
      %472 = vmatpush1.bf16.msra.mxu0 0
      %473 = vmatprep.subr.bf16.mxu0 0
      %474 = vmatpush1.bf16.msra.mxu0 0
      %475 = vmatprep.subr.bf16.mxu0 0
      %476 = vmatpush1.bf16.msra.mxu0 0
      %477 = vmatprep.subr.bf16.mxu0 0
      %478 = vmatpush1.bf16.msra.mxu0 0
      %479 = vmatprep.subr.bf16.mxu0 0
      %480 = vmatpush1.bf16.msra.mxu0 0
      %481 = vmatprep.subr.bf16.mxu0 0
      %482 = vmatpush1.bf16.msra.mxu0 0
      %483 = vmatprep.subr.bf16.mxu0 0
      %484 = vmatpush1.bf16.msra.mxu0 0
      %485 = vmatprep.subr.bf16.mxu0 0
      %486 = vmatpush1.bf16.msra.mxu0 0
      %487 = vmatprep.subr.bf16.mxu0 0
      %488 = vmatpush1.bf16.msra.mxu0 0
      %489 = vmatprep.mubr.bf16.mxu0 0
      %490 = vmatmul.mubr.bf16.gmra.mrb[0].mxu0 %v406
      %v491 = vpop.f32.mrb[0].mxu0
      %v492 = vadd.f32 %v322, %v491
      %v493 = vpop.f32.mrb[0].mxu0
      %v494 = vpop.f32.mrb[0].mxu0
      %v495 = vadd.f32 %v322, %v494
      %v496 = vpop.f32.mrb[0].mxu0
      %497 = vmatprep.mubr.bf16.mxu0 0
      %498 = vmatmul.mubr.bf16.gmra.mrb[0].mxu0 %v409
      %v499 = vpop.f32.mrb[0].mxu0
      %v500 = vadd.f32 %v322, %v499
      %v501 = vpop.f32.mrb[0].mxu0
      %v502 = vpop.f32.mrb[0].mxu0
      %v503 = vadd.f32 %v322, %v502
      %v504 = vpop.f32.mrb[0].mxu0
      %505 = vmatprep.mubr.bf16.mxu0 0
      %506 = vmatmul.mubr.bf16.gmra.mrb[0].mxu0 %v412
      %v507 = vpop.f32.mrb[0].mxu0
      %v508 = vadd.f32 %v322, %v507
      %v509 = vpop.f32.mrb[0].mxu0
      %v510 = vpop.f32.mrb[0].mxu0
      %v511 = vadd.f32 %v322, %v510
      %v512 = vpop.f32.mrb[0].mxu0
      %513 = vmatprep.mubr.bf16.mxu0 0
      %514 = vmatmul.mubr.bf16.gmra.mrb[0].mxu0 %v415
      %v515 = vpop.f32.mrb[0].mxu0
      %v516 = vadd.f32 %v322, %v515
      %v517 = vpop.f32.mrb[0].mxu0
      %v518 = vpop.f32.mrb[0].mxu0
      %v519 = vadd.f32 %v322, %v518
      %v520 = vpop.f32.mrb[0].mxu0
      %521 = vmatprep.mubr.bf16.mxu0 0
      %522 = vmatmul.mubr.bf16.gmra.mrb[0].mxu0 %v418
      %v523 = vpop.f32.mrb[0].mxu0
      %v524 = vadd.f32 %v322, %v523
      %v525 = vpop.f32.mrb[0].mxu0
      %v526 = vpop.f32.mrb[0].mxu0
      %v527 = vadd.f32 %v322, %v526
      %v528 = vpop.f32.mrb[0].mxu0
      %529 = vmatprep.mubr.bf16.mxu0 0
      %530 = vmatmul.mubr.bf16.gmra.mrb[0].mxu0 %v421
      %v531 = vpop.f32.mrb[0].mxu0
      %v532 = vadd.f32 %v322, %v531
      %v533 = vpop.f32.mrb[0].mxu0
      %v534 = vpop.f32.mrb[0].mxu0
      %v535 = vadd.f32 %v322, %v534
      %v536 = vpop.f32.mrb[0].mxu0
      %537 = vmatprep.mubr.bf16.mxu0 0
      %538 = vmatmul.mubr.bf16.gmra.mrb[0].mxu0 %v424
      %v539 = vpop.f32.mrb[0].mxu0
      %v540 = vadd.f32 %v322, %v539
      %v541 = vpop.f32.mrb[0].mxu0
      %v542 = vpop.f32.mrb[0].mxu0
      %v543 = vadd.f32 %v322, %v542
      %v544 = vpop.f32.mrb[0].mxu0
      %545 = vmatprep.mubr.bf16.mxu0 0
      %546 = vmatmul.mubr.bf16.gmra.mrb[0].mxu0 %v427
      %v547 = vpop.f32.mrb[0].mxu0
      %v548 = vadd.f32 %v322, %v547
      %v549 = vpop.f32.mrb[0].mxu0
      %v550 = vpop.f32.mrb[0].mxu0
      %v551 = vadd.f32 %v322, %v550
      %v552 = vpop.f32.mrb[0].mxu0
      %553 = vmatprep.mubr.bf16.mxu0 0
      %554 = vmatmul.mubr.bf16.gmra.mrb[0].mxu0 %v430
      %v555 = vpop.f32.mrb[0].mxu0
      %v556 = vadd.f32 %v322, %v555
      %v557 = vpop.f32.mrb[0].mxu0
      %v558 = vpop.f32.mrb[0].mxu0
      %v559 = vadd.f32 %v322, %v558
      %v560 = vpop.f32.mrb[0].mxu0
      %561 = vmatprep.mubr.bf16.mxu0 0
      %562 = vmatmul.mubr.bf16.gmra.mrb[0].mxu0 %v433
      %v563 = vpop.f32.mrb[0].mxu0
      %v564 = vadd.f32 %v322, %v563
      %v565 = vpop.f32.mrb[0].mxu0
      %v566 = vpop.f32.mrb[0].mxu0
      %v567 = vadd.f32 %v322, %v566
      %v568 = vpop.f32.mrb[0].mxu0
      %569 = vmatprep.mubr.bf16.mxu0 0
      %570 = vmatmul.mubr.bf16.gmra.mrb[0].mxu0 %v436
      %v571 = vpop.f32.mrb[0].mxu0
      %v572 = vadd.f32 %v322, %v571
      %v573 = vpop.f32.mrb[0].mxu0
      %v574 = vpop.f32.mrb[0].mxu0
      %v575 = vadd.f32 %v322, %v574
      %v576 = vpop.f32.mrb[0].mxu0
      %577 = vmatprep.mubr.bf16.mxu0 0
      %578 = vmatmul.mubr.bf16.gmra.mrb[0].mxu0 %v439
      %v579 = vpop.f32.mrb[0].mxu0
      %v580 = vadd.f32 %v322, %v579
      %v581 = vpop.f32.mrb[0].mxu0
      %v582 = vpop.f32.mrb[0].mxu0
      %v583 = vadd.f32 %v322, %v582
      %v584 = vpop.f32.mrb[0].mxu0
      %585 = vmatprep.mubr.bf16.mxu0 0
      %586 = vmatmul.mubr.bf16.gmra.mrb[0].mxu0 %v442
      %v587 = vpop.f32.mrb[0].mxu0
      %v588 = vadd.f32 %v322, %v587
      %v589 = vpop.f32.mrb[0].mxu0
      %v590 = vpop.f32.mrb[0].mxu0
      %v591 = vadd.f32 %v322, %v590
      %v592 = vpop.f32.mrb[0].mxu0
      %593 = vmatprep.mubr.bf16.mxu0 0
      %594 = vmatmul.mubr.bf16.gmra.mrb[0].mxu0 %v445
      %v595 = vpop.f32.mrb[0].mxu0
      %v596 = vadd.f32 %v322, %v595
      %v597 = vpop.f32.mrb[0].mxu0
      %v598 = vpop.f32.mrb[0].mxu0
      %v599 = vadd.f32 %v322, %v598
      %v600 = vpop.f32.mrb[0].mxu0
      %601 = vmatprep.mubr.bf16.mxu0 0
      %602 = vmatmul.mubr.bf16.gmra.mrb[0].mxu0 %v448
      %v603 = vpop.f32.mrb[0].mxu0
      %v604 = vadd.f32 %v322, %v603
      %v605 = vpop.f32.mrb[0].mxu0
      %v606 = vpop.f32.mrb[0].mxu0
      %v607 = vadd.f32 %v322, %v606
      %v608 = vpop.f32.mrb[0].mxu0
      %609 = vmatprep.mubr.bf16.mxu0 0
      %610 = vmatmul.mubr.bf16.gmra.mrb[0].mxu0 %v451
      %v611 = vpop.f32.mrb[0].mxu0
      %v612 = vadd.f32 %v322, %v611
      %v613 = vpop.f32.mrb[0].mxu0
      %v614 = vpop.f32.mrb[0].mxu0
      %v615 = vadd.f32 %v322, %v614
      %v616 = vpop.f32.mrb[0].mxu0
      %617 = vdwg.mxu0
      %vm618 = vcmp.gt.f32.partialorder %v492, 0.0
      %vm619 = vcmp.gt.f32.partialorder %v495, 0.0
      %vm620 = vcmp.gt.f32.partialorder %v500, 0.0
      %vm621 = vcmp.gt.f32.partialorder %v503, 0.0
      %vm622 = vcmp.gt.f32.partialorder %v508, 0.0
      %vm623 = vcmp.gt.f32.partialorder %v511, 0.0
      %vm624 = vcmp.gt.f32.partialorder %v516, 0.0
      %vm625 = vcmp.gt.f32.partialorder %v519, 0.0
      %vm626 = vcmp.gt.f32.partialorder %v524, 0.0
      %vm627 = vcmp.gt.f32.partialorder %v527, 0.0
      %vm628 = vcmp.gt.f32.partialorder %v532, 0.0
      %vm629 = vcmp.gt.f32.partialorder %v535, 0.0
      %vm630 = vcmp.gt.f32.partialorder %v540, 0.0
      %vm631 = vcmp.gt.f32.partialorder %v543, 0.0
      %vm632 = vcmp.gt.f32.partialorder %v548, 0.0
      %vm633 = vcmp.gt.f32.partialorder %v551, 0.0
      %vm634 = vcmp.gt.f32.partialorder %v556, 0.0
      %vm635 = vcmp.gt.f32.partialorder %v559, 0.0
      %vm636 = vcmp.gt.f32.partialorder %v564, 0.0
      %vm637 = vcmp.gt.f32.partialorder %v567, 0.0
      %vm638 = vcmp.gt.f32.partialorder %v572, 0.0
      %vm639 = vcmp.gt.f32.partialorder %v575, 0.0
      %vm640 = vcmp.gt.f32.partialorder %v580, 0.0
      %vm641 = vcmp.gt.f32.partialorder %v583, 0.0
      %vm642 = vcmp.gt.f32.partialorder %v588, 0.0
      %vm643 = vcmp.gt.f32.partialorder %v591, 0.0
      %vm644 = vcmp.gt.f32.partialorder %v596, 0.0
      %vm645 = vcmp.gt.f32.partialorder %v599, 0.0
      %vm646 = vcmp.gt.f32.partialorder %v604, 0.0
      %vm647 = vcmp.gt.f32.partialorder %v607, 0.0
      %vm648 = vcmp.gt.f32.partialorder %v612, 0.0
      %vm649 = vcmp.gt.f32.partialorder %v615, 0.0
      %v650 = vmul.f32 %v492, 0.1
      %v651 = vmul.f32 %v495, 0.1
      %v652 = vmul.f32 %v500, 0.1
      %v653 = vmul.f32 %v503, 0.1
      %v654 = vmul.f32 %v508, 0.1
      %v655 = vmul.f32 %v511, 0.1
      %v656 = vmul.f32 %v516, 0.1
      %v657 = vmul.f32 %v519, 0.1
      %v658 = vmul.f32 %v524, 0.1
      %v659 = vmul.f32 %v527, 0.1
      %v660 = vmul.f32 %v532, 0.1
      %v661 = vmul.f32 %v535, 0.1
      %v662 = vmul.f32 %v540, 0.1
      %v663 = vmul.f32 %v543, 0.1
      %v664 = vmul.f32 %v548, 0.1
      %v665 = vmul.f32 %v551, 0.1
      %v666 = vmul.f32 %v556, 0.1
      %v667 = vmul.f32 %v559, 0.1
      %v668 = vmul.f32 %v564, 0.1
      %v669 = vmul.f32 %v567, 0.1
      %v670 = vmul.f32 %v572, 0.1
      %v671 = vmul.f32 %v575, 0.1
      %v672 = vmul.f32 %v580, 0.1
      %v673 = vmul.f32 %v583, 0.1
      %v674 = vmul.f32 %v588, 0.1
      %v675 = vmul.f32 %v591, 0.1
      %v676 = vmul.f32 %v596, 0.1
      %v677 = vmul.f32 %v599, 0.1
      %v678 = vmul.f32 %v604, 0.1
      %v679 = vmul.f32 %v607, 0.1
      %v680 = vmul.f32 %v612, 0.1
      %v681 = vmul.f32 %v615, 0.1
      %v682 = vsel %vm618, %v492, %v650
      %v683 = vsel %vm619, %v495, %v651
      %v684 = vsel %vm620, %v500, %v652
      %v685 = vsel %vm621, %v503, %v653
      %v686 = vsel %vm622, %v508, %v654
      %v687 = vsel %vm623, %v511, %v655
      %v688 = vsel %vm624, %v516, %v656
      %v689 = vsel %vm625, %v519, %v657
      %v690 = vsel %vm626, %v524, %v658
      %v691 = vsel %vm627, %v527, %v659
      %v692 = vsel %vm628, %v532, %v660
      %v693 = vsel %vm629, %v535, %v661
      %v694 = vsel %vm630, %v540, %v662
      %v695 = vsel %vm631, %v543, %v663
      %v696 = vsel %vm632, %v548, %v664
      %v697 = vsel %vm633, %v551, %v665
      %v698 = vsel %vm634, %v556, %v666
      %v699 = vsel %vm635, %v559, %v667
      %v700 = vsel %vm636, %v564, %v668
      %v701 = vsel %vm637, %v567, %v669
      %v702 = vsel %vm638, %v572, %v670
      %v703 = vsel %vm639, %v575, %v671
      %v704 = vsel %vm640, %v580, %v672
      %v705 = vsel %vm641, %v583, %v673
      %v706 = vsel %vm642, %v588, %v674
      %v707 = vsel %vm643, %v591, %v675
      %v708 = vsel %vm644, %v596, %v676
      %v709 = vsel %vm645, %v599, %v677
      %v710 = vsel %vm646, %v604, %v678
      %v711 = vsel %vm647, %v607, %v679
      %v712 = vsel %vm648, %v612, %v680
      %v713 = vsel %vm649, %v615, %v681
      %v714 = vld [vmem:[%s3] sm:$0x1]
      %v715 = vld [vmem:[%s3 + $0x1] sm:$0x1]
      %v716 = vld [vmem:[%s3 + $0x2] sm:$0x1]
      %v717 = vld [vmem:[%s3 + $0x3] sm:$0x1]
      %v718 = vpack.c.bf16 %v683, %v682
      %v719 = vpack.c.bf16 %v685, %v684
      %v720 = vpack.c.bf16 %v687, %v686
      %v721 = vpack.c.bf16 %v689, %v688
      %v722 = vpack.c.bf16 %v691, %v690
      %v723 = vpack.c.bf16 %v693, %v692
      %v724 = vpack.c.bf16 %v695, %v694
      %v725 = vpack.c.bf16 %v697, %v696
      %v726 = vpack.c.bf16 %v699, %v698
      %v727 = vpack.c.bf16 %v701, %v700
      %v728 = vpack.c.bf16 %v703, %v702
      %v729 = vpack.c.bf16 %v705, %v704
      %v730 = vpack.c.bf16 %v707, %v706
      %v731 = vpack.c.bf16 %v709, %v708
      %v732 = vpack.c.bf16 %v711, %v710
      %v733 = vpack.c.bf16 %v713, %v712
      %v734 = vld [vmem:[%s4] sm:$0x1]
      %v736 = vlaneseq
      %v737 = vshrl.u32 %v736, 7
      %v738 = vsub.s32 0, %v737
      %v739 = vrot.slane %v734, %v738
      %v742 = vsel %vm226, %v718, 0
      %v745 = vsel %vm226, %v719, 0
      %v748 = vsel %vm226, %v720, 0
      %v751 = vsel %vm226, %v721, 0
      %v754 = vsel %vm226, %v722, 0
      %v757 = vsel %vm226, %v723, 0
      %v760 = vsel %vm226, %v724, 0
      %v763 = vsel %vm226, %v725, 0
      %v766 = vsel %vm226, %v726, 0
      %v769 = vsel %vm226, %v727, 0
      %v772 = vsel %vm226, %v728, 0
      %v775 = vsel %vm226, %v729, 0
      %v778 = vsel %vm226, %v730, 0
      %v781 = vsel %vm226, %v731, 0
      %v784 = vsel %vm226, %v732, 0
      %v787 = vsel %vm226, %v733, 0
      %vm789 = vcmask 1040384
      %v791 = vsel %vm789, %v714, 0
      %793 = vmatprep.subr.bf16.mxu0 0
      %794 = vmatpush1.bf16.msra.mxu0 %v791
      %795 = vmatprep.subr.bf16.mxu0 0
      %796 = vmatpush1.bf16.msra.mxu0 0
      %797 = vmatprep.subr.bf16.mxu0 0
      %798 = vmatpush1.bf16.msra.mxu0 0
      %799 = vmatprep.subr.bf16.mxu0 0
      %800 = vmatpush1.bf16.msra.mxu0 0
      %801 = vmatprep.subr.bf16.mxu0 0
      %802 = vmatpush1.bf16.msra.mxu0 0
      %803 = vmatprep.subr.bf16.mxu0 0
      %804 = vmatpush1.bf16.msra.mxu0 0
      %805 = vmatprep.subr.bf16.mxu0 0
      %806 = vmatpush1.bf16.msra.mxu0 0
      %807 = vmatprep.subr.bf16.mxu0 0
      %808 = vmatpush1.bf16.msra.mxu0 0
      %809 = vmatprep.subr.bf16.mxu0 0
      %810 = vmatpush1.bf16.msra.mxu0 0
      %811 = vmatprep.subr.bf16.mxu0 0
      %812 = vmatpush1.bf16.msra.mxu0 0
      %813 = vmatprep.subr.bf16.mxu0 0
      %814 = vmatpush1.bf16.msra.mxu0 0
      %815 = vmatprep.subr.bf16.mxu0 0
      %816 = vmatpush1.bf16.msra.mxu0 0
      %817 = vmatprep.subr.bf16.mxu0 0
      %818 = vmatpush1.bf16.msra.mxu0 0
      %819 = vmatprep.subr.bf16.mxu0 0
      %820 = vmatpush1.bf16.msra.mxu0 0
      %821 = vmatprep.subr.bf16.mxu0 0
      %822 = vmatpush1.bf16.msra.mxu0 0
      %823 = vmatprep.subr.bf16.mxu0 0
      %824 = vmatpush1.bf16.msra.mxu0 0
      %825 = vmatprep.mubr.bf16.mxu0 0
      %826 = vmatmul.mubr.bf16.gmra.mrb[0].mxu0 %v742
      %v827 = vpop.f32.mrb[0].mxu0
      %v828 = vadd.f32 %v739, %v827
      %v829 = vpop.f32.mrb[0].mxu0
      %v830 = vpop.f32.mrb[0].mxu0
      %v831 = vadd.f32 %v739, %v830
      %v832 = vpop.f32.mrb[0].mxu0
      %833 = vmatprep.mubr.bf16.mxu0 0
      %834 = vmatmul.mubr.bf16.gmra.mrb[0].mxu0 %v745
      %v835 = vpop.f32.mrb[0].mxu0
      %v836 = vadd.f32 %v739, %v835
      %v837 = vpop.f32.mrb[0].mxu0
      %v838 = vpop.f32.mrb[0].mxu0
      %v839 = vadd.f32 %v739, %v838
      %v840 = vpop.f32.mrb[0].mxu0
      %841 = vmatprep.mubr.bf16.mxu0 0
      %842 = vmatmul.mubr.bf16.gmra.mrb[0].mxu0 %v748
      %v843 = vpop.f32.mrb[0].mxu0
      %v844 = vadd.f32 %v739, %v843
      %v845 = vpop.f32.mrb[0].mxu0
      %v846 = vpop.f32.mrb[0].mxu0
      %v847 = vadd.f32 %v739, %v846
      %v848 = vpop.f32.mrb[0].mxu0
      %849 = vmatprep.mubr.bf16.mxu0 0
      %850 = vmatmul.mubr.bf16.gmra.mrb[0].mxu0 %v751
      %v851 = vpop.f32.mrb[0].mxu0
      %v852 = vadd.f32 %v739, %v851
      %v853 = vpop.f32.mrb[0].mxu0
      %v854 = vpop.f32.mrb[0].mxu0
      %v855 = vadd.f32 %v739, %v854
      %v856 = vpop.f32.mrb[0].mxu0
      %857 = vmatprep.mubr.bf16.mxu0 0
      %858 = vmatmul.mubr.bf16.gmra.mrb[0].mxu0 %v754
      %v859 = vpop.f32.mrb[0].mxu0
      %v860 = vadd.f32 %v739, %v859
      %v861 = vpop.f32.mrb[0].mxu0
      %v862 = vpop.f32.mrb[0].mxu0
      %v863 = vadd.f32 %v739, %v862
      %v864 = vpop.f32.mrb[0].mxu0
      %865 = vmatprep.mubr.bf16.mxu0 0
      %866 = vmatmul.mubr.bf16.gmra.mrb[0].mxu0 %v757
      %v867 = vpop.f32.mrb[0].mxu0
      %v868 = vadd.f32 %v739, %v867
      %v869 = vpop.f32.mrb[0].mxu0
      %v870 = vpop.f32.mrb[0].mxu0
      %v871 = vadd.f32 %v739, %v870
      %v872 = vpop.f32.mrb[0].mxu0
      %873 = vmatprep.mubr.bf16.mxu0 0
      %874 = vmatmul.mubr.bf16.gmra.mrb[0].mxu0 %v760
      %v875 = vpop.f32.mrb[0].mxu0
      %v876 = vadd.f32 %v739, %v875
      %v877 = vpop.f32.mrb[0].mxu0
      %v878 = vpop.f32.mrb[0].mxu0
      %v879 = vadd.f32 %v739, %v878
      %v880 = vpop.f32.mrb[0].mxu0
      %881 = vmatprep.mubr.bf16.mxu0 0
      %882 = vmatmul.mubr.bf16.gmra.mrb[0].mxu0 %v763
      %v883 = vpop.f32.mrb[0].mxu0
      %v884 = vadd.f32 %v739, %v883
      %v885 = vpop.f32.mrb[0].mxu0
      %v886 = vpop.f32.mrb[0].mxu0
      %v887 = vadd.f32 %v739, %v886
      %v888 = vpop.f32.mrb[0].mxu0
      %889 = vmatprep.mubr.bf16.mxu0 0
      %890 = vmatmul.mubr.bf16.gmra.mrb[0].mxu0 %v766
      %v891 = vpop.f32.mrb[0].mxu0
      %v892 = vadd.f32 %v739, %v891
      %v893 = vpop.f32.mrb[0].mxu0
      %v894 = vpop.f32.mrb[0].mxu0
      %v895 = vadd.f32 %v739, %v894
      %v896 = vpop.f32.mrb[0].mxu0
      %897 = vmatprep.mubr.bf16.mxu0 0
      %898 = vmatmul.mubr.bf16.gmra.mrb[0].mxu0 %v769
      %v899 = vpop.f32.mrb[0].mxu0
      %v900 = vadd.f32 %v739, %v899
      %v901 = vpop.f32.mrb[0].mxu0
      %v902 = vpop.f32.mrb[0].mxu0
      %v903 = vadd.f32 %v739, %v902
      %v904 = vpop.f32.mrb[0].mxu0
      %905 = vmatprep.mubr.bf16.mxu0 0
      %906 = vmatmul.mubr.bf16.gmra.mrb[0].mxu0 %v772
      %v907 = vpop.f32.mrb[0].mxu0
      %v908 = vadd.f32 %v739, %v907
      %v909 = vpop.f32.mrb[0].mxu0
      %v910 = vpop.f32.mrb[0].mxu0
      %v911 = vadd.f32 %v739, %v910
      %v912 = vpop.f32.mrb[0].mxu0
      %913 = vmatprep.mubr.bf16.mxu0 0
      %914 = vmatmul.mubr.bf16.gmra.mrb[0].mxu0 %v775
      %v915 = vpop.f32.mrb[0].mxu0
      %v916 = vadd.f32 %v739, %v915
      %v917 = vpop.f32.mrb[0].mxu0
      %v918 = vpop.f32.mrb[0].mxu0
      %v919 = vadd.f32 %v739, %v918
      %v920 = vpop.f32.mrb[0].mxu0
      %921 = vmatprep.mubr.bf16.mxu0 0
      %922 = vmatmul.mubr.bf16.gmra.mrb[0].mxu0 %v778
      %v923 = vpop.f32.mrb[0].mxu0
      %v924 = vadd.f32 %v739, %v923
      %v925 = vpop.f32.mrb[0].mxu0
      %v926 = vpop.f32.mrb[0].mxu0
      %v927 = vadd.f32 %v739, %v926
      %v928 = vpop.f32.mrb[0].mxu0
      %929 = vmatprep.mubr.bf16.mxu0 0
      %930 = vmatmul.mubr.bf16.gmra.mrb[0].mxu0 %v781
      %v931 = vpop.f32.mrb[0].mxu0
      %v932 = vadd.f32 %v739, %v931
      %v933 = vpop.f32.mrb[0].mxu0
      %v934 = vpop.f32.mrb[0].mxu0
      %v935 = vadd.f32 %v739, %v934
      %v936 = vpop.f32.mrb[0].mxu0
      %937 = vmatprep.mubr.bf16.mxu0 0
      %938 = vmatmul.mubr.bf16.gmra.mrb[0].mxu0 %v784
      %v939 = vpop.f32.mrb[0].mxu0
      %v940 = vadd.f32 %v739, %v939
      %v941 = vpop.f32.mrb[0].mxu0
      %v942 = vpop.f32.mrb[0].mxu0
      %v943 = vadd.f32 %v739, %v942
      %v944 = vpop.f32.mrb[0].mxu0
      %945 = vmatprep.mubr.bf16.mxu0 0
      %946 = vmatmul.mubr.bf16.gmra.mrb[0].mxu0 %v787
      %v947 = vpop.f32.mrb[0].mxu0
      %v948 = vadd.f32 %v739, %v947
      %v949 = vpop.f32.mrb[0].mxu0
      %v950 = vpop.f32.mrb[0].mxu0
      %v951 = vadd.f32 %v739, %v950
      %v952 = vpop.f32.mrb[0].mxu0
      %953 = vdwg.mxu0
      %s954 = scalar_lea.vmem [#allocation2], 96
      %955 = vst.msk [vmem:[%s954] sm:$0xff] %vm226, %v682
      %956 = vst.msk [vmem:[%s954 + $0x8] sm:$0xff] %vm226, %v683
      %957 = vst.msk [vmem:[%s954 + $0x10] sm:$0xff] %vm226, %v684
      %958 = vst.msk [vmem:[%s954 + $0x18] sm:$0xff] %vm226, %v685
      %959 = vst.msk [vmem:[%s954 + $0x20] sm:$0xff] %vm226, %v686
      %960 = vst.msk [vmem:[%s954 + $0x28] sm:$0xff] %vm226, %v687
      %961 = vst.msk [vmem:[%s954 + $0x30] sm:$0xff] %vm226, %v688
      %962 = vst.msk [vmem:[%s954 + $0x38] sm:$0xff] %vm226, %v689
      %963 = vst.msk [vmem:[%s954 + $0x40] sm:$0xff] %vm226, %v690
      %964 = vst.msk [vmem:[%s954 + $0x48] sm:$0xff] %vm226, %v691
      %965 = vst.msk [vmem:[%s954 + $0x50] sm:$0xff] %vm226, %v692
      %966 = vst.msk [vmem:[%s954 + $0x58] sm:$0xff] %vm226, %v693
      %967 = vst.msk [vmem:[%s954 + $0x60] sm:$0xff] %vm226, %v694
      %968 = vst.msk [vmem:[%s954 + $0x68] sm:$0xff] %vm226, %v695
      %969 = vst.msk [vmem:[%s954 + $0x70] sm:$0xff] %vm226, %v696
      %970 = vst.msk [vmem:[%s954 + $0x78] sm:$0xff] %vm226, %v697
      %971 = vst.msk [vmem:[%s954 + $0x80] sm:$0xff] %vm226, %v698
      %972 = vst.msk [vmem:[%s954 + $0x88] sm:$0xff] %vm226, %v699
      %973 = vst.msk [vmem:[%s954 + $0x90] sm:$0xff] %vm226, %v700
      %974 = vst.msk [vmem:[%s954 + $0x98] sm:$0xff] %vm226, %v701
      %975 = vst.msk [vmem:[%s954 + $0xa0] sm:$0xff] %vm226, %v702
      %976 = vst.msk [vmem:[%s954 + $0xa8] sm:$0xff] %vm226, %v703
      %977 = vst.msk [vmem:[%s954 + $0xb0] sm:$0xff] %vm226, %v704
      %978 = vst.msk [vmem:[%s954 + $0xb8] sm:$0xff] %vm226, %v705
      %979 = vst.msk [vmem:[%s954 + $0xc0] sm:$0xff] %vm226, %v706
      %980 = vst.msk [vmem:[%s954 + $0xc8] sm:$0xff] %vm226, %v707
      %981 = vst.msk [vmem:[%s954 + $0xd0] sm:$0xff] %vm226, %v708
      %982 = vst.msk [vmem:[%s954 + $0xd8] sm:$0xff] %vm226, %v709
      %983 = vst.msk [vmem:[%s954 + $0xe0] sm:$0xff] %vm226, %v710
      %984 = vst.msk [vmem:[%s954 + $0xe8] sm:$0xff] %vm226, %v711
      %985 = vst.msk [vmem:[%s954 + $0xf0] sm:$0xff] %vm226, %v712
      %986 = vst.msk [vmem:[%s954 + $0xf8] sm:$0xff] %vm226, %v713
      %v987 = vld [vmem:[#allocation2] sm:$0xff]
      %v988 = vld [vmem:[#allocation2 + $0x8] sm:$0xff]
      %v989 = vld [vmem:[#allocation2 + $0x10] sm:$0xff]
      %v990 = vld [vmem:[#allocation2 + $0x18] sm:$0xff]
      %v991 = vld [vmem:[#allocation2 + $0x20] sm:$0xff]
      %v992 = vld [vmem:[#allocation2 + $0x28] sm:$0xff]
      %v993 = vld [vmem:[#allocation2 + $0x30] sm:$0xff]
      %v994 = vld [vmem:[#allocation2 + $0x38] sm:$0xff]
      %v995 = vld [vmem:[#allocation2 + $0x40] sm:$0xff]
      %v996 = vld [vmem:[#allocation2 + $0x48] sm:$0xff]
      %v997 = vld [vmem:[#allocation2 + $0x50] sm:$0xff]
      %v998 = vld [vmem:[#allocation2 + $0x58] sm:$0xff]
      %v999 = vld [vmem:[#allocation2 + $0x60] sm:$0xff]
      %v1000 = vld [vmem:[#allocation2 + $0x68] sm:$0xff]
      %v1001 = vld [vmem:[#allocation2 + $0x70] sm:$0xff]
      %v1002 = vld [vmem:[#allocation2 + $0x78] sm:$0xff]
      %v1003 = vld [vmem:[#allocation2 + $0x80] sm:$0xff]
      %v1004 = vld [vmem:[#allocation2 + $0x88] sm:$0xff]
      %v1005 = vld [vmem:[#allocation2 + $0x90] sm:$0xff]
      %v1006 = vld [vmem:[#allocation2 + $0x98] sm:$0xff]
      %v1007 = vld [vmem:[#allocation2 + $0xa0] sm:$0xff]
      %v1008 = vld [vmem:[#allocation2 + $0xa8] sm:$0xff]
      %v1009 = vld [vmem:[#allocation2 + $0xb0] sm:$0xff]
      %v1010 = vld [vmem:[#allocation2 + $0xb8] sm:$0xff]
      %v1011 = vld [vmem:[#allocation2 + $0xc0] sm:$0xff]
      %v1012 = vld [vmem:[#allocation2 + $0xc8] sm:$0xff]
      %v1013 = vld [vmem:[#allocation2 + $0xd0] sm:$0xff]
      %v1014 = vld [vmem:[#allocation2 + $0xd8] sm:$0xff]
      %v1015 = vld [vmem:[#allocation2 + $0xe0] sm:$0xff]
      %v1016 = vld [vmem:[#allocation2 + $0xe8] sm:$0xff]
      %v1017 = vld [vmem:[#allocation2 + $0xf0] sm:$0xff]
      %v1018 = vld [vmem:[#allocation2 + $0xf8] sm:$0xff]
      %v1019 = vld [vmem:[#allocation2 + $0x100] sm:$0xff]
      %v1020 = vld [vmem:[#allocation2 + $0x108] sm:$0xff]
      %v1021 = vld [vmem:[#allocation2 + $0x110] sm:$0xff]
      %v1022 = vld [vmem:[#allocation2 + $0x118] sm:$0xff]
      %v1023 = vld [vmem:[#allocation2 + $0x120] sm:$0xff]
      %v1024 = vld [vmem:[#allocation2 + $0x128] sm:$0xff]
      %v1025 = vld [vmem:[#allocation2 + $0x130] sm:$0xff]
      %v1026 = vld [vmem:[#allocation2 + $0x138] sm:$0xff]
      %v1027 = vld [vmem:[#allocation2 + $0x140] sm:$0xff]
      %v1028 = vld [vmem:[#allocation2 + $0x148] sm:$0xff]
      %v1029 = vld [vmem:[#allocation2 + $0x150] sm:$0xff]
      %v1030 = vld [vmem:[#allocation2 + $0x158] sm:$0xff]
      %v1031 = vld [vmem:[#allocation2 + $0x160] sm:$0xff]
      %v1032 = vld [vmem:[#allocation2 + $0x168] sm:$0xff]
      %v1033 = vld [vmem:[#allocation2 + $0x170] sm:$0xff]
      %v1034 = vld [vmem:[#allocation2 + $0x178] sm:$0xff]
      %s1035 = scalar_lea.vmem [#allocation2], 16
      %v1036 = vld [vmem:[%s1035] sm:$0xff]
      %v1037 = vld [vmem:[%s1035 + $0x8] sm:$0xff]
      %v1038 = vld [vmem:[%s1035 + $0x10] sm:$0xff]
      %v1039 = vld [vmem:[%s1035 + $0x18] sm:$0xff]
      %v1040 = vld [vmem:[%s1035 + $0x20] sm:$0xff]
      %v1041 = vld [vmem:[%s1035 + $0x28] sm:$0xff]
      %v1042 = vld [vmem:[%s1035 + $0x30] sm:$0xff]
      %v1043 = vld [vmem:[%s1035 + $0x38] sm:$0xff]
      %v1044 = vld [vmem:[%s1035 + $0x40] sm:$0xff]
      %v1045 = vld [vmem:[%s1035 + $0x48] sm:$0xff]
      %v1046 = vld [vmem:[%s1035 + $0x50] sm:$0xff]
      %v1047 = vld [vmem:[%s1035 + $0x58] sm:$0xff]
      %v1048 = vld [vmem:[%s1035 + $0x60] sm:$0xff]
      %v1049 = vld [vmem:[%s1035 + $0x68] sm:$0xff]
      %v1050 = vld [vmem:[%s1035 + $0x70] sm:$0xff]
      %v1051 = vld [vmem:[%s1035 + $0x78] sm:$0xff]
      %v1052 = vld [vmem:[%s1035 + $0x80] sm:$0xff]
      %v1053 = vld [vmem:[%s1035 + $0x88] sm:$0xff]
      %v1054 = vld [vmem:[%s1035 + $0x90] sm:$0xff]
      %v1055 = vld [vmem:[%s1035 + $0x98] sm:$0xff]
      %v1056 = vld [vmem:[%s1035 + $0xa0] sm:$0xff]
      %v1057 = vld [vmem:[%s1035 + $0xa8] sm:$0xff]
      %v1058 = vld [vmem:[%s1035 + $0xb0] sm:$0xff]
      %v1059 = vld [vmem:[%s1035 + $0xb8] sm:$0xff]
      %v1060 = vld [vmem:[%s1035 + $0xc0] sm:$0xff]
      %v1061 = vld [vmem:[%s1035 + $0xc8] sm:$0xff]
      %v1062 = vld [vmem:[%s1035 + $0xd0] sm:$0xff]
      %v1063 = vld [vmem:[%s1035 + $0xd8] sm:$0xff]
      %v1064 = vld [vmem:[%s1035 + $0xe0] sm:$0xff]
      %v1065 = vld [vmem:[%s1035 + $0xe8] sm:$0xff]
      %v1066 = vld [vmem:[%s1035 + $0xf0] sm:$0xff]
      %v1067 = vld [vmem:[%s1035 + $0xf8] sm:$0xff]
      %v1068 = vld [vmem:[%s1035 + $0x100] sm:$0xff]
      %v1069 = vld [vmem:[%s1035 + $0x108] sm:$0xff]
      %v1070 = vld [vmem:[%s1035 + $0x110] sm:$0xff]
      %v1071 = vld [vmem:[%s1035 + $0x118] sm:$0xff]
      %v1072 = vld [vmem:[%s1035 + $0x120] sm:$0xff]
      %v1073 = vld [vmem:[%s1035 + $0x128] sm:$0xff]
      %v1074 = vld [vmem:[%s1035 + $0x130] sm:$0xff]
      %v1075 = vld [vmem:[%s1035 + $0x138] sm:$0xff]
      %v1076 = vld [vmem:[%s1035 + $0x140] sm:$0xff]
      %v1077 = vld [vmem:[%s1035 + $0x148] sm:$0xff]
      %v1078 = vld [vmem:[%s1035 + $0x150] sm:$0xff]
      %v1079 = vld [vmem:[%s1035 + $0x158] sm:$0xff]
      %v1080 = vld [vmem:[%s1035 + $0x160] sm:$0xff]
      %v1081 = vld [vmem:[%s1035 + $0x168] sm:$0xff]
      %v1082 = vld [vmem:[%s1035 + $0x170] sm:$0xff]
      %v1083 = vld [vmem:[%s1035 + $0x178] sm:$0xff]
      %v1084 = vmax.f32 %v987, %v1036
      %v1085 = vmax.f32 %v988, %v1037
      %v1086 = vmax.f32 %v989, %v1038
      %v1087 = vmax.f32 %v990, %v1039
      %v1088 = vmax.f32 %v991, %v1040
      %v1089 = vmax.f32 %v992, %v1041
      %v1090 = vmax.f32 %v993, %v1042
      %v1091 = vmax.f32 %v994, %v1043
      %v1092 = vmax.f32 %v995, %v1044
      %v1093 = vmax.f32 %v996, %v1045
      %v1094 = vmax.f32 %v997, %v1046
      %v1095 = vmax.f32 %v998, %v1047
      %v1096 = vmax.f32 %v999, %v1048
      %v1097 = vmax.f32 %v1000, %v1049
      %v1098 = vmax.f32 %v1001, %v1050
      %v1099 = vmax.f32 %v1002, %v1051
      %v1100 = vmax.f32 %v1003, %v1052
      %v1101 = vmax.f32 %v1004, %v1053
      %v1102 = vmax.f32 %v1005, %v1054
      %v1103 = vmax.f32 %v1006, %v1055
      %v1104 = vmax.f32 %v1007, %v1056
      %v1105 = vmax.f32 %v1008, %v1057
      %v1106 = vmax.f32 %v1009, %v1058
      %v1107 = vmax.f32 %v1010, %v1059
      %v1108 = vmax.f32 %v1011, %v1060
      %v1109 = vmax.f32 %v1012, %v1061
      %v1110 = vmax.f32 %v1013, %v1062
      %v1111 = vmax.f32 %v1014, %v1063
      %v1112 = vmax.f32 %v1015, %v1064
      %v1113 = vmax.f32 %v1016, %v1065
      %v1114 = vmax.f32 %v1017, %v1066
      %v1115 = vmax.f32 %v1018, %v1067
      %v1116 = vmax.f32 %v1019, %v1068
      %v1117 = vmax.f32 %v1020, %v1069
      %v1118 = vmax.f32 %v1021, %v1070
      %v1119 = vmax.f32 %v1022, %v1071
      %v1120 = vmax.f32 %v1023, %v1072
      %v1121 = vmax.f32 %v1024, %v1073
      %v1122 = vmax.f32 %v1025, %v1074
      %v1123 = vmax.f32 %v1026, %v1075
      %v1124 = vmax.f32 %v1027, %v1076
      %v1125 = vmax.f32 %v1028, %v1077
      %v1126 = vmax.f32 %v1029, %v1078
      %v1127 = vmax.f32 %v1030, %v1079
      %v1128 = vmax.f32 %v1031, %v1080
      %v1129 = vmax.f32 %v1032, %v1081
      %v1130 = vmax.f32 %v1033, %v1082
      %v1131 = vmax.f32 %v1034, %v1083
      %s1132 = scalar_lea.vmem [#allocation2], 32
      %v1133 = vld [vmem:[%s1132] sm:$0xff]
      %v1134 = vld [vmem:[%s1132 + $0x8] sm:$0xff]
      %v1135 = vld [vmem:[%s1132 + $0x10] sm:$0xff]
      %v1136 = vld [vmem:[%s1132 + $0x18] sm:$0xff]
      %v1137 = vld [vmem:[%s1132 + $0x20] sm:$0xff]
      %v1138 = vld [vmem:[%s1132 + $0x28] sm:$0xff]
      %v1139 = vld [vmem:[%s1132 + $0x30] sm:$0xff]
      %v1140 = vld [vmem:[%s1132 + $0x38] sm:$0xff]
      %v1141 = vld [vmem:[%s1132 + $0x40] sm:$0xff]
      %v1142 = vld [vmem:[%s1132 + $0x48] sm:$0xff]
      %v1143 = vld [vmem:[%s1132 + $0x50] sm:$0xff]
      %v1144 = vld [vmem:[%s1132 + $0x58] sm:$0xff]
      %v1145 = vld [vmem:[%s1132 + $0x60] sm:$0xff]
      %v1146 = vld [vmem:[%s1132 + $0x68] sm:$0xff]
      %v1147 = vld [vmem:[%s1132 + $0x70] sm:$0xff]
      %v1148 = vld [vmem:[%s1132 + $0x78] sm:$0xff]
      %v1149 = vld [vmem:[%s1132 + $0x80] sm:$0xff]
      %v1150 = vld [vmem:[%s1132 + $0x88] sm:$0xff]
      %v1151 = vld [vmem:[%s1132 + $0x90] sm:$0xff]
      %v1152 = vld [vmem:[%s1132 + $0x98] sm:$0xff]
      %v1153 = vld [vmem:[%s1132 + $0xa0] sm:$0xff]
      %v1154 = vld [vmem:[%s1132 + $0xa8] sm:$0xff]
      %v1155 = vld [vmem:[%s1132 + $0xb0] sm:$0xff]
      %v1156 = vld [vmem:[%s1132 + $0xb8] sm:$0xff]
      %v1157 = vld [vmem:[%s1132 + $0xc0] sm:$0xff]
      %v1158 = vld [vmem:[%s1132 + $0xc8] sm:$0xff]
      %v1159 = vld [vmem:[%s1132 + $0xd0] sm:$0xff]
      %v1160 = vld [vmem:[%s1132 + $0xd8] sm:$0xff]
      %v1161 = vld [vmem:[%s1132 + $0xe0] sm:$0xff]
      %v1162 = vld [vmem:[%s1132 + $0xe8] sm:$0xff]
      %v1163 = vld [vmem:[%s1132 + $0xf0] sm:$0xff]
      %v1164 = vld [vmem:[%s1132 + $0xf8] sm:$0xff]
      %v1165 = vld [vmem:[%s1132 + $0x100] sm:$0xff]
      %v1166 = vld [vmem:[%s1132 + $0x108] sm:$0xff]
      %v1167 = vld [vmem:[%s1132 + $0x110] sm:$0xff]
      %v1168 = vld [vmem:[%s1132 + $0x118] sm:$0xff]
      %v1169 = vld [vmem:[%s1132 + $0x120] sm:$0xff]
      %v1170 = vld [vmem:[%s1132 + $0x128] sm:$0xff]
      %v1171 = vld [vmem:[%s1132 + $0x130] sm:$0xff]
      %v1172 = vld [vmem:[%s1132 + $0x138] sm:$0xff]
      %v1173 = vld [vmem:[%s1132 + $0x140] sm:$0xff]
      %v1174 = vld [vmem:[%s1132 + $0x148] sm:$0xff]
      %v1175 = vld [vmem:[%s1132 + $0x150] sm:$0xff]
      %v1176 = vld [vmem:[%s1132 + $0x158] sm:$0xff]
      %v1177 = vld [vmem:[%s1132 + $0x160] sm:$0xff]
      %v1178 = vld [vmem:[%s1132 + $0x168] sm:$0xff]
      %v1179 = vld [vmem:[%s1132 + $0x170] sm:$0xff]
      %v1180 = vld [vmem:[%s1132 + $0x178] sm:$0xff]
      %v1181 = vmax.f32 %v1084, %v1133
      %v1182 = vmax.f32 %v1085, %v1134
      %v1183 = vmax.f32 %v1086, %v1135
      %v1184 = vmax.f32 %v1087, %v1136
      %v1185 = vmax.f32 %v1088, %v1137
      %v1186 = vmax.f32 %v1089, %v1138
      %v1187 = vmax.f32 %v1090, %v1139
      %v1188 = vmax.f32 %v1091, %v1140
      %v1189 = vmax.f32 %v1092, %v1141
      %v1190 = vmax.f32 %v1093, %v1142
      %v1191 = vmax.f32 %v1094, %v1143
      %v1192 = vmax.f32 %v1095, %v1144
      %v1193 = vmax.f32 %v1096, %v1145
      %v1194 = vmax.f32 %v1097, %v1146
      %v1195 = vmax.f32 %v1098, %v1147
      %v1196 = vmax.f32 %v1099, %v1148
      %v1197 = vmax.f32 %v1100, %v1149
      %v1198 = vmax.f32 %v1101, %v1150
      %v1199 = vmax.f32 %v1102, %v1151
      %v1200 = vmax.f32 %v1103, %v1152
      %v1201 = vmax.f32 %v1104, %v1153
      %v1202 = vmax.f32 %v1105, %v1154
      %v1203 = vmax.f32 %v1106, %v1155
      %v1204 = vmax.f32 %v1107, %v1156
      %v1205 = vmax.f32 %v1108, %v1157
      %v1206 = vmax.f32 %v1109, %v1158
      %v1207 = vmax.f32 %v1110, %v1159
      %v1208 = vmax.f32 %v1111, %v1160
      %v1209 = vmax.f32 %v1112, %v1161
      %v1210 = vmax.f32 %v1113, %v1162
      %v1211 = vmax.f32 %v1114, %v1163
      %v1212 = vmax.f32 %v1115, %v1164
      %v1213 = vmax.f32 %v1116, %v1165
      %v1214 = vmax.f32 %v1117, %v1166
      %v1215 = vmax.f32 %v1118, %v1167
      %v1216 = vmax.f32 %v1119, %v1168
      %v1217 = vmax.f32 %v1120, %v1169
      %v1218 = vmax.f32 %v1121, %v1170
      %v1219 = vmax.f32 %v1122, %v1171
      %v1220 = vmax.f32 %v1123, %v1172
      %v1221 = vmax.f32 %v1124, %v1173
      %v1222 = vmax.f32 %v1125, %v1174
      %v1223 = vmax.f32 %v1126, %v1175
      %v1224 = vmax.f32 %v1127, %v1176
      %v1225 = vmax.f32 %v1128, %v1177
      %v1226 = vmax.f32 %v1129, %v1178
      %v1227 = vmax.f32 %v1130, %v1179
      %v1228 = vmax.f32 %v1131, %v1180
      %s1229 = scalar_lea.vmem [#allocation2], 48
      %v1230 = vld [vmem:[%s1229] sm:$0xff]
      %v1231 = vld [vmem:[%s1229 + $0x8] sm:$0xff]
      %v1232 = vld [vmem:[%s1229 + $0x10] sm:$0xff]
      %v1233 = vld [vmem:[%s1229 + $0x18] sm:$0xff]
      %v1234 = vld [vmem:[%s1229 + $0x20] sm:$0xff]
      %v1235 = vld [vmem:[%s1229 + $0x28] sm:$0xff]
      %v1236 = vld [vmem:[%s1229 + $0x30] sm:$0xff]
      %v1237 = vld [vmem:[%s1229 + $0x38] sm:$0xff]
      %v1238 = vld [vmem:[%s1229 + $0x40] sm:$0xff]
      %v1239 = vld [vmem:[%s1229 + $0x48] sm:$0xff]
      %v1240 = vld [vmem:[%s1229 + $0x50] sm:$0xff]
      %v1241 = vld [vmem:[%s1229 + $0x58] sm:$0xff]
      %v1242 = vld [vmem:[%s1229 + $0x60] sm:$0xff]
      %v1243 = vld [vmem:[%s1229 + $0x68] sm:$0xff]
      %v1244 = vld [vmem:[%s1229 + $0x70] sm:$0xff]
      %v1245 = vld [vmem:[%s1229 + $0x78] sm:$0xff]
      %v1246 = vld [vmem:[%s1229 + $0x80] sm:$0xff]
      %v1247 = vld [vmem:[%s1229 + $0x88] sm:$0xff]
      %v1248 = vld [vmem:[%s1229 + $0x90] sm:$0xff]
      %v1249 = vld [vmem:[%s1229 + $0x98] sm:$0xff]
      %v1250 = vld [vmem:[%s1229 + $0xa0] sm:$0xff]
      %v1251 = vld [vmem:[%s1229 + $0xa8] sm:$0xff]
      %v1252 = vld [vmem:[%s1229 + $0xb0] sm:$0xff]
      %v1253 = vld [vmem:[%s1229 + $0xb8] sm:$0xff]
      %v1254 = vld [vmem:[%s1229 + $0xc0] sm:$0xff]
      %v1255 = vld [vmem:[%s1229 + $0xc8] sm:$0xff]
      %v1256 = vld [vmem:[%s1229 + $0xd0] sm:$0xff]
      %v1257 = vld [vmem:[%s1229 + $0xd8] sm:$0xff]
      %v1258 = vld [vmem:[%s1229 + $0xe0] sm:$0xff]
      %v1259 = vld [vmem:[%s1229 + $0xe8] sm:$0xff]
      %v1260 = vld [vmem:[%s1229 + $0xf0] sm:$0xff]
      %v1261 = vld [vmem:[%s1229 + $0xf8] sm:$0xff]
      %v1262 = vld [vmem:[%s1229 + $0x100] sm:$0xff]
      %v1263 = vld [vmem:[%s1229 + $0x108] sm:$0xff]
      %v1264 = vld [vmem:[%s1229 + $0x110] sm:$0xff]
      %v1265 = vld [vmem:[%s1229 + $0x118] sm:$0xff]
      %v1266 = vld [vmem:[%s1229 + $0x120] sm:$0xff]
      %v1267 = vld [vmem:[%s1229 + $0x128] sm:$0xff]
      %v1268 = vld [vmem:[%s1229 + $0x130] sm:$0xff]
      %v1269 = vld [vmem:[%s1229 + $0x138] sm:$0xff]
      %v1270 = vld [vmem:[%s1229 + $0x140] sm:$0xff]
      %v1271 = vld [vmem:[%s1229 + $0x148] sm:$0xff]
      %v1272 = vld [vmem:[%s1229 + $0x150] sm:$0xff]
      %v1273 = vld [vmem:[%s1229 + $0x158] sm:$0xff]
      %v1274 = vld [vmem:[%s1229 + $0x160] sm:$0xff]
      %v1275 = vld [vmem:[%s1229 + $0x168] sm:$0xff]
      %v1276 = vld [vmem:[%s1229 + $0x170] sm:$0xff]
      %v1277 = vld [vmem:[%s1229 + $0x178] sm:$0xff]
      %v1278 = vmax.f32 %v1181, %v1230
      %v1279 = vmax.f32 %v1182, %v1231
      %v1280 = vmax.f32 %v1183, %v1232
      %v1281 = vmax.f32 %v1184, %v1233
      %v1282 = vmax.f32 %v1185, %v1234
      %v1283 = vmax.f32 %v1186, %v1235
      %v1284 = vmax.f32 %v1187, %v1236
      %v1285 = vmax.f32 %v1188, %v1237
      %v1286 = vmax.f32 %v1189, %v1238
      %v1287 = vmax.f32 %v1190, %v1239
      %v1288 = vmax.f32 %v1191, %v1240
      %v1289 = vmax.f32 %v1192, %v1241
      %v1290 = vmax.f32 %v1193, %v1242
      %v1291 = vmax.f32 %v1194, %v1243
      %v1292 = vmax.f32 %v1195, %v1244
      %v1293 = vmax.f32 %v1196, %v1245
      %v1294 = vmax.f32 %v1197, %v1246
      %v1295 = vmax.f32 %v1198, %v1247
      %v1296 = vmax.f32 %v1199, %v1248
      %v1297 = vmax.f32 %v1200, %v1249
      %v1298 = vmax.f32 %v1201, %v1250
      %v1299 = vmax.f32 %v1202, %v1251
      %v1300 = vmax.f32 %v1203, %v1252
      %v1301 = vmax.f32 %v1204, %v1253
      %v1302 = vmax.f32 %v1205, %v1254
      %v1303 = vmax.f32 %v1206, %v1255
      %v1304 = vmax.f32 %v1207, %v1256
      %v1305 = vmax.f32 %v1208, %v1257
      %v1306 = vmax.f32 %v1209, %v1258
      %v1307 = vmax.f32 %v1210, %v1259
      %v1308 = vmax.f32 %v1211, %v1260
      %v1309 = vmax.f32 %v1212, %v1261
      %v1310 = vmax.f32 %v1213, %v1262
      %v1311 = vmax.f32 %v1214, %v1263
      %v1312 = vmax.f32 %v1215, %v1264
      %v1313 = vmax.f32 %v1216, %v1265
      %v1314 = vmax.f32 %v1217, %v1266
      %v1315 = vmax.f32 %v1218, %v1267
      %v1316 = vmax.f32 %v1219, %v1268
      %v1317 = vmax.f32 %v1220, %v1269
      %v1318 = vmax.f32 %v1221, %v1270
      %v1319 = vmax.f32 %v1222, %v1271
      %v1320 = vmax.f32 %v1223, %v1272
      %v1321 = vmax.f32 %v1224, %v1273
      %v1322 = vmax.f32 %v1225, %v1274
      %v1323 = vmax.f32 %v1226, %v1275
      %v1324 = vmax.f32 %v1227, %v1276
      %v1325 = vmax.f32 %v1228, %v1277
      %s1326 = scalar_lea.vmem [#allocation2], 64
      %v1327 = vld [vmem:[%s1326] sm:$0xff]
      %v1328 = vld [vmem:[%s1326 + $0x8] sm:$0xff]
      %v1329 = vld [vmem:[%s1326 + $0x10] sm:$0xff]
      %v1330 = vld [vmem:[%s1326 + $0x18] sm:$0xff]
      %v1331 = vld [vmem:[%s1326 + $0x20] sm:$0xff]
      %v1332 = vld [vmem:[%s1326 + $0x28] sm:$0xff]
      %v1333 = vld [vmem:[%s1326 + $0x30] sm:$0xff]
      %v1334 = vld [vmem:[%s1326 + $0x38] sm:$0xff]
      %v1335 = vld [vmem:[%s1326 + $0x40] sm:$0xff]
      %v1336 = vld [vmem:[%s1326 + $0x48] sm:$0xff]
      %v1337 = vld [vmem:[%s1326 + $0x50] sm:$0xff]
      %v1338 = vld [vmem:[%s1326 + $0x58] sm:$0xff]
      %v1339 = vld [vmem:[%s1326 + $0x60] sm:$0xff]
      %v1340 = vld [vmem:[%s1326 + $0x68] sm:$0xff]
      %v1341 = vld [vmem:[%s1326 + $0x70] sm:$0xff]
      %v1342 = vld [vmem:[%s1326 + $0x78] sm:$0xff]
      %v1343 = vld [vmem:[%s1326 + $0x80] sm:$0xff]
      %v1344 = vld [vmem:[%s1326 + $0x88] sm:$0xff]
      %v1345 = vld [vmem:[%s1326 + $0x90] sm:$0xff]
      %v1346 = vld [vmem:[%s1326 + $0x98] sm:$0xff]
      %v1347 = vld [vmem:[%s1326 + $0xa0] sm:$0xff]
      %v1348 = vld [vmem:[%s1326 + $0xa8] sm:$0xff]
      %v1349 = vld [vmem:[%s1326 + $0xb0] sm:$0xff]
      %v1350 = vld [vmem:[%s1326 + $0xb8] sm:$0xff]
      %v1351 = vld [vmem:[%s1326 + $0xc0] sm:$0xff]
      %v1352 = vld [vmem:[%s1326 + $0xc8] sm:$0xff]
      %v1353 = vld [vmem:[%s1326 + $0xd0] sm:$0xff]
      %v1354 = vld [vmem:[%s1326 + $0xd8] sm:$0xff]
      %v1355 = vld [vmem:[%s1326 + $0xe0] sm:$0xff]
      %v1356 = vld [vmem:[%s1326 + $0xe8] sm:$0xff]
      %v1357 = vld [vmem:[%s1326 + $0xf0] sm:$0xff]
      %v1358 = vld [vmem:[%s1326 + $0xf8] sm:$0xff]
      %v1359 = vld [vmem:[%s1326 + $0x100] sm:$0xff]
      %v1360 = vld [vmem:[%s1326 + $0x108] sm:$0xff]
      %v1361 = vld [vmem:[%s1326 + $0x110] sm:$0xff]
      %v1362 = vld [vmem:[%s1326 + $0x118] sm:$0xff]
      %v1363 = vld [vmem:[%s1326 + $0x120] sm:$0xff]
      %v1364 = vld [vmem:[%s1326 + $0x128] sm:$0xff]
      %v1365 = vld [vmem:[%s1326 + $0x130] sm:$0xff]
      %v1366 = vld [vmem:[%s1326 + $0x138] sm:$0xff]
      %v1367 = vld [vmem:[%s1326 + $0x140] sm:$0xff]
      %v1368 = vld [vmem:[%s1326 + $0x148] sm:$0xff]
      %v1369 = vld [vmem:[%s1326 + $0x150] sm:$0xff]
      %v1370 = vld [vmem:[%s1326 + $0x158] sm:$0xff]
      %v1371 = vld [vmem:[%s1326 + $0x160] sm:$0xff]
      %v1372 = vld [vmem:[%s1326 + $0x168] sm:$0xff]
      %v1373 = vld [vmem:[%s1326 + $0x170] sm:$0xff]
      %v1374 = vld [vmem:[%s1326 + $0x178] sm:$0xff]
      %v1375 = vmax.f32 %v1278, %v1327
      %v1376 = vmax.f32 %v1279, %v1328
      %v1377 = vmax.f32 %v1280, %v1329
      %v1378 = vmax.f32 %v1281, %v1330
      %v1379 = vmax.f32 %v1282, %v1331
      %v1380 = vmax.f32 %v1283, %v1332
      %v1381 = vmax.f32 %v1284, %v1333
      %v1382 = vmax.f32 %v1285, %v1334
      %v1383 = vmax.f32 %v1286, %v1335
      %v1384 = vmax.f32 %v1287, %v1336
      %v1385 = vmax.f32 %v1288, %v1337
      %v1386 = vmax.f32 %v1289, %v1338
      %v1387 = vmax.f32 %v1290, %v1339
      %v1388 = vmax.f32 %v1291, %v1340
      %v1389 = vmax.f32 %v1292, %v1341
      %v1390 = vmax.f32 %v1293, %v1342
      %v1391 = vmax.f32 %v1294, %v1343
      %v1392 = vmax.f32 %v1295, %v1344
      %v1393 = vmax.f32 %v1296, %v1345
      %v1394 = vmax.f32 %v1297, %v1346
      %v1395 = vmax.f32 %v1298, %v1347
      %v1396 = vmax.f32 %v1299, %v1348
      %v1397 = vmax.f32 %v1300, %v1349
      %v1398 = vmax.f32 %v1301, %v1350
      %v1399 = vmax.f32 %v1302, %v1351
      %v1400 = vmax.f32 %v1303, %v1352
      %v1401 = vmax.f32 %v1304, %v1353
      %v1402 = vmax.f32 %v1305, %v1354
      %v1403 = vmax.f32 %v1306, %v1355
      %v1404 = vmax.f32 %v1307, %v1356
      %v1405 = vmax.f32 %v1308, %v1357
      %v1406 = vmax.f32 %v1309, %v1358
      %v1407 = vmax.f32 %v1310, %v1359
      %v1408 = vmax.f32 %v1311, %v1360
      %v1409 = vmax.f32 %v1312, %v1361
      %v1410 = vmax.f32 %v1313, %v1362
      %v1411 = vmax.f32 %v1314, %v1363
      %v1412 = vmax.f32 %v1315, %v1364
      %v1413 = vmax.f32 %v1316, %v1365
      %v1414 = vmax.f32 %v1317, %v1366
      %v1415 = vmax.f32 %v1318, %v1367
      %v1416 = vmax.f32 %v1319, %v1368
      %v1417 = vmax.f32 %v1320, %v1369
      %v1418 = vmax.f32 %v1321, %v1370
      %v1419 = vmax.f32 %v1322, %v1371
      %v1420 = vmax.f32 %v1323, %v1372
      %v1421 = vmax.f32 %v1324, %v1373
      %v1422 = vmax.f32 %v1325, %v1374
      %v1423 = vmax.f32 %v1375, %v1383
      %v1424 = vmax.f32 %v1376, %v1384
      %v1425 = vmax.f32 %v1377, %v1385
      %v1426 = vmax.f32 %v1378, %v1386
      %v1427 = vmax.f32 %v1379, %v1387
      %v1428 = vmax.f32 %v1380, %v1388
      %v1429 = vmax.f32 %v1381, %v1389
      %v1430 = vmax.f32 %v1382, %v1390
      %v1431 = vmax.f32 %v1383, %v1391
      %v1432 = vmax.f32 %v1384, %v1392
      %v1433 = vmax.f32 %v1385, %v1393
      %v1434 = vmax.f32 %v1386, %v1394
      %v1435 = vmax.f32 %v1387, %v1395
      %v1436 = vmax.f32 %v1388, %v1396
      %v1437 = vmax.f32 %v1389, %v1397
      %v1438 = vmax.f32 %v1390, %v1398
      %v1439 = vmax.f32 %v1391, %v1399
      %v1440 = vmax.f32 %v1392, %v1400
      %v1441 = vmax.f32 %v1393, %v1401
      %v1442 = vmax.f32 %v1394, %v1402
      %v1443 = vmax.f32 %v1395, %v1403
      %v1444 = vmax.f32 %v1396, %v1404
      %v1445 = vmax.f32 %v1397, %v1405
      %v1446 = vmax.f32 %v1398, %v1406
      %v1447 = vmax.f32 %v1399, %v1407
      %v1448 = vmax.f32 %v1400, %v1408
      %v1449 = vmax.f32 %v1401, %v1409
      %v1450 = vmax.f32 %v1402, %v1410
      %v1451 = vmax.f32 %v1403, %v1411
      %v1452 = vmax.f32 %v1404, %v1412
      %v1453 = vmax.f32 %v1405, %v1413
      %v1454 = vmax.f32 %v1406, %v1414
      %v1455 = vmax.f32 %v1407, %v1415
      %v1456 = vmax.f32 %v1408, %v1416
      %v1457 = vmax.f32 %v1409, %v1417
      %v1458 = vmax.f32 %v1410, %v1418
      %v1459 = vmax.f32 %v1411, %v1419
      %v1460 = vmax.f32 %v1412, %v1420
      %v1461 = vmax.f32 %v1413, %v1421
      %v1462 = vmax.f32 %v1414, %v1422
      %v1463 = vmax.f32 %v1423, %v1431
      %v1464 = vmax.f32 %v1424, %v1432
      %v1465 = vmax.f32 %v1425, %v1433
      %v1466 = vmax.f32 %v1426, %v1434
      %v1467 = vmax.f32 %v1427, %v1435
      %v1468 = vmax.f32 %v1428, %v1436
      %v1469 = vmax.f32 %v1429, %v1437
      %v1470 = vmax.f32 %v1430, %v1438
      %v1471 = vmax.f32 %v1431, %v1439
      %v1472 = vmax.f32 %v1432, %v1440
      %v1473 = vmax.f32 %v1433, %v1441
      %v1474 = vmax.f32 %v1434, %v1442
      %v1475 = vmax.f32 %v1435, %v1443
      %v1476 = vmax.f32 %v1436, %v1444
      %v1477 = vmax.f32 %v1437, %v1445
      %v1478 = vmax.f32 %v1438, %v1446
      %v1479 = vmax.f32 %v1439, %v1447
      %v1480 = vmax.f32 %v1440, %v1448
      %v1481 = vmax.f32 %v1441, %v1449
      %v1482 = vmax.f32 %v1442, %v1450
      %v1483 = vmax.f32 %v1443, %v1451
      %v1484 = vmax.f32 %v1444, %v1452
      %v1485 = vmax.f32 %v1445, %v1453
      %v1486 = vmax.f32 %v1446, %v1454
      %v1487 = vmax.f32 %v1447, %v1455
      %v1488 = vmax.f32 %v1448, %v1456
      %v1489 = vmax.f32 %v1449, %v1457
      %v1490 = vmax.f32 %v1450, %v1458
      %v1491 = vmax.f32 %v1451, %v1459
      %v1492 = vmax.f32 %v1452, %v1460
      %v1493 = vmax.f32 %v1453, %v1461
      %v1494 = vmax.f32 %v1454, %v1462
      %1495 = vst.msk [vmem:[#allocation3 + $0x8] sm:$0xff] %vm226, %v1383
      %1496 = vst.msk [vmem:[#allocation3 + $0x10] sm:$0xff] %vm226, %v1384
      %1497 = vst.msk [vmem:[#allocation3 + $0x28] sm:$0xff] %vm226, %v1385
      %1498 = vst.msk [vmem:[#allocation3 + $0x30] sm:$0xff] %vm226, %v1386
      %1499 = vst.msk [vmem:[#allocation3 + $0x48] sm:$0xff] %vm226, %v1387
      %1500 = vst.msk [vmem:[#allocation3 + $0x50] sm:$0xff] %vm226, %v1388
      %1501 = vst.msk [vmem:[#allocation3 + $0x68] sm:$0xff] %vm226, %v1389
      %1502 = vst.msk [vmem:[#allocation3 + $0x70] sm:$0xff] %vm226, %v1390
      %1503 = vst.msk [vmem:[#allocation3 + $0x88] sm:$0xff] %vm226, %v1391
      %1504 = vst.msk [vmem:[#allocation3 + $0x90] sm:$0xff] %vm226, %v1392
      %1505 = vst.msk [vmem:[#allocation3 + $0xa8] sm:$0xff] %vm226, %v1393
      %1506 = vst.msk [vmem:[#allocation3 + $0xb0] sm:$0xff] %vm226, %v1394
      %1507 = vst.msk [vmem:[#allocation3 + $0xc8] sm:$0xff] %vm226, %v1395
      %1508 = vst.msk [vmem:[#allocation3 + $0xd0] sm:$0xff] %vm226, %v1396
      %1509 = vst.msk [vmem:[#allocation3 + $0xe8] sm:$0xff] %vm226, %v1397
      %1510 = vst.msk [vmem:[#allocation3 + $0xf0] sm:$0xff] %vm226, %v1398
      %1511 = vst.msk [vmem:[#allocation3 + $0x108] sm:$0xff] %vm226, %v1399
      %1512 = vst.msk [vmem:[#allocation3 + $0x110] sm:$0xff] %vm226, %v1400
      %1513 = vst.msk [vmem:[#allocation3 + $0x128] sm:$0xff] %vm226, %v1401
      %1514 = vst.msk [vmem:[#allocation3 + $0x130] sm:$0xff] %vm226, %v1402
      %1515 = vst.msk [vmem:[#allocation3 + $0x148] sm:$0xff] %vm226, %v1403
      %1516 = vst.msk [vmem:[#allocation3 + $0x150] sm:$0xff] %vm226, %v1404
      %1517 = vst.msk [vmem:[#allocation3 + $0x168] sm:$0xff] %vm226, %v1405
      %1518 = vst.msk [vmem:[#allocation3 + $0x170] sm:$0xff] %vm226, %v1406
      %1519 = vst.msk [vmem:[#allocation3 + $0x188] sm:$0xff] %vm226, %v1407
      %1520 = vst.msk [vmem:[#allocation3 + $0x190] sm:$0xff] %vm226, %v1408
      %1521 = vst.msk [vmem:[#allocation3 + $0x1a8] sm:$0xff] %vm226, %v1409
      %1522 = vst.msk [vmem:[#allocation3 + $0x1b0] sm:$0xff] %vm226, %v1410
      %1523 = vst.msk [vmem:[#allocation3 + $0x1c8] sm:$0xff] %vm226, %v1411
      %1524 = vst.msk [vmem:[#allocation3 + $0x1d0] sm:$0xff] %vm226, %v1412
      %1525 = vst.msk [vmem:[#allocation3 + $0x1e8] sm:$0xff] %vm226, %v1413
      %1526 = vst.msk [vmem:[#allocation3 + $0x1f0] sm:$0xff] %vm226, %v1414
      %v1527 = vld [vmem:[#allocation3] sm:$0xff]
      %v1528 = vld [vmem:[#allocation3 + $0x8] sm:$0xff]
      %v1529 = vld [vmem:[#allocation3 + $0x10] sm:$0xff]
      %v1530 = vld [vmem:[#allocation3 + $0x18] sm:$0xff]
      %v1531 = vld [vmem:[#allocation3 + $0x20] sm:$0xff]
      %v1532 = vld [vmem:[#allocation3 + $0x28] sm:$0xff]
      %v1533 = vld [vmem:[#allocation3 + $0x30] sm:$0xff]
      %v1534 = vld [vmem:[#allocation3 + $0x38] sm:$0xff]
      %v1535 = vld [vmem:[#allocation3 + $0x40] sm:$0xff]
      %v1536 = vld [vmem:[#allocation3 + $0x48] sm:$0xff]
      %v1537 = vld [vmem:[#allocation3 + $0x50] sm:$0xff]
      %v1538 = vld [vmem:[#allocation3 + $0x58] sm:$0xff]
      %v1539 = vld [vmem:[#allocation3 + $0x60] sm:$0xff]
      %v1540 = vld [vmem:[#allocation3 + $0x68] sm:$0xff]
      %v1541 = vld [vmem:[#allocation3 + $0x70] sm:$0xff]
      %v1542 = vld [vmem:[#allocation3 + $0x78] sm:$0xff]
      %v1543 = vld [vmem:[#allocation3 + $0x80] sm:$0xff]
      %v1544 = vld [vmem:[#allocation3 + $0x88] sm:$0xff]
      %v1545 = vld [vmem:[#allocation3 + $0x90] sm:$0xff]
      %v1546 = vld [vmem:[#allocation3 + $0x98] sm:$0xff]
      %v1547 = vld [vmem:[#allocation3 + $0xa0] sm:$0xff]
      %v1548 = vld [vmem:[#allocation3 + $0xa8] sm:$0xff]
      %v1549 = vld [vmem:[#allocation3 + $0xb0] sm:$0xff]
      %v1550 = vld [vmem:[#allocation3 + $0xb8] sm:$0xff]
      %v1551 = vld [vmem:[#allocation3 + $0xc0] sm:$0xff]
      %v1552 = vld [vmem:[#allocation3 + $0xc8] sm:$0xff]
      %v1553 = vld [vmem:[#allocation3 + $0xd0] sm:$0xff]
      %v1554 = vld [vmem:[#allocation3 + $0xd8] sm:$0xff]
      %v1555 = vld [vmem:[#allocation3 + $0xe0] sm:$0xff]
      %v1556 = vld [vmem:[#allocation3 + $0xe8] sm:$0xff]
      %v1557 = vld [vmem:[#allocation3 + $0xf0] sm:$0xff]
      %v1558 = vld [vmem:[#allocation3 + $0xf8] sm:$0xff]
      %v1559 = vld [vmem:[#allocation3 + $0x100] sm:$0xff]
      %v1560 = vld [vmem:[#allocation3 + $0x108] sm:$0xff]
      %v1561 = vld [vmem:[#allocation3 + $0x110] sm:$0xff]
      %v1562 = vld [vmem:[#allocation3 + $0x118] sm:$0xff]
      %v1563 = vld [vmem:[#allocation3 + $0x120] sm:$0xff]
      %v1564 = vld [vmem:[#allocation3 + $0x128] sm:$0xff]
      %v1565 = vld [vmem:[#allocation3 + $0x130] sm:$0xff]
      %v1566 = vld [vmem:[#allocation3 + $0x138] sm:$0xff]
      %v1567 = vld [vmem:[#allocation3 + $0x140] sm:$0xff]
      %v1568 = vld [vmem:[#allocation3 + $0x148] sm:$0xff]
      %v1569 = vld [vmem:[#allocation3 + $0x150] sm:$0xff]
      %v1570 = vld [vmem:[#allocation3 + $0x158] sm:$0xff]
      %v1571 = vld [vmem:[#allocation3 + $0x160] sm:$0xff]
      %v1572 = vld [vmem:[#allocation3 + $0x168] sm:$0xff]
      %v1573 = vld [vmem:[#allocation3 + $0x170] sm:$0xff]
      %v1574 = vld [vmem:[#allocation3 + $0x178] sm:$0xff]
      %v1575 = vld [vmem:[#allocation3 + $0x180] sm:$0xff]
      %v1576 = vld [vmem:[#allocation3 + $0x188] sm:$0xff]
      %v1577 = vld [vmem:[#allocation3 + $0x190] sm:$0xff]
      %v1578 = vld [vmem:[#allocation3 + $0x198] sm:$0xff]
      %v1579 = vld [vmem:[#allocation3 + $0x1a0] sm:$0xff]
      %v1580 = vld [vmem:[#allocation3 + $0x1a8] sm:$0xff]
      %v1581 = vld [vmem:[#allocation3 + $0x1b0] sm:$0xff]
      %v1582 = vld [vmem:[#allocation3 + $0x1b8] sm:$0xff]
      %v1583 = vld [vmem:[#allocation3 + $0x1c0] sm:$0xff]
      %v1584 = vld [vmem:[#allocation3 + $0x1c8] sm:$0xff]
      %v1585 = vld [vmem:[#allocation3 + $0x1d0] sm:$0xff]
      %v1586 = vld [vmem:[#allocation3 + $0x1d8] sm:$0xff]
      %v1587 = vld [vmem:[#allocation3 + $0x1e0] sm:$0xff]
      %v1588 = vld [vmem:[#allocation3 + $0x1e8] sm:$0xff]
      %v1589 = vld [vmem:[#allocation3 + $0x1f0] sm:$0xff]
      %v1590 = vld [vmem:[#allocation3 + $0x1f8] sm:$0xff]
      %v1591 = vrot.slane %v1527, 7
      %v1592 = vrot.slane %v1531, 7
      %v1593 = vrot.slane %v1535, 7
      %v1594 = vrot.slane %v1539, 7
      %v1595 = vrot.slane %v1543, 7
      %v1596 = vrot.slane %v1547, 7
      %v1597 = vrot.slane %v1551, 7
      %v1598 = vrot.slane %v1555, 7
      %v1599 = vrot.slane %v1559, 7
      %v1600 = vrot.slane %v1563, 7
      %v1601 = vrot.slane %v1567, 7
      %v1602 = vrot.slane %v1571, 7
      %v1603 = vrot.slane %v1575, 7
      %v1604 = vrot.slane %v1579, 7
      %v1605 = vrot.slane %v1583, 7
      %v1606 = vrot.slane %v1587, 7
      %v1607 = vrot.slane %v1528, 7
      %v1608 = vrot.slane %v1532, 7
      %v1609 = vrot.slane %v1536, 7
      %v1610 = vrot.slane %v1540, 7
      %v1611 = vrot.slane %v1544, 7
      %v1612 = vrot.slane %v1548, 7
      %v1613 = vrot.slane %v1552, 7
      %v1614 = vrot.slane %v1556, 7
      %v1615 = vrot.slane %v1560, 7
      %v1616 = vrot.slane %v1564, 7
      %v1617 = vrot.slane %v1568, 7
      %v1618 = vrot.slane %v1572, 7
      %v1619 = vrot.slane %v1576, 7
      %v1620 = vrot.slane %v1580, 7
      %v1621 = vrot.slane %v1584, 7
      %v1622 = vrot.slane %v1588, 7
      %v1623 = vrot.slane %v1529, 7
      %v1624 = vrot.slane %v1533, 7
      %v1625 = vrot.slane %v1537, 7
      %v1626 = vrot.slane %v1541, 7
      %v1627 = vrot.slane %v1545, 7
      %v1628 = vrot.slane %v1549, 7
      %v1629 = vrot.slane %v1553, 7
      %v1630 = vrot.slane %v1557, 7
      %v1631 = vrot.slane %v1561, 7
      %v1632 = vrot.slane %v1565, 7
      %v1633 = vrot.slane %v1569, 7
      %v1634 = vrot.slane %v1573, 7
      %v1635 = vrot.slane %v1577, 7
      %v1636 = vrot.slane %v1581, 7
      %v1637 = vrot.slane %v1585, 7
      %v1638 = vrot.slane %v1589, 7
      %v1639 = vrot.slane %v1530, 7
      %v1640 = vrot.slane %v1534, 7
      %v1641 = vrot.slane %v1538, 7
      %v1642 = vrot.slane %v1542, 7
      %v1643 = vrot.slane %v1546, 7
      %v1644 = vrot.slane %v1550, 7
      %v1645 = vrot.slane %v1554, 7
      %v1646 = vrot.slane %v1558, 7
      %v1647 = vrot.slane %v1562, 7
      %v1648 = vrot.slane %v1566, 7
      %v1649 = vrot.slane %v1570, 7
      %v1650 = vrot.slane %v1574, 7
      %v1651 = vrot.slane %v1578, 7
      %v1652 = vrot.slane %v1582, 7
      %v1653 = vrot.slane %v1586, 7
      %v1654 = vrot.slane %v1590, 7
      %v1655 = vlaneseq
      %v1656 = vshrl.u32 %v1655, 7
      %vm1657 = vcmp.lt.s32.totalorder %v1656, 1
      %v1658 = vsel %vm1657, %v1623, %v1639
      %v1659 = vsel %vm1657, %v1624, %v1640
      %v1660 = vsel %vm1657, %v1625, %v1641
      %v1661 = vsel %vm1657, %v1626, %v1642
      %v1662 = vsel %vm1657, %v1627, %v1643
      %v1663 = vsel %vm1657, %v1628, %v1644
      %v1664 = vsel %vm1657, %v1629, %v1645
      %v1665 = vsel %vm1657, %v1630, %v1646
      %v1666 = vsel %vm1657, %v1631, %v1647
      %v1667 = vsel %vm1657, %v1632, %v1648
      %v1668 = vsel %vm1657, %v1633, %v1649
      %v1669 = vsel %vm1657, %v1634, %v1650
      %v1670 = vsel %vm1657, %v1635, %v1651
      %v1671 = vsel %vm1657, %v1636, %v1652
      %v1672 = vsel %vm1657, %v1637, %v1653
      %v1673 = vsel %vm1657, %v1638, %v1654
      %v1674 = vsel %vm1657, %v1607, %v1623
      %v1675 = vsel %vm1657, %v1608, %v1624
      %v1676 = vsel %vm1657, %v1609, %v1625
      %v1677 = vsel %vm1657, %v1610, %v1626
      %v1678 = vsel %vm1657, %v1611, %v1627
      %v1679 = vsel %vm1657, %v1612, %v1628
      %v1680 = vsel %vm1657, %v1613, %v1629
      %v1681 = vsel %vm1657, %v1614, %v1630
      %v1682 = vsel %vm1657, %v1615, %v1631
      %v1683 = vsel %vm1657, %v1616, %v1632
      %v1684 = vsel %vm1657, %v1617, %v1633
      %v1685 = vsel %vm1657, %v1618, %v1634
      %v1686 = vsel %vm1657, %v1619, %v1635
      %v1687 = vsel %vm1657, %v1620, %v1636
      %v1688 = vsel %vm1657, %v1621, %v1637
      %v1689 = vsel %vm1657, %v1622, %v1638
      %v1690 = vsel %vm1657, %v1591, %v1607
      %v1691 = vsel %vm1657, %v1592, %v1608
      %v1692 = vsel %vm1657, %v1593, %v1609
      %v1693 = vsel %vm1657, %v1594, %v1610
      %v1694 = vsel %vm1657, %v1595, %v1611
      %v1695 = vsel %vm1657, %v1596, %v1612
      %v1696 = vsel %vm1657, %v1597, %v1613
      %v1697 = vsel %vm1657, %v1598, %v1614
      %v1698 = vsel %vm1657, %v1599, %v1615
      %v1699 = vsel %vm1657, %v1600, %v1616
      %v1700 = vsel %vm1657, %v1601, %v1617
      %v1701 = vsel %vm1657, %v1602, %v1618
      %v1702 = vsel %vm1657, %v1603, %v1619
      %v1703 = vsel %vm1657, %v1604, %v1620
      %v1704 = vsel %vm1657, %v1605, %v1621
      %v1705 = vsel %vm1657, %v1606, %v1622
      %v1706 = vsel %vm1657, %v1639, %v1591
      %v1707 = vsel %vm1657, %v1640, %v1592
      %v1708 = vsel %vm1657, %v1641, %v1593
      %v1709 = vsel %vm1657, %v1642, %v1594
      %v1710 = vsel %vm1657, %v1643, %v1595
      %v1711 = vsel %vm1657, %v1644, %v1596
      %v1712 = vsel %vm1657, %v1645, %v1597
      %v1713 = vsel %vm1657, %v1646, %v1598
      %v1714 = vsel %vm1657, %v1647, %v1599
      %v1715 = vsel %vm1657, %v1648, %v1600
      %v1716 = vsel %vm1657, %v1649, %v1601
      %v1717 = vsel %vm1657, %v1650, %v1602
      %v1718 = vsel %vm1657, %v1651, %v1603
      %v1719 = vsel %vm1657, %v1652, %v1604
      %v1720 = vsel %vm1657, %v1653, %v1605
      %v1721 = vsel %vm1657, %v1654, %v1606
      %v1722 = vmax.f32 %v1706, %v1527
      %v1723 = vmax.f32 %v1690, %v1528
      %v1724 = vmax.f32 %v1674, %v1529
      %v1725 = vmax.f32 %v1658, %v1530
      %v1726 = vmax.f32 %v1707, %v1531
      %v1727 = vmax.f32 %v1691, %v1532
      %v1728 = vmax.f32 %v1675, %v1533
      %v1729 = vmax.f32 %v1659, %v1534
      %v1730 = vmax.f32 %v1708, %v1535
      %v1731 = vmax.f32 %v1692, %v1536
      %v1732 = vmax.f32 %v1676, %v1537
      %v1733 = vmax.f32 %v1660, %v1538
      %v1734 = vmax.f32 %v1709, %v1539
      %v1735 = vmax.f32 %v1693, %v1540
      %v1736 = vmax.f32 %v1677, %v1541
      %v1737 = vmax.f32 %v1661, %v1542
      %v1738 = vmax.f32 %v1710, %v1543
      %v1739 = vmax.f32 %v1694, %v1544
      %v1740 = vmax.f32 %v1678, %v1545
      %v1741 = vmax.f32 %v1662, %v1546
      %v1742 = vmax.f32 %v1711, %v1547
      %v1743 = vmax.f32 %v1695, %v1548
      %v1744 = vmax.f32 %v1679, %v1549
      %v1745 = vmax.f32 %v1663, %v1550
      %v1746 = vmax.f32 %v1712, %v1551
      %v1747 = vmax.f32 %v1696, %v1552
      %v1748 = vmax.f32 %v1680, %v1553
      %v1749 = vmax.f32 %v1664, %v1554
      %v1750 = vmax.f32 %v1713, %v1555
      %v1751 = vmax.f32 %v1697, %v1556
      %v1752 = vmax.f32 %v1681, %v1557
      %v1753 = vmax.f32 %v1665, %v1558
      %v1754 = vmax.f32 %v1714, %v1559
      %v1755 = vmax.f32 %v1698, %v1560
      %v1756 = vmax.f32 %v1682, %v1561
      %v1757 = vmax.f32 %v1666, %v1562
      %v1758 = vmax.f32 %v1715, %v1563
      %v1759 = vmax.f32 %v1699, %v1564
      %v1760 = vmax.f32 %v1683, %v1565
      %v1761 = vmax.f32 %v1667, %v1566
      %v1762 = vmax.f32 %v1716, %v1567
      %v1763 = vmax.f32 %v1700, %v1568
      %v1764 = vmax.f32 %v1684, %v1569
      %v1765 = vmax.f32 %v1668, %v1570
      %v1766 = vmax.f32 %v1717, %v1571
      %v1767 = vmax.f32 %v1701, %v1572
      %v1768 = vmax.f32 %v1685, %v1573
      %v1769 = vmax.f32 %v1669, %v1574
      %v1770 = vmax.f32 %v1718, %v1575
      %v1771 = vmax.f32 %v1702, %v1576
      %v1772 = vmax.f32 %v1686, %v1577
      %v1773 = vmax.f32 %v1670, %v1578
      %v1774 = vmax.f32 %v1719, %v1579
      %v1775 = vmax.f32 %v1703, %v1580
      %v1776 = vmax.f32 %v1687, %v1581
      %v1777 = vmax.f32 %v1671, %v1582
      %v1778 = vmax.f32 %v1720, %v1583
      %v1779 = vmax.f32 %v1704, %v1584
      %v1780 = vmax.f32 %v1688, %v1585
      %v1781 = vmax.f32 %v1672, %v1586
      %v1782 = vmax.f32 %v1721, %v1587
      %v1783 = vmax.f32 %v1705, %v1588
      %v1784 = vmax.f32 %v1689, %v1589
      %v1785 = vmax.f32 %v1673, %v1590
      %v1786 = vrot.slane %v1527, 1
      %v1787 = vrot.slane %v1531, 1
      %v1788 = vrot.slane %v1535, 1
      %v1789 = vrot.slane %v1539, 1
      %v1790 = vrot.slane %v1543, 1
      %v1791 = vrot.slane %v1547, 1
      %v1792 = vrot.slane %v1551, 1
      %v1793 = vrot.slane %v1555, 1
      %v1794 = vrot.slane %v1559, 1
      %v1795 = vrot.slane %v1563, 1
      %v1796 = vrot.slane %v1567, 1
      %v1797 = vrot.slane %v1571, 1
      %v1798 = vrot.slane %v1575, 1
      %v1799 = vrot.slane %v1579, 1
      %v1800 = vrot.slane %v1583, 1
      %v1801 = vrot.slane %v1587, 1
      %v1802 = vrot.slane %v1528, 1
      %v1803 = vrot.slane %v1532, 1
      %v1804 = vrot.slane %v1536, 1
      %v1805 = vrot.slane %v1540, 1
      %v1806 = vrot.slane %v1544, 1
      %v1807 = vrot.slane %v1548, 1
      %v1808 = vrot.slane %v1552, 1
      %v1809 = vrot.slane %v1556, 1
      %v1810 = vrot.slane %v1560, 1
      %v1811 = vrot.slane %v1564, 1
      %v1812 = vrot.slane %v1568, 1
      %v1813 = vrot.slane %v1572, 1
      %v1814 = vrot.slane %v1576, 1
      %v1815 = vrot.slane %v1580, 1
      %v1816 = vrot.slane %v1584, 1
      %v1817 = vrot.slane %v1588, 1
      %v1818 = vrot.slane %v1529, 1
      %v1819 = vrot.slane %v1533, 1
      %v1820 = vrot.slane %v1537, 1
      %v1821 = vrot.slane %v1541, 1
      %v1822 = vrot.slane %v1545, 1
      %v1823 = vrot.slane %v1549, 1
      %v1824 = vrot.slane %v1553, 1
      %v1825 = vrot.slane %v1557, 1
      %v1826 = vrot.slane %v1561, 1
      %v1827 = vrot.slane %v1565, 1
      %v1828 = vrot.slane %v1569, 1
      %v1829 = vrot.slane %v1573, 1
      %v1830 = vrot.slane %v1577, 1
      %v1831 = vrot.slane %v1581, 1
      %v1832 = vrot.slane %v1585, 1
      %v1833 = vrot.slane %v1589, 1
      %v1834 = vrot.slane %v1530, 1
      %v1835 = vrot.slane %v1534, 1
      %v1836 = vrot.slane %v1538, 1
      %v1837 = vrot.slane %v1542, 1
      %v1838 = vrot.slane %v1546, 1
      %v1839 = vrot.slane %v1550, 1
      %v1840 = vrot.slane %v1554, 1
      %v1841 = vrot.slane %v1558, 1
      %v1842 = vrot.slane %v1562, 1
      %v1843 = vrot.slane %v1566, 1
      %v1844 = vrot.slane %v1570, 1
      %v1845 = vrot.slane %v1574, 1
      %v1846 = vrot.slane %v1578, 1
      %v1847 = vrot.slane %v1582, 1
      %v1848 = vrot.slane %v1586, 1
      %v1849 = vrot.slane %v1590, 1
      %vm1850 = vcmp.lt.s32.totalorder %v1656, 7
      %v1851 = vsel %vm1850, %v1818, %v1834
      %v1852 = vsel %vm1850, %v1819, %v1835
      %v1853 = vsel %vm1850, %v1820, %v1836
      %v1854 = vsel %vm1850, %v1821, %v1837
      %v1855 = vsel %vm1850, %v1822, %v1838
      %v1856 = vsel %vm1850, %v1823, %v1839
      %v1857 = vsel %vm1850, %v1824, %v1840
      %v1858 = vsel %vm1850, %v1825, %v1841
      %v1859 = vsel %vm1850, %v1826, %v1842
      %v1860 = vsel %vm1850, %v1827, %v1843
      %v1861 = vsel %vm1850, %v1828, %v1844
      %v1862 = vsel %vm1850, %v1829, %v1845
      %v1863 = vsel %vm1850, %v1830, %v1846
      %v1864 = vsel %vm1850, %v1831, %v1847
      %v1865 = vsel %vm1850, %v1832, %v1848
      %v1866 = vsel %vm1850, %v1833, %v1849
      %v1867 = vsel %vm1850, %v1802, %v1818
      %v1868 = vsel %vm1850, %v1803, %v1819
      %v1869 = vsel %vm1850, %v1804, %v1820
      %v1870 = vsel %vm1850, %v1805, %v1821
      %v1871 = vsel %vm1850, %v1806, %v1822
      %v1872 = vsel %vm1850, %v1807, %v1823
      %v1873 = vsel %vm1850, %v1808, %v1824
      %v1874 = vsel %vm1850, %v1809, %v1825
      %v1875 = vsel %vm1850, %v1810, %v1826
      %v1876 = vsel %vm1850, %v1811, %v1827
      %v1877 = vsel %vm1850, %v1812, %v1828
      %v1878 = vsel %vm1850, %v1813, %v1829
      %v1879 = vsel %vm1850, %v1814, %v1830
      %v1880 = vsel %vm1850, %v1815, %v1831
      %v1881 = vsel %vm1850, %v1816, %v1832
      %v1882 = vsel %vm1850, %v1817, %v1833
      %v1883 = vsel %vm1850, %v1786, %v1802
      %v1884 = vsel %vm1850, %v1787, %v1803
      %v1885 = vsel %vm1850, %v1788, %v1804
      %v1886 = vsel %vm1850, %v1789, %v1805
      %v1887 = vsel %vm1850, %v1790, %v1806
      %v1888 = vsel %vm1850, %v1791, %v1807
      %v1889 = vsel %vm1850, %v1792, %v1808
      %v1890 = vsel %vm1850, %v1793, %v1809
      %v1891 = vsel %vm1850, %v1794, %v1810
      %v1892 = vsel %vm1850, %v1795, %v1811
      %v1893 = vsel %vm1850, %v1796, %v1812
      %v1894 = vsel %vm1850, %v1797, %v1813
      %v1895 = vsel %vm1850, %v1798, %v1814
      %v1896 = vsel %vm1850, %v1799, %v1815
      %v1897 = vsel %vm1850, %v1800, %v1816
      %v1898 = vsel %vm1850, %v1801, %v1817
      %v1899 = vsel %vm1850, %v1834, %v1786
      %v1900 = vsel %vm1850, %v1835, %v1787
      %v1901 = vsel %vm1850, %v1836, %v1788
      %v1902 = vsel %vm1850, %v1837, %v1789
      %v1903 = vsel %vm1850, %v1838, %v1790
      %v1904 = vsel %vm1850, %v1839, %v1791
      %v1905 = vsel %vm1850, %v1840, %v1792
      %v1906 = vsel %vm1850, %v1841, %v1793
      %v1907 = vsel %vm1850, %v1842, %v1794
      %v1908 = vsel %vm1850, %v1843, %v1795
      %v1909 = vsel %vm1850, %v1844, %v1796
      %v1910 = vsel %vm1850, %v1845, %v1797
      %v1911 = vsel %vm1850, %v1846, %v1798
      %v1912 = vsel %vm1850, %v1847, %v1799
      %v1913 = vsel %vm1850, %v1848, %v1800
      %v1914 = vsel %vm1850, %v1849, %v1801
      %v1915 = vmax.f32 %v1722, %v1883
      %v1916 = vmax.f32 %v1723, %v1867
      %v1917 = vmax.f32 %v1724, %v1851
      %v1918 = vmax.f32 %v1725, %v1899
      %v1919 = vmax.f32 %v1726, %v1884
      %v1920 = vmax.f32 %v1727, %v1868
      %v1921 = vmax.f32 %v1728, %v1852
      %v1922 = vmax.f32 %v1729, %v1900
      %v1923 = vmax.f32 %v1730, %v1885
      %v1924 = vmax.f32 %v1731, %v1869
      %v1925 = vmax.f32 %v1732, %v1853
      %v1926 = vmax.f32 %v1733, %v1901
      %v1927 = vmax.f32 %v1734, %v1886
      %v1928 = vmax.f32 %v1735, %v1870
      %v1929 = vmax.f32 %v1736, %v1854
      %v1930 = vmax.f32 %v1737, %v1902
      %v1931 = vmax.f32 %v1738, %v1887
      %v1932 = vmax.f32 %v1739, %v1871
      %v1933 = vmax.f32 %v1740, %v1855
      %v1934 = vmax.f32 %v1741, %v1903
      %v1935 = vmax.f32 %v1742, %v1888
      %v1936 = vmax.f32 %v1743, %v1872
      %v1937 = vmax.f32 %v1744, %v1856
      %v1938 = vmax.f32 %v1745, %v1904
      %v1939 = vmax.f32 %v1746, %v1889
      %v1940 = vmax.f32 %v1747, %v1873
      %v1941 = vmax.f32 %v1748, %v1857
      %v1942 = vmax.f32 %v1749, %v1905
      %v1943 = vmax.f32 %v1750, %v1890
      %v1944 = vmax.f32 %v1751, %v1874
      %v1945 = vmax.f32 %v1752, %v1858
      %v1946 = vmax.f32 %v1753, %v1906
      %v1947 = vmax.f32 %v1754, %v1891
      %v1948 = vmax.f32 %v1755, %v1875
      %v1949 = vmax.f32 %v1756, %v1859
      %v1950 = vmax.f32 %v1757, %v1907
      %v1951 = vmax.f32 %v1758, %v1892
      %v1952 = vmax.f32 %v1759, %v1876
      %v1953 = vmax.f32 %v1760, %v1860
      %v1954 = vmax.f32 %v1761, %v1908
      %v1955 = vmax.f32 %v1762, %v1893
      %v1956 = vmax.f32 %v1763, %v1877
      %v1957 = vmax.f32 %v1764, %v1861
      %v1958 = vmax.f32 %v1765, %v1909
      %v1959 = vmax.f32 %v1766, %v1894
      %v1960 = vmax.f32 %v1767, %v1878
      %v1961 = vmax.f32 %v1768, %v1862
      %v1962 = vmax.f32 %v1769, %v1910
      %v1963 = vmax.f32 %v1770, %v1895
      %v1964 = vmax.f32 %v1771, %v1879
      %v1965 = vmax.f32 %v1772, %v1863
      %v1966 = vmax.f32 %v1773, %v1911
      %v1967 = vmax.f32 %v1774, %v1896
      %v1968 = vmax.f32 %v1775, %v1880
      %v1969 = vmax.f32 %v1776, %v1864
      %v1970 = vmax.f32 %v1777, %v1912
      %v1971 = vmax.f32 %v1778, %v1897
      %v1972 = vmax.f32 %v1779, %v1881
      %v1973 = vmax.f32 %v1780, %v1865
      %v1974 = vmax.f32 %v1781, %v1913
      %v1975 = vmax.f32 %v1782, %v1898
      %v1976 = vmax.f32 %v1783, %v1882
      %v1977 = vmax.f32 %v1784, %v1866
      %v1978 = vmax.f32 %v1785, %v1914
      %v1979 = vrot.slane %v1915, 7
      %v1980 = vrot.slane %v1919, 7
      %v1981 = vrot.slane %v1923, 7
      %v1982 = vrot.slane %v1927, 7
      %v1983 = vrot.slane %v1931, 7
      %v1984 = vrot.slane %v1935, 7
      %v1985 = vrot.slane %v1939, 7
      %v1986 = vrot.slane %v1943, 7
      %v1987 = vrot.slane %v1947, 7
      %v1988 = vrot.slane %v1951, 7
      %v1989 = vrot.slane %v1955, 7
      %v1990 = vrot.slane %v1959, 7
      %v1991 = vrot.slane %v1963, 7
      %v1992 = vrot.slane %v1967, 7
      %v1993 = vrot.slane %v1971, 7
      %v1994 = vrot.slane %v1975, 7
      %v1995 = vrot.slane %v1916, 7
      %v1996 = vrot.slane %v1920, 7
      %v1997 = vrot.slane %v1924, 7
      %v1998 = vrot.slane %v1928, 7
      %v1999 = vrot.slane %v1932, 7
      %v2000 = vrot.slane %v1936, 7
      %v2001 = vrot.slane %v1940, 7
      %v2002 = vrot.slane %v1944, 7
      %v2003 = vrot.slane %v1948, 7
      %v2004 = vrot.slane %v1952, 7
      %v2005 = vrot.slane %v1956, 7
      %v2006 = vrot.slane %v1960, 7
      %v2007 = vrot.slane %v1964, 7
      %v2008 = vrot.slane %v1968, 7
      %v2009 = vrot.slane %v1972, 7
      %v2010 = vrot.slane %v1976, 7
      %v2011 = vrot.slane %v1917, 7
      %v2012 = vrot.slane %v1921, 7
      %v2013 = vrot.slane %v1925, 7
      %v2014 = vrot.slane %v1929, 7
      %v2015 = vrot.slane %v1933, 7
      %v2016 = vrot.slane %v1937, 7
      %v2017 = vrot.slane %v1941, 7
      %v2018 = vrot.slane %v1945, 7
      %v2019 = vrot.slane %v1949, 7
      %v2020 = vrot.slane %v1953, 7
      %v2021 = vrot.slane %v1957, 7
      %v2022 = vrot.slane %v1961, 7
      %v2023 = vrot.slane %v1965, 7
      %v2024 = vrot.slane %v1969, 7
      %v2025 = vrot.slane %v1973, 7
      %v2026 = vrot.slane %v1977, 7
      %v2027 = vsel %vm1657, %v1995, %v2011
      %v2028 = vsel %vm1657, %v1996, %v2012
      %v2029 = vsel %vm1657, %v1997, %v2013
      %v2030 = vsel %vm1657, %v1998, %v2014
      %v2031 = vsel %vm1657, %v1999, %v2015
      %v2032 = vsel %vm1657, %v2000, %v2016
      %v2033 = vsel %vm1657, %v2001, %v2017
      %v2034 = vsel %vm1657, %v2002, %v2018
      %v2035 = vsel %vm1657, %v2003, %v2019
      %v2036 = vsel %vm1657, %v2004, %v2020
      %v2037 = vsel %vm1657, %v2005, %v2021
      %v2038 = vsel %vm1657, %v2006, %v2022
      %v2039 = vsel %vm1657, %v2007, %v2023
      %v2040 = vsel %vm1657, %v2008, %v2024
      %v2041 = vsel %vm1657, %v2009, %v2025
      %v2042 = vsel %vm1657, %v2010, %v2026
      %v2043 = vsel %vm1657, %v1979, %v1995
      %v2044 = vsel %vm1657, %v1980, %v1996
      %v2045 = vsel %vm1657, %v1981, %v1997
      %v2046 = vsel %vm1657, %v1982, %v1998
      %v2047 = vsel %vm1657, %v1983, %v1999
      %v2048 = vsel %vm1657, %v1984, %v2000
      %v2049 = vsel %vm1657, %v1985, %v2001
      %v2050 = vsel %vm1657, %v1986, %v2002
      %v2051 = vsel %vm1657, %v1987, %v2003
      %v2052 = vsel %vm1657, %v1988, %v2004
      %v2053 = vsel %vm1657, %v1989, %v2005
      %v2054 = vsel %vm1657, %v1990, %v2006
      %v2055 = vsel %vm1657, %v1991, %v2007
      %v2056 = vsel %vm1657, %v1992, %v2008
      %v2057 = vsel %vm1657, %v1993, %v2009
      %v2058 = vsel %vm1657, %v1994, %v2010
      %v2059 = vrot.slane %v1916, 1
      %v2060 = vrot.slane %v1920, 1
      %v2061 = vrot.slane %v1924, 1
      %v2062 = vrot.slane %v1928, 1
      %v2063 = vrot.slane %v1932, 1
      %v2064 = vrot.slane %v1936, 1
      %v2065 = vrot.slane %v1940, 1
      %v2066 = vrot.slane %v1944, 1
      %v2067 = vrot.slane %v1948, 1
      %v2068 = vrot.slane %v1952, 1
      %v2069 = vrot.slane %v1956, 1
      %v2070 = vrot.slane %v1960, 1
      %v2071 = vrot.slane %v1964, 1
      %v2072 = vrot.slane %v1968, 1
      %v2073 = vrot.slane %v1972, 1
      %v2074 = vrot.slane %v1976, 1
      %v2075 = vrot.slane %v1917, 1
      %v2076 = vrot.slane %v1921, 1
      %v2077 = vrot.slane %v1925, 1
      %v2078 = vrot.slane %v1929, 1
      %v2079 = vrot.slane %v1933, 1
      %v2080 = vrot.slane %v1937, 1
      %v2081 = vrot.slane %v1941, 1
      %v2082 = vrot.slane %v1945, 1
      %v2083 = vrot.slane %v1949, 1
      %v2084 = vrot.slane %v1953, 1
      %v2085 = vrot.slane %v1957, 1
      %v2086 = vrot.slane %v1961, 1
      %v2087 = vrot.slane %v1965, 1
      %v2088 = vrot.slane %v1969, 1
      %v2089 = vrot.slane %v1973, 1
      %v2090 = vrot.slane %v1977, 1
      %v2091 = vrot.slane %v1918, 1
      %v2092 = vrot.slane %v1922, 1
      %v2093 = vrot.slane %v1926, 1
      %v2094 = vrot.slane %v1930, 1
      %v2095 = vrot.slane %v1934, 1
      %v2096 = vrot.slane %v1938, 1
      %v2097 = vrot.slane %v1942, 1
      %v2098 = vrot.slane %v1946, 1
      %v2099 = vrot.slane %v1950, 1
      %v2100 = vrot.slane %v1954, 1
      %v2101 = vrot.slane %v1958, 1
      %v2102 = vrot.slane %v1962, 1
      %v2103 = vrot.slane %v1966, 1
      %v2104 = vrot.slane %v1970, 1
      %v2105 = vrot.slane %v1974, 1
      %v2106 = vrot.slane %v1978, 1
      %v2107 = vsel %vm1850, %v2075, %v2091
      %v2108 = vsel %vm1850, %v2076, %v2092
      %v2109 = vsel %vm1850, %v2077, %v2093
      %v2110 = vsel %vm1850, %v2078, %v2094
      %v2111 = vsel %vm1850, %v2079, %v2095
      %v2112 = vsel %vm1850, %v2080, %v2096
      %v2113 = vsel %vm1850, %v2081, %v2097
      %v2114 = vsel %vm1850, %v2082, %v2098
      %v2115 = vsel %vm1850, %v2083, %v2099
      %v2116 = vsel %vm1850, %v2084, %v2100
      %v2117 = vsel %vm1850, %v2085, %v2101
      %v2118 = vsel %vm1850, %v2086, %v2102
      %v2119 = vsel %vm1850, %v2087, %v2103
      %v2120 = vsel %vm1850, %v2088, %v2104
      %v2121 = vsel %vm1850, %v2089, %v2105
      %v2122 = vsel %vm1850, %v2090, %v2106
      %v2123 = vsel %vm1850, %v2059, %v2075
      %v2124 = vsel %vm1850, %v2060, %v2076
      %v2125 = vsel %vm1850, %v2061, %v2077
      %v2126 = vsel %vm1850, %v2062, %v2078
      %v2127 = vsel %vm1850, %v2063, %v2079
      %v2128 = vsel %vm1850, %v2064, %v2080
      %v2129 = vsel %vm1850, %v2065, %v2081
      %v2130 = vsel %vm1850, %v2066, %v2082
      %v2131 = vsel %vm1850, %v2067, %v2083
      %v2132 = vsel %vm1850, %v2068, %v2084
      %v2133 = vsel %vm1850, %v2069, %v2085
      %v2134 = vsel %vm1850, %v2070, %v2086
      %v2135 = vsel %vm1850, %v2071, %v2087
      %v2136 = vsel %vm1850, %v2072, %v2088
      %v2137 = vsel %vm1850, %v2073, %v2089
      %v2138 = vsel %vm1850, %v2074, %v2090
      %v2139 = vmax.f32 %v2043, %v2123
      %v2140 = vmax.f32 %v2027, %v2107
      %v2141 = vmax.f32 %v2044, %v2124
      %v2142 = vmax.f32 %v2028, %v2108
      %v2143 = vmax.f32 %v2045, %v2125
      %v2144 = vmax.f32 %v2029, %v2109
      %v2145 = vmax.f32 %v2046, %v2126
      %v2146 = vmax.f32 %v2030, %v2110
      %v2147 = vmax.f32 %v2047, %v2127
      %v2148 = vmax.f32 %v2031, %v2111
      %v2149 = vmax.f32 %v2048, %v2128
      %v2150 = vmax.f32 %v2032, %v2112
      %v2151 = vmax.f32 %v2049, %v2129
      %v2152 = vmax.f32 %v2033, %v2113
      %v2153 = vmax.f32 %v2050, %v2130
      %v2154 = vmax.f32 %v2034, %v2114
      %v2155 = vmax.f32 %v2051, %v2131
      %v2156 = vmax.f32 %v2035, %v2115
      %v2157 = vmax.f32 %v2052, %v2132
      %v2158 = vmax.f32 %v2036, %v2116
      %v2159 = vmax.f32 %v2053, %v2133
      %v2160 = vmax.f32 %v2037, %v2117
      %v2161 = vmax.f32 %v2054, %v2134
      %v2162 = vmax.f32 %v2038, %v2118
      %v2163 = vmax.f32 %v2055, %v2135
      %v2164 = vmax.f32 %v2039, %v2119
      %v2165 = vmax.f32 %v2056, %v2136
      %v2166 = vmax.f32 %v2040, %v2120
      %v2167 = vmax.f32 %v2057, %v2137
      %v2168 = vmax.f32 %v2041, %v2121
      %v2169 = vmax.f32 %v2058, %v2138
      %v2170 = vmax.f32 %v2042, %v2122
      %v2171 = vpack.c.bf16 %v2140, %v2139
      %v2172 = vpack.c.bf16 %v2142, %v2141
      %v2173 = vpack.c.bf16 %v2144, %v2143
      %v2174 = vpack.c.bf16 %v2146, %v2145
      %v2175 = vpack.c.bf16 %v2148, %v2147
      %v2176 = vpack.c.bf16 %v2150, %v2149
      %v2177 = vpack.c.bf16 %v2152, %v2151
      %v2178 = vpack.c.bf16 %v2154, %v2153
      %v2179 = vpack.c.bf16 %v2156, %v2155
      %v2180 = vpack.c.bf16 %v2158, %v2157
      %v2181 = vpack.c.bf16 %v2160, %v2159
      %v2182 = vpack.c.bf16 %v2162, %v2161
      %v2183 = vpack.c.bf16 %v2164, %v2163
      %v2184 = vpack.c.bf16 %v2166, %v2165
      %v2185 = vpack.c.bf16 %v2168, %v2167
      %v2186 = vpack.c.bf16 %v2170, %v2169
      %v2188 = vsel %vm226, %v2171, 0
      %v2191 = vsel %vm226, %v2172, 0
      %v2194 = vsel %vm226, %v2173, 0
      %v2197 = vsel %vm226, %v2174, 0
      %v2200 = vsel %vm226, %v2175, 0
      %v2203 = vsel %vm226, %v2176, 0
      %v2206 = vsel %vm226, %v2177, 0
      %v2209 = vsel %vm226, %v2178, 0
      %v2212 = vsel %vm226, %v2179, 0
      %v2215 = vsel %vm226, %v2180, 0
      %v2218 = vsel %vm226, %v2181, 0
      %v2221 = vsel %vm226, %v2182, 0
      %v2224 = vsel %vm226, %v2183, 0
      %v2227 = vsel %vm226, %v2184, 0
      %v2230 = vsel %vm226, %v2185, 0
      %v2233 = vsel %vm226, %v2186, 0
      %v2236 = vsel %vm789, %v715, 0
      %2238 = vmatprep.subr.bf16.mxu0 0
      %2239 = vmatpush1.bf16.msra.mxu0 %v2236
      %2240 = vmatprep.subr.bf16.mxu0 0
      %2241 = vmatpush1.bf16.msra.mxu0 0
      %2242 = vmatprep.subr.bf16.mxu0 0
      %2243 = vmatpush1.bf16.msra.mxu0 0
      %2244 = vmatprep.subr.bf16.mxu0 0
      %2245 = vmatpush1.bf16.msra.mxu0 0
      %2246 = vmatprep.subr.bf16.mxu0 0
      %2247 = vmatpush1.bf16.msra.mxu0 0
      %2248 = vmatprep.subr.bf16.mxu0 0
      %2249 = vmatpush1.bf16.msra.mxu0 0
      %2250 = vmatprep.subr.bf16.mxu0 0
      %2251 = vmatpush1.bf16.msra.mxu0 0
      %2252 = vmatprep.subr.bf16.mxu0 0
      %2253 = vmatpush1.bf16.msra.mxu0 0
      %2254 = vmatprep.subr.bf16.mxu0 0
      %2255 = vmatpush1.bf16.msra.mxu0 0
      %2256 = vmatprep.subr.bf16.mxu0 0
      %2257 = vmatpush1.bf16.msra.mxu0 0
      %2258 = vmatprep.subr.bf16.mxu0 0
      %2259 = vmatpush1.bf16.msra.mxu0 0
      %2260 = vmatprep.subr.bf16.mxu0 0
      %2261 = vmatpush1.bf16.msra.mxu0 0
      %2262 = vmatprep.subr.bf16.mxu0 0
      %2263 = vmatpush1.bf16.msra.mxu0 0
      %2264 = vmatprep.subr.bf16.mxu0 0
      %2265 = vmatpush1.bf16.msra.mxu0 0
      %2266 = vmatprep.subr.bf16.mxu0 0
      %2267 = vmatpush1.bf16.msra.mxu0 0
      %2268 = vmatprep.subr.bf16.mxu0 0
      %2269 = vmatpush1.bf16.msra.mxu0 0
      %2270 = vmatprep.mubr.bf16.mxu0 0
      %2271 = vmatmul.mubr.bf16.gmra.mrb[0].mxu0 %v2188
      %v2272 = vpop.f32.mrb[0].mxu0
      %v2273 = vadd.f32 0.0, %v2272
      %v2274 = vpop.f32.mrb[0].mxu0
      %v2275 = vpop.f32.mrb[0].mxu0
      %v2276 = vadd.f32 0.0, %v2275
      %v2277 = vpop.f32.mrb[0].mxu0
      %2278 = vmatprep.mubr.bf16.mxu0 0
      %2279 = vmatmul.mubr.bf16.gmra.mrb[0].mxu0 %v2191
      %v2280 = vpop.f32.mrb[0].mxu0
      %v2281 = vadd.f32 0.0, %v2280
      %v2282 = vpop.f32.mrb[0].mxu0
      %v2283 = vpop.f32.mrb[0].mxu0
      %v2284 = vadd.f32 0.0, %v2283
      %v2285 = vpop.f32.mrb[0].mxu0
      %2286 = vmatprep.mubr.bf16.mxu0 0
      %2287 = vmatmul.mubr.bf16.gmra.mrb[0].mxu0 %v2194
      %v2288 = vpop.f32.mrb[0].mxu0
      %v2289 = vadd.f32 0.0, %v2288
      %v2290 = vpop.f32.mrb[0].mxu0
      %v2291 = vpop.f32.mrb[0].mxu0
      %v2292 = vadd.f32 0.0, %v2291
      %v2293 = vpop.f32.mrb[0].mxu0
      %2294 = vmatprep.mubr.bf16.mxu0 0
      %2295 = vmatmul.mubr.bf16.gmra.mrb[0].mxu0 %v2197
      %v2296 = vpop.f32.mrb[0].mxu0
      %v2297 = vadd.f32 0.0, %v2296
      %v2298 = vpop.f32.mrb[0].mxu0
      %v2299 = vpop.f32.mrb[0].mxu0
      %v2300 = vadd.f32 0.0, %v2299
      %v2301 = vpop.f32.mrb[0].mxu0
      %2302 = vmatprep.mubr.bf16.mxu0 0
      %2303 = vmatmul.mubr.bf16.gmra.mrb[0].mxu0 %v2200
      %v2304 = vpop.f32.mrb[0].mxu0
      %v2305 = vadd.f32 0.0, %v2304
      %v2306 = vpop.f32.mrb[0].mxu0
      %v2307 = vpop.f32.mrb[0].mxu0
      %v2308 = vadd.f32 0.0, %v2307
      %v2309 = vpop.f32.mrb[0].mxu0
      %2310 = vmatprep.mubr.bf16.mxu0 0
      %2311 = vmatmul.mubr.bf16.gmra.mrb[0].mxu0 %v2203
      %v2312 = vpop.f32.mrb[0].mxu0
      %v2313 = vadd.f32 0.0, %v2312
      %v2314 = vpop.f32.mrb[0].mxu0
      %v2315 = vpop.f32.mrb[0].mxu0
      %v2316 = vadd.f32 0.0, %v2315
      %v2317 = vpop.f32.mrb[0].mxu0
      %2318 = vmatprep.mubr.bf16.mxu0 0
      %2319 = vmatmul.mubr.bf16.gmra.mrb[0].mxu0 %v2206
      %v2320 = vpop.f32.mrb[0].mxu0
      %v2321 = vadd.f32 0.0, %v2320
      %v2322 = vpop.f32.mrb[0].mxu0
      %v2323 = vpop.f32.mrb[0].mxu0
      %v2324 = vadd.f32 0.0, %v2323
      %v2325 = vpop.f32.mrb[0].mxu0
      %2326 = vmatprep.mubr.bf16.mxu0 0
      %2327 = vmatmul.mubr.bf16.gmra.mrb[0].mxu0 %v2209
      %v2328 = vpop.f32.mrb[0].mxu0
      %v2329 = vadd.f32 0.0, %v2328
      %v2330 = vpop.f32.mrb[0].mxu0
      %v2331 = vpop.f32.mrb[0].mxu0
      %v2332 = vadd.f32 0.0, %v2331
      %v2333 = vpop.f32.mrb[0].mxu0
      %2334 = vmatprep.mubr.bf16.mxu0 0
      %2335 = vmatmul.mubr.bf16.gmra.mrb[0].mxu0 %v2212
      %v2336 = vpop.f32.mrb[0].mxu0
      %v2337 = vadd.f32 0.0, %v2336
      %v2338 = vpop.f32.mrb[0].mxu0
      %v2339 = vpop.f32.mrb[0].mxu0
      %v2340 = vadd.f32 0.0, %v2339
      %v2341 = vpop.f32.mrb[0].mxu0
      %2342 = vmatprep.mubr.bf16.mxu0 0
      %2343 = vmatmul.mubr.bf16.gmra.mrb[0].mxu0 %v2215
      %v2344 = vpop.f32.mrb[0].mxu0
      %v2345 = vadd.f32 0.0, %v2344
      %v2346 = vpop.f32.mrb[0].mxu0
      %v2347 = vpop.f32.mrb[0].mxu0
      %v2348 = vadd.f32 0.0, %v2347
      %v2349 = vpop.f32.mrb[0].mxu0
      %2350 = vmatprep.mubr.bf16.mxu0 0
      %2351 = vmatmul.mubr.bf16.gmra.mrb[0].mxu0 %v2218
      %v2352 = vpop.f32.mrb[0].mxu0
      %v2353 = vadd.f32 0.0, %v2352
      %v2354 = vpop.f32.mrb[0].mxu0
      %v2355 = vpop.f32.mrb[0].mxu0
      %v2356 = vadd.f32 0.0, %v2355
      %v2357 = vpop.f32.mrb[0].mxu0
      %2358 = vmatprep.mubr.bf16.mxu0 0
      %2359 = vmatmul.mubr.bf16.gmra.mrb[0].mxu0 %v2221
      %v2360 = vpop.f32.mrb[0].mxu0
      %v2361 = vadd.f32 0.0, %v2360
      %v2362 = vpop.f32.mrb[0].mxu0
      %v2363 = vpop.f32.mrb[0].mxu0
      %v2364 = vadd.f32 0.0, %v2363
      %v2365 = vpop.f32.mrb[0].mxu0
      %2366 = vmatprep.mubr.bf16.mxu0 0
      %2367 = vmatmul.mubr.bf16.gmra.mrb[0].mxu0 %v2224
      %v2368 = vpop.f32.mrb[0].mxu0
      %v2369 = vadd.f32 0.0, %v2368
      %v2370 = vpop.f32.mrb[0].mxu0
      %v2371 = vpop.f32.mrb[0].mxu0
      %v2372 = vadd.f32 0.0, %v2371
      %v2373 = vpop.f32.mrb[0].mxu0
      %2374 = vmatprep.mubr.bf16.mxu0 0
      %2375 = vmatmul.mubr.bf16.gmra.mrb[0].mxu0 %v2227
      %v2376 = vpop.f32.mrb[0].mxu0
      %v2377 = vadd.f32 0.0, %v2376
      %v2378 = vpop.f32.mrb[0].mxu0
      %v2379 = vpop.f32.mrb[0].mxu0
      %v2380 = vadd.f32 0.0, %v2379
      %v2381 = vpop.f32.mrb[0].mxu0
      %2382 = vmatprep.mubr.bf16.mxu0 0
      %2383 = vmatmul.mubr.bf16.gmra.mrb[0].mxu0 %v2230
      %v2384 = vpop.f32.mrb[0].mxu0
      %v2385 = vadd.f32 0.0, %v2384
      %v2386 = vpop.f32.mrb[0].mxu0
      %v2387 = vpop.f32.mrb[0].mxu0
      %v2388 = vadd.f32 0.0, %v2387
      %v2389 = vpop.f32.mrb[0].mxu0
      %2390 = vmatprep.mubr.bf16.mxu0 0
      %2391 = vmatmul.mubr.bf16.gmra.mrb[0].mxu0 %v2233
      %v2392 = vpop.f32.mrb[0].mxu0
      %v2393 = vadd.f32 0.0, %v2392
      %v2394 = vpop.f32.mrb[0].mxu0
      %v2395 = vpop.f32.mrb[0].mxu0
      %v2396 = vadd.f32 0.0, %v2395
      %v2397 = vpop.f32.mrb[0].mxu0
      %2398 = vdwg.mxu0
      %v2399 = vadd.f32 %v828, %v2273
      %v2400 = vadd.f32 %v831, %v2276
      %v2401 = vadd.f32 %v836, %v2281
      %v2402 = vadd.f32 %v839, %v2284
      %v2403 = vadd.f32 %v844, %v2289
      %v2404 = vadd.f32 %v847, %v2292
      %v2405 = vadd.f32 %v852, %v2297
      %v2406 = vadd.f32 %v855, %v2300
      %v2407 = vadd.f32 %v860, %v2305
      %v2408 = vadd.f32 %v863, %v2308
      %v2409 = vadd.f32 %v868, %v2313
      %v2410 = vadd.f32 %v871, %v2316
      %v2411 = vadd.f32 %v876, %v2321
      %v2412 = vadd.f32 %v879, %v2324
      %v2413 = vadd.f32 %v884, %v2329
      %v2414 = vadd.f32 %v887, %v2332
      %v2415 = vadd.f32 %v892, %v2337
      %v2416 = vadd.f32 %v895, %v2340
      %v2417 = vadd.f32 %v900, %v2345
      %v2418 = vadd.f32 %v903, %v2348
      %v2419 = vadd.f32 %v908, %v2353
      %v2420 = vadd.f32 %v911, %v2356
      %v2421 = vadd.f32 %v916, %v2361
      %v2422 = vadd.f32 %v919, %v2364
      %v2423 = vadd.f32 %v924, %v2369
      %v2424 = vadd.f32 %v927, %v2372
      %v2425 = vadd.f32 %v932, %v2377
      %v2426 = vadd.f32 %v935, %v2380
      %v2427 = vadd.f32 %v940, %v2385
      %v2428 = vadd.f32 %v943, %v2388
      %v2429 = vadd.f32 %v948, %v2393
      %v2430 = vadd.f32 %v951, %v2396
      %2431 = vst.msk [vmem:[#allocation3 + $0x8] sm:$0xff] %vm226, %v1427
      %2432 = vst.msk [vmem:[#allocation3 + $0x10] sm:$0xff] %vm226, %v1428
      %2433 = vst.msk [vmem:[#allocation3 + $0x28] sm:$0xff] %vm226, %v1429
      %2434 = vst.msk [vmem:[#allocation3 + $0x30] sm:$0xff] %vm226, %v1430
      %2435 = vst.msk [vmem:[#allocation3 + $0x48] sm:$0xff] %vm226, %v1431
      %2436 = vst.msk [vmem:[#allocation3 + $0x50] sm:$0xff] %vm226, %v1432
      %2437 = vst.msk [vmem:[#allocation3 + $0x68] sm:$0xff] %vm226, %v1433
      %2438 = vst.msk [vmem:[#allocation3 + $0x70] sm:$0xff] %vm226, %v1434
      %2439 = vst.msk [vmem:[#allocation3 + $0x88] sm:$0xff] %vm226, %v1435
      %2440 = vst.msk [vmem:[#allocation3 + $0x90] sm:$0xff] %vm226, %v1436
      %2441 = vst.msk [vmem:[#allocation3 + $0xa8] sm:$0xff] %vm226, %v1437
      %2442 = vst.msk [vmem:[#allocation3 + $0xb0] sm:$0xff] %vm226, %v1438
      %2443 = vst.msk [vmem:[#allocation3 + $0xc8] sm:$0xff] %vm226, %v1439
      %2444 = vst.msk [vmem:[#allocation3 + $0xd0] sm:$0xff] %vm226, %v1440
      %2445 = vst.msk [vmem:[#allocation3 + $0xe8] sm:$0xff] %vm226, %v1441
      %2446 = vst.msk [vmem:[#allocation3 + $0xf0] sm:$0xff] %vm226, %v1442
      %2447 = vst.msk [vmem:[#allocation3 + $0x108] sm:$0xff] %vm226, %v1443
      %2448 = vst.msk [vmem:[#allocation3 + $0x110] sm:$0xff] %vm226, %v1444
      %2449 = vst.msk [vmem:[#allocation3 + $0x128] sm:$0xff] %vm226, %v1445
      %2450 = vst.msk [vmem:[#allocation3 + $0x130] sm:$0xff] %vm226, %v1446
      %2451 = vst.msk [vmem:[#allocation3 + $0x148] sm:$0xff] %vm226, %v1447
      %2452 = vst.msk [vmem:[#allocation3 + $0x150] sm:$0xff] %vm226, %v1448
      %2453 = vst.msk [vmem:[#allocation3 + $0x168] sm:$0xff] %vm226, %v1449
      %2454 = vst.msk [vmem:[#allocation3 + $0x170] sm:$0xff] %vm226, %v1450
      %2455 = vst.msk [vmem:[#allocation3 + $0x188] sm:$0xff] %vm226, %v1451
      %2456 = vst.msk [vmem:[#allocation3 + $0x190] sm:$0xff] %vm226, %v1452
      %2457 = vst.msk [vmem:[#allocation3 + $0x1a8] sm:$0xff] %vm226, %v1453
      %2458 = vst.msk [vmem:[#allocation3 + $0x1b0] sm:$0xff] %vm226, %v1454
      %2459 = vst.msk [vmem:[#allocation3 + $0x1c8] sm:$0xff] %vm226, %v1455
      %2460 = vst.msk [vmem:[#allocation3 + $0x1d0] sm:$0xff] %vm226, %v1456
      %2461 = vst.msk [vmem:[#allocation3 + $0x1e8] sm:$0xff] %vm226, %v1457
      %2462 = vst.msk [vmem:[#allocation3 + $0x1f0] sm:$0xff] %vm226, %v1458
      %v2463 = vld [vmem:[#allocation3] sm:$0xff]
      %v2464 = vld [vmem:[#allocation3 + $0x8] sm:$0xff]
      %v2465 = vld [vmem:[#allocation3 + $0x10] sm:$0xff]
      %v2466 = vld [vmem:[#allocation3 + $0x18] sm:$0xff]
      %v2467 = vld [vmem:[#allocation3 + $0x20] sm:$0xff]
      %v2468 = vld [vmem:[#allocation3 + $0x28] sm:$0xff]
      %v2469 = vld [vmem:[#allocation3 + $0x30] sm:$0xff]
      %v2470 = vld [vmem:[#allocation3 + $0x38] sm:$0xff]
      %v2471 = vld [vmem:[#allocation3 + $0x40] sm:$0xff]
      %v2472 = vld [vmem:[#allocation3 + $0x48] sm:$0xff]
      %v2473 = vld [vmem:[#allocation3 + $0x50] sm:$0xff]
      %v2474 = vld [vmem:[#allocation3 + $0x58] sm:$0xff]
      %v2475 = vld [vmem:[#allocation3 + $0x60] sm:$0xff]
      %v2476 = vld [vmem:[#allocation3 + $0x68] sm:$0xff]
      %v2477 = vld [vmem:[#allocation3 + $0x70] sm:$0xff]
      %v2478 = vld [vmem:[#allocation3 + $0x78] sm:$0xff]
      %v2479 = vld [vmem:[#allocation3 + $0x80] sm:$0xff]
      %v2480 = vld [vmem:[#allocation3 + $0x88] sm:$0xff]
      %v2481 = vld [vmem:[#allocation3 + $0x90] sm:$0xff]
      %v2482 = vld [vmem:[#allocation3 + $0x98] sm:$0xff]
      %v2483 = vld [vmem:[#allocation3 + $0xa0] sm:$0xff]
      %v2484 = vld [vmem:[#allocation3 + $0xa8] sm:$0xff]
      %v2485 = vld [vmem:[#allocation3 + $0xb0] sm:$0xff]
      %v2486 = vld [vmem:[#allocation3 + $0xb8] sm:$0xff]
      %v2487 = vld [vmem:[#allocation3 + $0xc0] sm:$0xff]
      %v2488 = vld [vmem:[#allocation3 + $0xc8] sm:$0xff]
      %v2489 = vld [vmem:[#allocation3 + $0xd0] sm:$0xff]
      %v2490 = vld [vmem:[#allocation3 + $0xd8] sm:$0xff]
      %v2491 = vld [vmem:[#allocation3 + $0xe0] sm:$0xff]
      %v2492 = vld [vmem:[#allocation3 + $0xe8] sm:$0xff]
      %v2493 = vld [vmem:[#allocation3 + $0xf0] sm:$0xff]
      %v2494 = vld [vmem:[#allocation3 + $0xf8] sm:$0xff]
      %v2495 = vld [vmem:[#allocation3 + $0x100] sm:$0xff]
      %v2496 = vld [vmem:[#allocation3 + $0x108] sm:$0xff]
      %v2497 = vld [vmem:[#allocation3 + $0x110] sm:$0xff]
      %v2498 = vld [vmem:[#allocation3 + $0x118] sm:$0xff]
      %v2499 = vld [vmem:[#allocation3 + $0x120] sm:$0xff]
      %v2500 = vld [vmem:[#allocation3 + $0x128] sm:$0xff]
      %v2501 = vld [vmem:[#allocation3 + $0x130] sm:$0xff]
      %v2502 = vld [vmem:[#allocation3 + $0x138] sm:$0xff]
      %v2503 = vld [vmem:[#allocation3 + $0x140] sm:$0xff]
      %v2504 = vld [vmem:[#allocation3 + $0x148] sm:$0xff]
      %v2505 = vld [vmem:[#allocation3 + $0x150] sm:$0xff]
      %v2506 = vld [vmem:[#allocation3 + $0x158] sm:$0xff]
      %v2507 = vld [vmem:[#allocation3 + $0x160] sm:$0xff]
      %v2508 = vld [vmem:[#allocation3 + $0x168] sm:$0xff]
      %v2509 = vld [vmem:[#allocation3 + $0x170] sm:$0xff]
      %v2510 = vld [vmem:[#allocation3 + $0x178] sm:$0xff]
      %v2511 = vld [vmem:[#allocation3 + $0x180] sm:$0xff]
      %v2512 = vld [vmem:[#allocation3 + $0x188] sm:$0xff]
      %v2513 = vld [vmem:[#allocation3 + $0x190] sm:$0xff]
      %v2514 = vld [vmem:[#allocation3 + $0x198] sm:$0xff]
      %v2515 = vld [vmem:[#allocation3 + $0x1a0] sm:$0xff]
      %v2516 = vld [vmem:[#allocation3 + $0x1a8] sm:$0xff]
      %v2517 = vld [vmem:[#allocation3 + $0x1b0] sm:$0xff]
      %v2518 = vld [vmem:[#allocation3 + $0x1b8] sm:$0xff]
      %v2519 = vld [vmem:[#allocation3 + $0x1c0] sm:$0xff]
      %v2520 = vld [vmem:[#allocation3 + $0x1c8] sm:$0xff]
      %v2521 = vld [vmem:[#allocation3 + $0x1d0] sm:$0xff]
      %v2522 = vld [vmem:[#allocation3 + $0x1d8] sm:$0xff]
      %v2523 = vld [vmem:[#allocation3 + $0x1e0] sm:$0xff]
      %v2524 = vld [vmem:[#allocation3 + $0x1e8] sm:$0xff]
      %v2525 = vld [vmem:[#allocation3 + $0x1f0] sm:$0xff]
      %v2526 = vld [vmem:[#allocation3 + $0x1f8] sm:$0xff]
      %v2527 = vrot.slane %v2463, 7
      %v2528 = vrot.slane %v2467, 7
      %v2529 = vrot.slane %v2471, 7
      %v2530 = vrot.slane %v2475, 7
      %v2531 = vrot.slane %v2479, 7
      %v2532 = vrot.slane %v2483, 7
      %v2533 = vrot.slane %v2487, 7
      %v2534 = vrot.slane %v2491, 7
      %v2535 = vrot.slane %v2495, 7
      %v2536 = vrot.slane %v2499, 7
      %v2537 = vrot.slane %v2503, 7
      %v2538 = vrot.slane %v2507, 7
      %v2539 = vrot.slane %v2511, 7
      %v2540 = vrot.slane %v2515, 7
      %v2541 = vrot.slane %v2519, 7
      %v2542 = vrot.slane %v2523, 7
      %v2543 = vrot.slane %v2464, 7
      %v2544 = vrot.slane %v2468, 7
      %v2545 = vrot.slane %v2472, 7
      %v2546 = vrot.slane %v2476, 7
      %v2547 = vrot.slane %v2480, 7
      %v2548 = vrot.slane %v2484, 7
      %v2549 = vrot.slane %v2488, 7
      %v2550 = vrot.slane %v2492, 7
      %v2551 = vrot.slane %v2496, 7
      %v2552 = vrot.slane %v2500, 7
      %v2553 = vrot.slane %v2504, 7
      %v2554 = vrot.slane %v2508, 7
      %v2555 = vrot.slane %v2512, 7
      %v2556 = vrot.slane %v2516, 7
      %v2557 = vrot.slane %v2520, 7
      %v2558 = vrot.slane %v2524, 7
      %v2559 = vrot.slane %v2465, 7
      %v2560 = vrot.slane %v2469, 7
      %v2561 = vrot.slane %v2473, 7
      %v2562 = vrot.slane %v2477, 7
      %v2563 = vrot.slane %v2481, 7
      %v2564 = vrot.slane %v2485, 7
      %v2565 = vrot.slane %v2489, 7
      %v2566 = vrot.slane %v2493, 7
      %v2567 = vrot.slane %v2497, 7
      %v2568 = vrot.slane %v2501, 7
      %v2569 = vrot.slane %v2505, 7
      %v2570 = vrot.slane %v2509, 7
      %v2571 = vrot.slane %v2513, 7
      %v2572 = vrot.slane %v2517, 7
      %v2573 = vrot.slane %v2521, 7
      %v2574 = vrot.slane %v2525, 7
      %v2575 = vrot.slane %v2466, 7
      %v2576 = vrot.slane %v2470, 7
      %v2577 = vrot.slane %v2474, 7
      %v2578 = vrot.slane %v2478, 7
      %v2579 = vrot.slane %v2482, 7
      %v2580 = vrot.slane %v2486, 7
      %v2581 = vrot.slane %v2490, 7
      %v2582 = vrot.slane %v2494, 7
      %v2583 = vrot.slane %v2498, 7
      %v2584 = vrot.slane %v2502, 7
      %v2585 = vrot.slane %v2506, 7
      %v2586 = vrot.slane %v2510, 7
      %v2587 = vrot.slane %v2514, 7
      %v2588 = vrot.slane %v2518, 7
      %v2589 = vrot.slane %v2522, 7
      %v2590 = vrot.slane %v2526, 7
      %v2591 = vsel %vm1657, %v2559, %v2575
      %v2592 = vsel %vm1657, %v2560, %v2576
      %v2593 = vsel %vm1657, %v2561, %v2577
      %v2594 = vsel %vm1657, %v2562, %v2578
      %v2595 = vsel %vm1657, %v2563, %v2579
      %v2596 = vsel %vm1657, %v2564, %v2580
      %v2597 = vsel %vm1657, %v2565, %v2581
      %v2598 = vsel %vm1657, %v2566, %v2582
      %v2599 = vsel %vm1657, %v2567, %v2583
      %v2600 = vsel %vm1657, %v2568, %v2584
      %v2601 = vsel %vm1657, %v2569, %v2585
      %v2602 = vsel %vm1657, %v2570, %v2586
      %v2603 = vsel %vm1657, %v2571, %v2587
      %v2604 = vsel %vm1657, %v2572, %v2588
      %v2605 = vsel %vm1657, %v2573, %v2589
      %v2606 = vsel %vm1657, %v2574, %v2590
      %v2607 = vsel %vm1657, %v2543, %v2559
      %v2608 = vsel %vm1657, %v2544, %v2560
      %v2609 = vsel %vm1657, %v2545, %v2561
      %v2610 = vsel %vm1657, %v2546, %v2562
      %v2611 = vsel %vm1657, %v2547, %v2563
      %v2612 = vsel %vm1657, %v2548, %v2564
      %v2613 = vsel %vm1657, %v2549, %v2565
      %v2614 = vsel %vm1657, %v2550, %v2566
      %v2615 = vsel %vm1657, %v2551, %v2567
      %v2616 = vsel %vm1657, %v2552, %v2568
      %v2617 = vsel %vm1657, %v2553, %v2569
      %v2618 = vsel %vm1657, %v2554, %v2570
      %v2619 = vsel %vm1657, %v2555, %v2571
      %v2620 = vsel %vm1657, %v2556, %v2572
      %v2621 = vsel %vm1657, %v2557, %v2573
      %v2622 = vsel %vm1657, %v2558, %v2574
      %v2623 = vsel %vm1657, %v2527, %v2543
      %v2624 = vsel %vm1657, %v2528, %v2544
      %v2625 = vsel %vm1657, %v2529, %v2545
      %v2626 = vsel %vm1657, %v2530, %v2546
      %v2627 = vsel %vm1657, %v2531, %v2547
      %v2628 = vsel %vm1657, %v2532, %v2548
      %v2629 = vsel %vm1657, %v2533, %v2549
      %v2630 = vsel %vm1657, %v2534, %v2550
      %v2631 = vsel %vm1657, %v2535, %v2551
      %v2632 = vsel %vm1657, %v2536, %v2552
      %v2633 = vsel %vm1657, %v2537, %v2553
      %v2634 = vsel %vm1657, %v2538, %v2554
      %v2635 = vsel %vm1657, %v2539, %v2555
      %v2636 = vsel %vm1657, %v2540, %v2556
      %v2637 = vsel %vm1657, %v2541, %v2557
      %v2638 = vsel %vm1657, %v2542, %v2558
      %v2639 = vsel %vm1657, %v2575, %v2527
      %v2640 = vsel %vm1657, %v2576, %v2528
      %v2641 = vsel %vm1657, %v2577, %v2529
      %v2642 = vsel %vm1657, %v2578, %v2530
      %v2643 = vsel %vm1657, %v2579, %v2531
      %v2644 = vsel %vm1657, %v2580, %v2532
      %v2645 = vsel %vm1657, %v2581, %v2533
      %v2646 = vsel %vm1657, %v2582, %v2534
      %v2647 = vsel %vm1657, %v2583, %v2535
      %v2648 = vsel %vm1657, %v2584, %v2536
      %v2649 = vsel %vm1657, %v2585, %v2537
      %v2650 = vsel %vm1657, %v2586, %v2538
      %v2651 = vsel %vm1657, %v2587, %v2539
      %v2652 = vsel %vm1657, %v2588, %v2540
      %v2653 = vsel %vm1657, %v2589, %v2541
      %v2654 = vsel %vm1657, %v2590, %v2542
      %v2655 = vmax.f32 %v2639, %v2463
      %v2656 = vmax.f32 %v2623, %v2464
      %v2657 = vmax.f32 %v2607, %v2465
      %v2658 = vmax.f32 %v2591, %v2466
      %v2659 = vmax.f32 %v2640, %v2467
      %v2660 = vmax.f32 %v2624, %v2468
      %v2661 = vmax.f32 %v2608, %v2469
      %v2662 = vmax.f32 %v2592, %v2470
      %v2663 = vmax.f32 %v2641, %v2471
      %v2664 = vmax.f32 %v2625, %v2472
      %v2665 = vmax.f32 %v2609, %v2473
      %v2666 = vmax.f32 %v2593, %v2474
      %v2667 = vmax.f32 %v2642, %v2475
      %v2668 = vmax.f32 %v2626, %v2476
      %v2669 = vmax.f32 %v2610, %v2477
      %v2670 = vmax.f32 %v2594, %v2478
      %v2671 = vmax.f32 %v2643, %v2479
      %v2672 = vmax.f32 %v2627, %v2480
      %v2673 = vmax.f32 %v2611, %v2481
      %v2674 = vmax.f32 %v2595, %v2482
      %v2675 = vmax.f32 %v2644, %v2483
      %v2676 = vmax.f32 %v2628, %v2484
      %v2677 = vmax.f32 %v2612, %v2485
      %v2678 = vmax.f32 %v2596, %v2486
      %v2679 = vmax.f32 %v2645, %v2487
      %v2680 = vmax.f32 %v2629, %v2488
      %v2681 = vmax.f32 %v2613, %v2489
      %v2682 = vmax.f32 %v2597, %v2490
      %v2683 = vmax.f32 %v2646, %v2491
      %v2684 = vmax.f32 %v2630, %v2492
      %v2685 = vmax.f32 %v2614, %v2493
      %v2686 = vmax.f32 %v2598, %v2494
      %v2687 = vmax.f32 %v2647, %v2495
      %v2688 = vmax.f32 %v2631, %v2496
      %v2689 = vmax.f32 %v2615, %v2497
      %v2690 = vmax.f32 %v2599, %v2498
      %v2691 = vmax.f32 %v2648, %v2499
      %v2692 = vmax.f32 %v2632, %v2500
      %v2693 = vmax.f32 %v2616, %v2501
      %v2694 = vmax.f32 %v2600, %v2502
      %v2695 = vmax.f32 %v2649, %v2503
      %v2696 = vmax.f32 %v2633, %v2504
      %v2697 = vmax.f32 %v2617, %v2505
      %v2698 = vmax.f32 %v2601, %v2506
      %v2699 = vmax.f32 %v2650, %v2507
      %v2700 = vmax.f32 %v2634, %v2508
      %v2701 = vmax.f32 %v2618, %v2509
      %v2702 = vmax.f32 %v2602, %v2510
      %v2703 = vmax.f32 %v2651, %v2511
      %v2704 = vmax.f32 %v2635, %v2512
      %v2705 = vmax.f32 %v2619, %v2513
      %v2706 = vmax.f32 %v2603, %v2514
      %v2707 = vmax.f32 %v2652, %v2515
      %v2708 = vmax.f32 %v2636, %v2516
      %v2709 = vmax.f32 %v2620, %v2517
      %v2710 = vmax.f32 %v2604, %v2518
      %v2711 = vmax.f32 %v2653, %v2519
      %v2712 = vmax.f32 %v2637, %v2520
      %v2713 = vmax.f32 %v2621, %v2521
      %v2714 = vmax.f32 %v2605, %v2522
      %v2715 = vmax.f32 %v2654, %v2523
      %v2716 = vmax.f32 %v2638, %v2524
      %v2717 = vmax.f32 %v2622, %v2525
      %v2718 = vmax.f32 %v2606, %v2526
      %v2719 = vrot.slane %v2463, 1
      %v2720 = vrot.slane %v2467, 1
      %v2721 = vrot.slane %v2471, 1
      %v2722 = vrot.slane %v2475, 1
      %v2723 = vrot.slane %v2479, 1
      %v2724 = vrot.slane %v2483, 1
      %v2725 = vrot.slane %v2487, 1
      %v2726 = vrot.slane %v2491, 1
      %v2727 = vrot.slane %v2495, 1
      %v2728 = vrot.slane %v2499, 1
      %v2729 = vrot.slane %v2503, 1
      %v2730 = vrot.slane %v2507, 1
      %v2731 = vrot.slane %v2511, 1
      %v2732 = vrot.slane %v2515, 1
      %v2733 = vrot.slane %v2519, 1
      %v2734 = vrot.slane %v2523, 1
      %v2735 = vrot.slane %v2464, 1
      %v2736 = vrot.slane %v2468, 1
      %v2737 = vrot.slane %v2472, 1
      %v2738 = vrot.slane %v2476, 1
      %v2739 = vrot.slane %v2480, 1
      %v2740 = vrot.slane %v2484, 1
      %v2741 = vrot.slane %v2488, 1
      %v2742 = vrot.slane %v2492, 1
      %v2743 = vrot.slane %v2496, 1
      %v2744 = vrot.slane %v2500, 1
      %v2745 = vrot.slane %v2504, 1
      %v2746 = vrot.slane %v2508, 1
      %v2747 = vrot.slane %v2512, 1
      %v2748 = vrot.slane %v2516, 1
      %v2749 = vrot.slane %v2520, 1
      %v2750 = vrot.slane %v2524, 1
      %v2751 = vrot.slane %v2465, 1
      %v2752 = vrot.slane %v2469, 1
      %v2753 = vrot.slane %v2473, 1
      %v2754 = vrot.slane %v2477, 1
      %v2755 = vrot.slane %v2481, 1
      %v2756 = vrot.slane %v2485, 1
      %v2757 = vrot.slane %v2489, 1
      %v2758 = vrot.slane %v2493, 1
      %v2759 = vrot.slane %v2497, 1
      %v2760 = vrot.slane %v2501, 1
      %v2761 = vrot.slane %v2505, 1
      %v2762 = vrot.slane %v2509, 1
      %v2763 = vrot.slane %v2513, 1
      %v2764 = vrot.slane %v2517, 1
      %v2765 = vrot.slane %v2521, 1
      %v2766 = vrot.slane %v2525, 1
      %v2767 = vrot.slane %v2466, 1
      %v2768 = vrot.slane %v2470, 1
      %v2769 = vrot.slane %v2474, 1
      %v2770 = vrot.slane %v2478, 1
      %v2771 = vrot.slane %v2482, 1
      %v2772 = vrot.slane %v2486, 1
      %v2773 = vrot.slane %v2490, 1
      %v2774 = vrot.slane %v2494, 1
      %v2775 = vrot.slane %v2498, 1
      %v2776 = vrot.slane %v2502, 1
      %v2777 = vrot.slane %v2506, 1
      %v2778 = vrot.slane %v2510, 1
      %v2779 = vrot.slane %v2514, 1
      %v2780 = vrot.slane %v2518, 1
      %v2781 = vrot.slane %v2522, 1
      %v2782 = vrot.slane %v2526, 1
      %v2783 = vsel %vm1850, %v2751, %v2767
      %v2784 = vsel %vm1850, %v2752, %v2768
      %v2785 = vsel %vm1850, %v2753, %v2769
      %v2786 = vsel %vm1850, %v2754, %v2770
      %v2787 = vsel %vm1850, %v2755, %v2771
      %v2788 = vsel %vm1850, %v2756, %v2772
      %v2789 = vsel %vm1850, %v2757, %v2773
      %v2790 = vsel %vm1850, %v2758, %v2774
      %v2791 = vsel %vm1850, %v2759, %v2775
      %v2792 = vsel %vm1850, %v2760, %v2776
      %v2793 = vsel %vm1850, %v2761, %v2777
      %v2794 = vsel %vm1850, %v2762, %v2778
      %v2795 = vsel %vm1850, %v2763, %v2779
      %v2796 = vsel %vm1850, %v2764, %v2780
      %v2797 = vsel %vm1850, %v2765, %v2781
      %v2798 = vsel %vm1850, %v2766, %v2782
      %v2799 = vsel %vm1850, %v2735, %v2751
      %v2800 = vsel %vm1850, %v2736, %v2752
      %v2801 = vsel %vm1850, %v2737, %v2753
      %v2802 = vsel %vm1850, %v2738, %v2754
      %v2803 = vsel %vm1850, %v2739, %v2755
      %v2804 = vsel %vm1850, %v2740, %v2756
      %v2805 = vsel %vm1850, %v2741, %v2757
      %v2806 = vsel %vm1850, %v2742, %v2758
      %v2807 = vsel %vm1850, %v2743, %v2759
      %v2808 = vsel %vm1850, %v2744, %v2760
      %v2809 = vsel %vm1850, %v2745, %v2761
      %v2810 = vsel %vm1850, %v2746, %v2762
      %v2811 = vsel %vm1850, %v2747, %v2763
      %v2812 = vsel %vm1850, %v2748, %v2764
      %v2813 = vsel %vm1850, %v2749, %v2765
      %v2814 = vsel %vm1850, %v2750, %v2766
      %v2815 = vsel %vm1850, %v2719, %v2735
      %v2816 = vsel %vm1850, %v2720, %v2736
      %v2817 = vsel %vm1850, %v2721, %v2737
      %v2818 = vsel %vm1850, %v2722, %v2738
      %v2819 = vsel %vm1850, %v2723, %v2739
      %v2820 = vsel %vm1850, %v2724, %v2740
      %v2821 = vsel %vm1850, %v2725, %v2741
      %v2822 = vsel %vm1850, %v2726, %v2742
      %v2823 = vsel %vm1850, %v2727, %v2743
      %v2824 = vsel %vm1850, %v2728, %v2744
      %v2825 = vsel %vm1850, %v2729, %v2745
      %v2826 = vsel %vm1850, %v2730, %v2746
      %v2827 = vsel %vm1850, %v2731, %v2747
      %v2828 = vsel %vm1850, %v2732, %v2748
      %v2829 = vsel %vm1850, %v2733, %v2749
      %v2830 = vsel %vm1850, %v2734, %v2750
      %v2831 = vsel %vm1850, %v2767, %v2719
      %v2832 = vsel %vm1850, %v2768, %v2720
      %v2833 = vsel %vm1850, %v2769, %v2721
      %v2834 = vsel %vm1850, %v2770, %v2722
      %v2835 = vsel %vm1850, %v2771, %v2723
      %v2836 = vsel %vm1850, %v2772, %v2724
      %v2837 = vsel %vm1850, %v2773, %v2725
      %v2838 = vsel %vm1850, %v2774, %v2726
      %v2839 = vsel %vm1850, %v2775, %v2727
      %v2840 = vsel %vm1850, %v2776, %v2728
      %v2841 = vsel %vm1850, %v2777, %v2729
      %v2842 = vsel %vm1850, %v2778, %v2730
      %v2843 = vsel %vm1850, %v2779, %v2731
      %v2844 = vsel %vm1850, %v2780, %v2732
      %v2845 = vsel %vm1850, %v2781, %v2733
      %v2846 = vsel %vm1850, %v2782, %v2734
      %v2847 = vmax.f32 %v2655, %v2815
      %v2848 = vmax.f32 %v2656, %v2799
      %v2849 = vmax.f32 %v2657, %v2783
      %v2850 = vmax.f32 %v2658, %v2831
      %v2851 = vmax.f32 %v2659, %v2816
      %v2852 = vmax.f32 %v2660, %v2800
      %v2853 = vmax.f32 %v2661, %v2784
      %v2854 = vmax.f32 %v2662, %v2832
      %v2855 = vmax.f32 %v2663, %v2817
      %v2856 = vmax.f32 %v2664, %v2801
      %v2857 = vmax.f32 %v2665, %v2785
      %v2858 = vmax.f32 %v2666, %v2833
      %v2859 = vmax.f32 %v2667, %v2818
      %v2860 = vmax.f32 %v2668, %v2802
      %v2861 = vmax.f32 %v2669, %v2786
      %v2862 = vmax.f32 %v2670, %v2834
      %v2863 = vmax.f32 %v2671, %v2819
      %v2864 = vmax.f32 %v2672, %v2803
      %v2865 = vmax.f32 %v2673, %v2787
      %v2866 = vmax.f32 %v2674, %v2835
      %v2867 = vmax.f32 %v2675, %v2820
      %v2868 = vmax.f32 %v2676, %v2804
      %v2869 = vmax.f32 %v2677, %v2788
      %v2870 = vmax.f32 %v2678, %v2836
      %v2871 = vmax.f32 %v2679, %v2821
      %v2872 = vmax.f32 %v2680, %v2805
      %v2873 = vmax.f32 %v2681, %v2789
      %v2874 = vmax.f32 %v2682, %v2837
      %v2875 = vmax.f32 %v2683, %v2822
      %v2876 = vmax.f32 %v2684, %v2806
      %v2877 = vmax.f32 %v2685, %v2790
      %v2878 = vmax.f32 %v2686, %v2838
      %v2879 = vmax.f32 %v2687, %v2823
      %v2880 = vmax.f32 %v2688, %v2807
      %v2881 = vmax.f32 %v2689, %v2791
      %v2882 = vmax.f32 %v2690, %v2839
      %v2883 = vmax.f32 %v2691, %v2824
      %v2884 = vmax.f32 %v2692, %v2808
      %v2885 = vmax.f32 %v2693, %v2792
      %v2886 = vmax.f32 %v2694, %v2840
      %v2887 = vmax.f32 %v2695, %v2825
      %v2888 = vmax.f32 %v2696, %v2809
      %v2889 = vmax.f32 %v2697, %v2793
      %v2890 = vmax.f32 %v2698, %v2841
      %v2891 = vmax.f32 %v2699, %v2826
      %v2892 = vmax.f32 %v2700, %v2810
      %v2893 = vmax.f32 %v2701, %v2794
      %v2894 = vmax.f32 %v2702, %v2842
      %v2895 = vmax.f32 %v2703, %v2827
      %v2896 = vmax.f32 %v2704, %v2811
      %v2897 = vmax.f32 %v2705, %v2795
      %v2898 = vmax.f32 %v2706, %v2843
      %v2899 = vmax.f32 %v2707, %v2828
      %v2900 = vmax.f32 %v2708, %v2812
      %v2901 = vmax.f32 %v2709, %v2796
      %v2902 = vmax.f32 %v2710, %v2844
      %v2903 = vmax.f32 %v2711, %v2829
      %v2904 = vmax.f32 %v2712, %v2813
      %v2905 = vmax.f32 %v2713, %v2797
      %v2906 = vmax.f32 %v2714, %v2845
      %v2907 = vmax.f32 %v2715, %v2830
      %v2908 = vmax.f32 %v2716, %v2814
      %v2909 = vmax.f32 %v2717, %v2798
      %v2910 = vmax.f32 %v2718, %v2846
      %v2911 = vrot.slane %v2847, 7
      %v2912 = vrot.slane %v2851, 7
      %v2913 = vrot.slane %v2855, 7
      %v2914 = vrot.slane %v2859, 7
      %v2915 = vrot.slane %v2863, 7
      %v2916 = vrot.slane %v2867, 7
      %v2917 = vrot.slane %v2871, 7
      %v2918 = vrot.slane %v2875, 7
      %v2919 = vrot.slane %v2879, 7
      %v2920 = vrot.slane %v2883, 7
      %v2921 = vrot.slane %v2887, 7
      %v2922 = vrot.slane %v2891, 7
      %v2923 = vrot.slane %v2895, 7
      %v2924 = vrot.slane %v2899, 7
      %v2925 = vrot.slane %v2903, 7
      %v2926 = vrot.slane %v2907, 7
      %v2927 = vrot.slane %v2848, 7
      %v2928 = vrot.slane %v2852, 7
      %v2929 = vrot.slane %v2856, 7
      %v2930 = vrot.slane %v2860, 7
      %v2931 = vrot.slane %v2864, 7
      %v2932 = vrot.slane %v2868, 7
      %v2933 = vrot.slane %v2872, 7
      %v2934 = vrot.slane %v2876, 7
      %v2935 = vrot.slane %v2880, 7
      %v2936 = vrot.slane %v2884, 7
      %v2937 = vrot.slane %v2888, 7
      %v2938 = vrot.slane %v2892, 7
      %v2939 = vrot.slane %v2896, 7
      %v2940 = vrot.slane %v2900, 7
      %v2941 = vrot.slane %v2904, 7
      %v2942 = vrot.slane %v2908, 7
      %v2943 = vrot.slane %v2849, 7
      %v2944 = vrot.slane %v2853, 7
      %v2945 = vrot.slane %v2857, 7
      %v2946 = vrot.slane %v2861, 7
      %v2947 = vrot.slane %v2865, 7
      %v2948 = vrot.slane %v2869, 7
      %v2949 = vrot.slane %v2873, 7
      %v2950 = vrot.slane %v2877, 7
      %v2951 = vrot.slane %v2881, 7
      %v2952 = vrot.slane %v2885, 7
      %v2953 = vrot.slane %v2889, 7
      %v2954 = vrot.slane %v2893, 7
      %v2955 = vrot.slane %v2897, 7
      %v2956 = vrot.slane %v2901, 7
      %v2957 = vrot.slane %v2905, 7
      %v2958 = vrot.slane %v2909, 7
      %v2959 = vrot.slane %v2850, 7
      %v2960 = vrot.slane %v2854, 7
      %v2961 = vrot.slane %v2858, 7
      %v2962 = vrot.slane %v2862, 7
      %v2963 = vrot.slane %v2866, 7
      %v2964 = vrot.slane %v2870, 7
      %v2965 = vrot.slane %v2874, 7
      %v2966 = vrot.slane %v2878, 7
      %v2967 = vrot.slane %v2882, 7
      %v2968 = vrot.slane %v2886, 7
      %v2969 = vrot.slane %v2890, 7
      %v2970 = vrot.slane %v2894, 7
      %v2971 = vrot.slane %v2898, 7
      %v2972 = vrot.slane %v2902, 7
      %v2973 = vrot.slane %v2906, 7
      %v2974 = vrot.slane %v2910, 7
      %v2975 = vsel %vm1657, %v2943, %v2959
      %v2976 = vsel %vm1657, %v2944, %v2960
      %v2977 = vsel %vm1657, %v2945, %v2961
      %v2978 = vsel %vm1657, %v2946, %v2962
      %v2979 = vsel %vm1657, %v2947, %v2963
      %v2980 = vsel %vm1657, %v2948, %v2964
      %v2981 = vsel %vm1657, %v2949, %v2965
      %v2982 = vsel %vm1657, %v2950, %v2966
      %v2983 = vsel %vm1657, %v2951, %v2967
      %v2984 = vsel %vm1657, %v2952, %v2968
      %v2985 = vsel %vm1657, %v2953, %v2969
      %v2986 = vsel %vm1657, %v2954, %v2970
      %v2987 = vsel %vm1657, %v2955, %v2971
      %v2988 = vsel %vm1657, %v2956, %v2972
      %v2989 = vsel %vm1657, %v2957, %v2973
      %v2990 = vsel %vm1657, %v2958, %v2974
      %v2991 = vsel %vm1657, %v2927, %v2943
      %v2992 = vsel %vm1657, %v2928, %v2944
      %v2993 = vsel %vm1657, %v2929, %v2945
      %v2994 = vsel %vm1657, %v2930, %v2946
      %v2995 = vsel %vm1657, %v2931, %v2947
      %v2996 = vsel %vm1657, %v2932, %v2948
      %v2997 = vsel %vm1657, %v2933, %v2949
      %v2998 = vsel %vm1657, %v2934, %v2950
      %v2999 = vsel %vm1657, %v2935, %v2951
      %v3000 = vsel %vm1657, %v2936, %v2952
      %v3001 = vsel %vm1657, %v2937, %v2953
      %v3002 = vsel %vm1657, %v2938, %v2954
      %v3003 = vsel %vm1657, %v2939, %v2955
      %v3004 = vsel %vm1657, %v2940, %v2956
      %v3005 = vsel %vm1657, %v2941, %v2957
      %v3006 = vsel %vm1657, %v2942, %v2958
      %v3007 = vsel %vm1657, %v2911, %v2927
      %v3008 = vsel %vm1657, %v2912, %v2928
      %v3009 = vsel %vm1657, %v2913, %v2929
      %v3010 = vsel %vm1657, %v2914, %v2930
      %v3011 = vsel %vm1657, %v2915, %v2931
      %v3012 = vsel %vm1657, %v2916, %v2932
      %v3013 = vsel %vm1657, %v2917, %v2933
      %v3014 = vsel %vm1657, %v2918, %v2934
      %v3015 = vsel %vm1657, %v2919, %v2935
      %v3016 = vsel %vm1657, %v2920, %v2936
      %v3017 = vsel %vm1657, %v2921, %v2937
      %v3018 = vsel %vm1657, %v2922, %v2938
      %v3019 = vsel %vm1657, %v2923, %v2939
      %v3020 = vsel %vm1657, %v2924, %v2940
      %v3021 = vsel %vm1657, %v2925, %v2941
      %v3022 = vsel %vm1657, %v2926, %v2942
      %v3023 = vsel %vm1657, %v2959, %v2911
      %v3024 = vsel %vm1657, %v2960, %v2912
      %v3025 = vsel %vm1657, %v2961, %v2913
      %v3026 = vsel %vm1657, %v2962, %v2914
      %v3027 = vsel %vm1657, %v2963, %v2915
      %v3028 = vsel %vm1657, %v2964, %v2916
      %v3029 = vsel %vm1657, %v2965, %v2917
      %v3030 = vsel %vm1657, %v2966, %v2918
      %v3031 = vsel %vm1657, %v2967, %v2919
      %v3032 = vsel %vm1657, %v2968, %v2920
      %v3033 = vsel %vm1657, %v2969, %v2921
      %v3034 = vsel %vm1657, %v2970, %v2922
      %v3035 = vsel %vm1657, %v2971, %v2923
      %v3036 = vsel %vm1657, %v2972, %v2924
      %v3037 = vsel %vm1657, %v2973, %v2925
      %v3038 = vsel %vm1657, %v2974, %v2926
      %v3039 = vrot.slane %v2847, 1
      %v3040 = vrot.slane %v2851, 1
      %v3041 = vrot.slane %v2855, 1
      %v3042 = vrot.slane %v2859, 1
      %v3043 = vrot.slane %v2863, 1
      %v3044 = vrot.slane %v2867, 1
      %v3045 = vrot.slane %v2871, 1
      %v3046 = vrot.slane %v2875, 1
      %v3047 = vrot.slane %v2879, 1
      %v3048 = vrot.slane %v2883, 1
      %v3049 = vrot.slane %v2887, 1
      %v3050 = vrot.slane %v2891, 1
      %v3051 = vrot.slane %v2895, 1
      %v3052 = vrot.slane %v2899, 1
      %v3053 = vrot.slane %v2903, 1
      %v3054 = vrot.slane %v2907, 1
      %v3055 = vrot.slane %v2848, 1
      %v3056 = vrot.slane %v2852, 1
      %v3057 = vrot.slane %v2856, 1
      %v3058 = vrot.slane %v2860, 1
      %v3059 = vrot.slane %v2864, 1
      %v3060 = vrot.slane %v2868, 1
      %v3061 = vrot.slane %v2872, 1
      %v3062 = vrot.slane %v2876, 1
      %v3063 = vrot.slane %v2880, 1
      %v3064 = vrot.slane %v2884, 1
      %v3065 = vrot.slane %v2888, 1
      %v3066 = vrot.slane %v2892, 1
      %v3067 = vrot.slane %v2896, 1
      %v3068 = vrot.slane %v2900, 1
      %v3069 = vrot.slane %v2904, 1
      %v3070 = vrot.slane %v2908, 1
      %v3071 = vrot.slane %v2849, 1
      %v3072 = vrot.slane %v2853, 1
      %v3073 = vrot.slane %v2857, 1
      %v3074 = vrot.slane %v2861, 1
      %v3075 = vrot.slane %v2865, 1
      %v3076 = vrot.slane %v2869, 1
      %v3077 = vrot.slane %v2873, 1
      %v3078 = vrot.slane %v2877, 1
      %v3079 = vrot.slane %v2881, 1
      %v3080 = vrot.slane %v2885, 1
      %v3081 = vrot.slane %v2889, 1
      %v3082 = vrot.slane %v2893, 1
      %v3083 = vrot.slane %v2897, 1
      %v3084 = vrot.slane %v2901, 1
      %v3085 = vrot.slane %v2905, 1
      %v3086 = vrot.slane %v2909, 1
      %v3087 = vrot.slane %v2850, 1
      %v3088 = vrot.slane %v2854, 1
      %v3089 = vrot.slane %v2858, 1
      %v3090 = vrot.slane %v2862, 1
      %v3091 = vrot.slane %v2866, 1
      %v3092 = vrot.slane %v2870, 1
      %v3093 = vrot.slane %v2874, 1
      %v3094 = vrot.slane %v2878, 1
      %v3095 = vrot.slane %v2882, 1
      %v3096 = vrot.slane %v2886, 1
      %v3097 = vrot.slane %v2890, 1
      %v3098 = vrot.slane %v2894, 1
      %v3099 = vrot.slane %v2898, 1
      %v3100 = vrot.slane %v2902, 1
      %v3101 = vrot.slane %v2906, 1
      %v3102 = vrot.slane %v2910, 1
      %v3103 = vsel %vm1850, %v3071, %v3087
      %v3104 = vsel %vm1850, %v3072, %v3088
      %v3105 = vsel %vm1850, %v3073, %v3089
      %v3106 = vsel %vm1850, %v3074, %v3090
      %v3107 = vsel %vm1850, %v3075, %v3091
      %v3108 = vsel %vm1850, %v3076, %v3092
      %v3109 = vsel %vm1850, %v3077, %v3093
      %v3110 = vsel %vm1850, %v3078, %v3094
      %v3111 = vsel %vm1850, %v3079, %v3095
      %v3112 = vsel %vm1850, %v3080, %v3096
      %v3113 = vsel %vm1850, %v3081, %v3097
      %v3114 = vsel %vm1850, %v3082, %v3098
      %v3115 = vsel %vm1850, %v3083, %v3099
      %v3116 = vsel %vm1850, %v3084, %v3100
      %v3117 = vsel %vm1850, %v3085, %v3101
      %v3118 = vsel %vm1850, %v3086, %v3102
      %v3119 = vsel %vm1850, %v3055, %v3071
      %v3120 = vsel %vm1850, %v3056, %v3072
      %v3121 = vsel %vm1850, %v3057, %v3073
      %v3122 = vsel %vm1850, %v3058, %v3074
      %v3123 = vsel %vm1850, %v3059, %v3075
      %v3124 = vsel %vm1850, %v3060, %v3076
      %v3125 = vsel %vm1850, %v3061, %v3077
      %v3126 = vsel %vm1850, %v3062, %v3078
      %v3127 = vsel %vm1850, %v3063, %v3079
      %v3128 = vsel %vm1850, %v3064, %v3080
      %v3129 = vsel %vm1850, %v3065, %v3081
      %v3130 = vsel %vm1850, %v3066, %v3082
      %v3131 = vsel %vm1850, %v3067, %v3083
      %v3132 = vsel %vm1850, %v3068, %v3084
      %v3133 = vsel %vm1850, %v3069, %v3085
      %v3134 = vsel %vm1850, %v3070, %v3086
      %v3135 = vsel %vm1850, %v3039, %v3055
      %v3136 = vsel %vm1850, %v3040, %v3056
      %v3137 = vsel %vm1850, %v3041, %v3057
      %v3138 = vsel %vm1850, %v3042, %v3058
      %v3139 = vsel %vm1850, %v3043, %v3059
      %v3140 = vsel %vm1850, %v3044, %v3060
      %v3141 = vsel %vm1850, %v3045, %v3061
      %v3142 = vsel %vm1850, %v3046, %v3062
      %v3143 = vsel %vm1850, %v3047, %v3063
      %v3144 = vsel %vm1850, %v3048, %v3064
      %v3145 = vsel %vm1850, %v3049, %v3065
      %v3146 = vsel %vm1850, %v3050, %v3066
      %v3147 = vsel %vm1850, %v3051, %v3067
      %v3148 = vsel %vm1850, %v3052, %v3068
      %v3149 = vsel %vm1850, %v3053, %v3069
      %v3150 = vsel %vm1850, %v3054, %v3070
      %v3151 = vsel %vm1850, %v3087, %v3039
      %v3152 = vsel %vm1850, %v3088, %v3040
      %v3153 = vsel %vm1850, %v3089, %v3041
      %v3154 = vsel %vm1850, %v3090, %v3042
      %v3155 = vsel %vm1850, %v3091, %v3043
      %v3156 = vsel %vm1850, %v3092, %v3044
      %v3157 = vsel %vm1850, %v3093, %v3045
      %v3158 = vsel %vm1850, %v3094, %v3046
      %v3159 = vsel %vm1850, %v3095, %v3047
      %v3160 = vsel %vm1850, %v3096, %v3048
      %v3161 = vsel %vm1850, %v3097, %v3049
      %v3162 = vsel %vm1850, %v3098, %v3050
      %v3163 = vsel %vm1850, %v3099, %v3051
      %v3164 = vsel %vm1850, %v3100, %v3052
      %v3165 = vsel %vm1850, %v3101, %v3053
      %v3166 = vsel %vm1850, %v3102, %v3054
      %v3167 = vmax.f32 %v3023, %v3135
      %v3168 = vmax.f32 %v3007, %v3119
      %v3169 = vmax.f32 %v2991, %v3103
      %v3170 = vmax.f32 %v2975, %v3151
      %v3171 = vmax.f32 %v3024, %v3136
      %v3172 = vmax.f32 %v3008, %v3120
      %v3173 = vmax.f32 %v2992, %v3104
      %v3174 = vmax.f32 %v2976, %v3152
      %v3175 = vmax.f32 %v3025, %v3137
      %v3176 = vmax.f32 %v3009, %v3121
      %v3177 = vmax.f32 %v2993, %v3105
      %v3178 = vmax.f32 %v2977, %v3153
      %v3179 = vmax.f32 %v3026, %v3138
      %v3180 = vmax.f32 %v3010, %v3122
      %v3181 = vmax.f32 %v2994, %v3106
      %v3182 = vmax.f32 %v2978, %v3154
      %v3183 = vmax.f32 %v3027, %v3139
      %v3184 = vmax.f32 %v3011, %v3123
      %v3185 = vmax.f32 %v2995, %v3107
      %v3186 = vmax.f32 %v2979, %v3155
      %v3187 = vmax.f32 %v3028, %v3140
      %v3188 = vmax.f32 %v3012, %v3124
      %v3189 = vmax.f32 %v2996, %v3108
      %v3190 = vmax.f32 %v2980, %v3156
      %v3191 = vmax.f32 %v3029, %v3141
      %v3192 = vmax.f32 %v3013, %v3125
      %v3193 = vmax.f32 %v2997, %v3109
      %v3194 = vmax.f32 %v2981, %v3157
      %v3195 = vmax.f32 %v3030, %v3142
      %v3196 = vmax.f32 %v3014, %v3126
      %v3197 = vmax.f32 %v2998, %v3110
      %v3198 = vmax.f32 %v2982, %v3158
      %v3199 = vmax.f32 %v3031, %v3143
      %v3200 = vmax.f32 %v3015, %v3127
      %v3201 = vmax.f32 %v2999, %v3111
      %v3202 = vmax.f32 %v2983, %v3159
      %v3203 = vmax.f32 %v3032, %v3144
      %v3204 = vmax.f32 %v3016, %v3128
      %v3205 = vmax.f32 %v3000, %v3112
      %v3206 = vmax.f32 %v2984, %v3160
      %v3207 = vmax.f32 %v3033, %v3145
      %v3208 = vmax.f32 %v3017, %v3129
      %v3209 = vmax.f32 %v3001, %v3113
      %v3210 = vmax.f32 %v2985, %v3161
      %v3211 = vmax.f32 %v3034, %v3146
      %v3212 = vmax.f32 %v3018, %v3130
      %v3213 = vmax.f32 %v3002, %v3114
      %v3214 = vmax.f32 %v2986, %v3162
      %v3215 = vmax.f32 %v3035, %v3147
      %v3216 = vmax.f32 %v3019, %v3131
      %v3217 = vmax.f32 %v3003, %v3115
      %v3218 = vmax.f32 %v2987, %v3163
      %v3219 = vmax.f32 %v3036, %v3148
      %v3220 = vmax.f32 %v3020, %v3132
      %v3221 = vmax.f32 %v3004, %v3116
      %v3222 = vmax.f32 %v2988, %v3164
      %v3223 = vmax.f32 %v3037, %v3149
      %v3224 = vmax.f32 %v3021, %v3133
      %v3225 = vmax.f32 %v3005, %v3117
      %v3226 = vmax.f32 %v2989, %v3165
      %v3227 = vmax.f32 %v3038, %v3150
      %v3228 = vmax.f32 %v3022, %v3134
      %v3229 = vmax.f32 %v3006, %v3118
      %v3230 = vmax.f32 %v2990, %v3166
      %v3231 = vrot.slane %v3167, 6
      %v3232 = vrot.slane %v3171, 6
      %v3233 = vrot.slane %v3175, 6
      %v3234 = vrot.slane %v3179, 6
      %v3235 = vrot.slane %v3183, 6
      %v3236 = vrot.slane %v3187, 6
      %v3237 = vrot.slane %v3191, 6
      %v3238 = vrot.slane %v3195, 6
      %v3239 = vrot.slane %v3199, 6
      %v3240 = vrot.slane %v3203, 6
      %v3241 = vrot.slane %v3207, 6
      %v3242 = vrot.slane %v3211, 6
      %v3243 = vrot.slane %v3215, 6
      %v3244 = vrot.slane %v3219, 6
      %v3245 = vrot.slane %v3223, 6
      %v3246 = vrot.slane %v3227, 6
      %v3247 = vrot.slane %v3168, 6
      %v3248 = vrot.slane %v3172, 6
      %v3249 = vrot.slane %v3176, 6
      %v3250 = vrot.slane %v3180, 6
      %v3251 = vrot.slane %v3184, 6
      %v3252 = vrot.slane %v3188, 6
      %v3253 = vrot.slane %v3192, 6
      %v3254 = vrot.slane %v3196, 6
      %v3255 = vrot.slane %v3200, 6
      %v3256 = vrot.slane %v3204, 6
      %v3257 = vrot.slane %v3208, 6
      %v3258 = vrot.slane %v3212, 6
      %v3259 = vrot.slane %v3216, 6
      %v3260 = vrot.slane %v3220, 6
      %v3261 = vrot.slane %v3224, 6
      %v3262 = vrot.slane %v3228, 6
      %v3263 = vrot.slane %v3169, 6
      %v3264 = vrot.slane %v3173, 6
      %v3265 = vrot.slane %v3177, 6
      %v3266 = vrot.slane %v3181, 6
      %v3267 = vrot.slane %v3185, 6
      %v3268 = vrot.slane %v3189, 6
      %v3269 = vrot.slane %v3193, 6
      %v3270 = vrot.slane %v3197, 6
      %v3271 = vrot.slane %v3201, 6
      %v3272 = vrot.slane %v3205, 6
      %v3273 = vrot.slane %v3209, 6
      %v3274 = vrot.slane %v3213, 6
      %v3275 = vrot.slane %v3217, 6
      %v3276 = vrot.slane %v3221, 6
      %v3277 = vrot.slane %v3225, 6
      %v3278 = vrot.slane %v3229, 6
      %vm3279 = vcmp.lt.s32.totalorder %v1656, 2
      %v3280 = vsel %vm3279, %v3247, %v3263
      %v3281 = vsel %vm3279, %v3248, %v3264
      %v3282 = vsel %vm3279, %v3249, %v3265
      %v3283 = vsel %vm3279, %v3250, %v3266
      %v3284 = vsel %vm3279, %v3251, %v3267
      %v3285 = vsel %vm3279, %v3252, %v3268
      %v3286 = vsel %vm3279, %v3253, %v3269
      %v3287 = vsel %vm3279, %v3254, %v3270
      %v3288 = vsel %vm3279, %v3255, %v3271
      %v3289 = vsel %vm3279, %v3256, %v3272
      %v3290 = vsel %vm3279, %v3257, %v3273
      %v3291 = vsel %vm3279, %v3258, %v3274
      %v3292 = vsel %vm3279, %v3259, %v3275
      %v3293 = vsel %vm3279, %v3260, %v3276
      %v3294 = vsel %vm3279, %v3261, %v3277
      %v3295 = vsel %vm3279, %v3262, %v3278
      %v3296 = vsel %vm3279, %v3231, %v3247
      %v3297 = vsel %vm3279, %v3232, %v3248
      %v3298 = vsel %vm3279, %v3233, %v3249
      %v3299 = vsel %vm3279, %v3234, %v3250
      %v3300 = vsel %vm3279, %v3235, %v3251
      %v3301 = vsel %vm3279, %v3236, %v3252
      %v3302 = vsel %vm3279, %v3237, %v3253
      %v3303 = vsel %vm3279, %v3238, %v3254
      %v3304 = vsel %vm3279, %v3239, %v3255
      %v3305 = vsel %vm3279, %v3240, %v3256
      %v3306 = vsel %vm3279, %v3241, %v3257
      %v3307 = vsel %vm3279, %v3242, %v3258
      %v3308 = vsel %vm3279, %v3243, %v3259
      %v3309 = vsel %vm3279, %v3244, %v3260
      %v3310 = vsel %vm3279, %v3245, %v3261
      %v3311 = vsel %vm3279, %v3246, %v3262
      %v3312 = vrot.slane %v3168, 2
      %v3313 = vrot.slane %v3172, 2
      %v3314 = vrot.slane %v3176, 2
      %v3315 = vrot.slane %v3180, 2
      %v3316 = vrot.slane %v3184, 2
      %v3317 = vrot.slane %v3188, 2
      %v3318 = vrot.slane %v3192, 2
      %v3319 = vrot.slane %v3196, 2
      %v3320 = vrot.slane %v3200, 2
      %v3321 = vrot.slane %v3204, 2
      %v3322 = vrot.slane %v3208, 2
      %v3323 = vrot.slane %v3212, 2
      %v3324 = vrot.slane %v3216, 2
      %v3325 = vrot.slane %v3220, 2
      %v3326 = vrot.slane %v3224, 2
      %v3327 = vrot.slane %v3228, 2
      %v3328 = vrot.slane %v3169, 2
      %v3329 = vrot.slane %v3173, 2
      %v3330 = vrot.slane %v3177, 2
      %v3331 = vrot.slane %v3181, 2
      %v3332 = vrot.slane %v3185, 2
      %v3333 = vrot.slane %v3189, 2
      %v3334 = vrot.slane %v3193, 2
      %v3335 = vrot.slane %v3197, 2
      %v3336 = vrot.slane %v3201, 2
      %v3337 = vrot.slane %v3205, 2
      %v3338 = vrot.slane %v3209, 2
      %v3339 = vrot.slane %v3213, 2
      %v3340 = vrot.slane %v3217, 2
      %v3341 = vrot.slane %v3221, 2
      %v3342 = vrot.slane %v3225, 2
      %v3343 = vrot.slane %v3229, 2
      %v3344 = vrot.slane %v3170, 2
      %v3345 = vrot.slane %v3174, 2
      %v3346 = vrot.slane %v3178, 2
      %v3347 = vrot.slane %v3182, 2
      %v3348 = vrot.slane %v3186, 2
      %v3349 = vrot.slane %v3190, 2
      %v3350 = vrot.slane %v3194, 2
      %v3351 = vrot.slane %v3198, 2
      %v3352 = vrot.slane %v3202, 2
      %v3353 = vrot.slane %v3206, 2
      %v3354 = vrot.slane %v3210, 2
      %v3355 = vrot.slane %v3214, 2
      %v3356 = vrot.slane %v3218, 2
      %v3357 = vrot.slane %v3222, 2
      %v3358 = vrot.slane %v3226, 2
      %v3359 = vrot.slane %v3230, 2
      %vm3360 = vcmp.lt.s32.totalorder %v1656, 6
      %v3361 = vsel %vm3360, %v3328, %v3344
      %v3362 = vsel %vm3360, %v3329, %v3345
      %v3363 = vsel %vm3360, %v3330, %v3346
      %v3364 = vsel %vm3360, %v3331, %v3347
      %v3365 = vsel %vm3360, %v3332, %v3348
      %v3366 = vsel %vm3360, %v3333, %v3349
      %v3367 = vsel %vm3360, %v3334, %v3350
      %v3368 = vsel %vm3360, %v3335, %v3351
      %v3369 = vsel %vm3360, %v3336, %v3352
      %v3370 = vsel %vm3360, %v3337, %v3353
      %v3371 = vsel %vm3360, %v3338, %v3354
      %v3372 = vsel %vm3360, %v3339, %v3355
      %v3373 = vsel %vm3360, %v3340, %v3356
      %v3374 = vsel %vm3360, %v3341, %v3357
      %v3375 = vsel %vm3360, %v3342, %v3358
      %v3376 = vsel %vm3360, %v3343, %v3359
      %v3377 = vsel %vm3360, %v3312, %v3328
      %v3378 = vsel %vm3360, %v3313, %v3329
      %v3379 = vsel %vm3360, %v3314, %v3330
      %v3380 = vsel %vm3360, %v3315, %v3331
      %v3381 = vsel %vm3360, %v3316, %v3332
      %v3382 = vsel %vm3360, %v3317, %v3333
      %v3383 = vsel %vm3360, %v3318, %v3334
      %v3384 = vsel %vm3360, %v3319, %v3335
      %v3385 = vsel %vm3360, %v3320, %v3336
      %v3386 = vsel %vm3360, %v3321, %v3337
      %v3387 = vsel %vm3360, %v3322, %v3338
      %v3388 = vsel %vm3360, %v3323, %v3339
      %v3389 = vsel %vm3360, %v3324, %v3340
      %v3390 = vsel %vm3360, %v3325, %v3341
      %v3391 = vsel %vm3360, %v3326, %v3342
      %v3392 = vsel %vm3360, %v3327, %v3343
      %v3393 = vmax.f32 %v3296, %v3377
      %v3394 = vmax.f32 %v3280, %v3361
      %v3395 = vmax.f32 %v3297, %v3378
      %v3396 = vmax.f32 %v3281, %v3362
      %v3397 = vmax.f32 %v3298, %v3379
      %v3398 = vmax.f32 %v3282, %v3363
      %v3399 = vmax.f32 %v3299, %v3380
      %v3400 = vmax.f32 %v3283, %v3364
      %v3401 = vmax.f32 %v3300, %v3381
      %v3402 = vmax.f32 %v3284, %v3365
      %v3403 = vmax.f32 %v3301, %v3382
      %v3404 = vmax.f32 %v3285, %v3366
      %v3405 = vmax.f32 %v3302, %v3383
      %v3406 = vmax.f32 %v3286, %v3367
      %v3407 = vmax.f32 %v3303, %v3384
      %v3408 = vmax.f32 %v3287, %v3368
      %v3409 = vmax.f32 %v3304, %v3385
      %v3410 = vmax.f32 %v3288, %v3369
      %v3411 = vmax.f32 %v3305, %v3386
      %v3412 = vmax.f32 %v3289, %v3370
      %v3413 = vmax.f32 %v3306, %v3387
      %v3414 = vmax.f32 %v3290, %v3371
      %v3415 = vmax.f32 %v3307, %v3388
      %v3416 = vmax.f32 %v3291, %v3372
      %v3417 = vmax.f32 %v3308, %v3389
      %v3418 = vmax.f32 %v3292, %v3373
      %v3419 = vmax.f32 %v3309, %v3390
      %v3420 = vmax.f32 %v3293, %v3374
      %v3421 = vmax.f32 %v3310, %v3391
      %v3422 = vmax.f32 %v3294, %v3375
      %v3423 = vmax.f32 %v3311, %v3392
      %v3424 = vmax.f32 %v3295, %v3376
      %v3425 = vpack.c.bf16 %v3394, %v3393
      %v3426 = vpack.c.bf16 %v3396, %v3395
      %v3427 = vpack.c.bf16 %v3398, %v3397
      %v3428 = vpack.c.bf16 %v3400, %v3399
      %v3429 = vpack.c.bf16 %v3402, %v3401
      %v3430 = vpack.c.bf16 %v3404, %v3403
      %v3431 = vpack.c.bf16 %v3406, %v3405
      %v3432 = vpack.c.bf16 %v3408, %v3407
      %v3433 = vpack.c.bf16 %v3410, %v3409
      %v3434 = vpack.c.bf16 %v3412, %v3411
      %v3435 = vpack.c.bf16 %v3414, %v3413
      %v3436 = vpack.c.bf16 %v3416, %v3415
      %v3437 = vpack.c.bf16 %v3418, %v3417
      %v3438 = vpack.c.bf16 %v3420, %v3419
      %v3439 = vpack.c.bf16 %v3422, %v3421
      %v3440 = vpack.c.bf16 %v3424, %v3423
      %v3442 = vsel %vm226, %v3425, 0
      %v3445 = vsel %vm226, %v3426, 0
      %v3448 = vsel %vm226, %v3427, 0
      %v3451 = vsel %vm226, %v3428, 0
      %v3454 = vsel %vm226, %v3429, 0
      %v3457 = vsel %vm226, %v3430, 0
      %v3460 = vsel %vm226, %v3431, 0
      %v3463 = vsel %vm226, %v3432, 0
      %v3466 = vsel %vm226, %v3433, 0
      %v3469 = vsel %vm226, %v3434, 0
      %v3472 = vsel %vm226, %v3435, 0
      %v3475 = vsel %vm226, %v3436, 0
      %v3478 = vsel %vm226, %v3437, 0
      %v3481 = vsel %vm226, %v3438, 0
      %v3484 = vsel %vm226, %v3439, 0
      %v3487 = vsel %vm226, %v3440, 0
      %v3490 = vsel %vm789, %v716, 0
      %3492 = vmatprep.subr.bf16.mxu0 0
      %3493 = vmatpush1.bf16.msra.mxu0 %v3490
      %3494 = vmatprep.subr.bf16.mxu0 0
      %3495 = vmatpush1.bf16.msra.mxu0 0
      %3496 = vmatprep.subr.bf16.mxu0 0
      %3497 = vmatpush1.bf16.msra.mxu0 0
      %3498 = vmatprep.subr.bf16.mxu0 0
      %3499 = vmatpush1.bf16.msra.mxu0 0
      %3500 = vmatprep.subr.bf16.mxu0 0
      %3501 = vmatpush1.bf16.msra.mxu0 0
      %3502 = vmatprep.subr.bf16.mxu0 0
      %3503 = vmatpush1.bf16.msra.mxu0 0
      %3504 = vmatprep.subr.bf16.mxu0 0
      %3505 = vmatpush1.bf16.msra.mxu0 0
      %3506 = vmatprep.subr.bf16.mxu0 0
      %3507 = vmatpush1.bf16.msra.mxu0 0
      %3508 = vmatprep.subr.bf16.mxu0 0
      %3509 = vmatpush1.bf16.msra.mxu0 0
      %3510 = vmatprep.subr.bf16.mxu0 0
      %3511 = vmatpush1.bf16.msra.mxu0 0
      %3512 = vmatprep.subr.bf16.mxu0 0
      %3513 = vmatpush1.bf16.msra.mxu0 0
      %3514 = vmatprep.subr.bf16.mxu0 0
      %3515 = vmatpush1.bf16.msra.mxu0 0
      %3516 = vmatprep.subr.bf16.mxu0 0
      %3517 = vmatpush1.bf16.msra.mxu0 0
      %3518 = vmatprep.subr.bf16.mxu0 0
      %3519 = vmatpush1.bf16.msra.mxu0 0
      %3520 = vmatprep.subr.bf16.mxu0 0
      %3521 = vmatpush1.bf16.msra.mxu0 0
      %3522 = vmatprep.subr.bf16.mxu0 0
      %3523 = vmatpush1.bf16.msra.mxu0 0
      %3524 = vmatprep.mubr.bf16.mxu0 0
      %3525 = vmatmul.mubr.bf16.gmra.mrb[0].mxu0 %v3442
      %v3526 = vpop.f32.mrb[0].mxu0
      %v3527 = vadd.f32 0.0, %v3526
      %v3528 = vpop.f32.mrb[0].mxu0
      %v3529 = vpop.f32.mrb[0].mxu0
      %v3530 = vadd.f32 0.0, %v3529
      %v3531 = vpop.f32.mrb[0].mxu0
      %3532 = vmatprep.mubr.bf16.mxu0 0
      %3533 = vmatmul.mubr.bf16.gmra.mrb[0].mxu0 %v3445
      %v3534 = vpop.f32.mrb[0].mxu0
      %v3535 = vadd.f32 0.0, %v3534
      %v3536 = vpop.f32.mrb[0].mxu0
      %v3537 = vpop.f32.mrb[0].mxu0
      %v3538 = vadd.f32 0.0, %v3537
      %v3539 = vpop.f32.mrb[0].mxu0
      %3540 = vmatprep.mubr.bf16.mxu0 0
      %3541 = vmatmul.mubr.bf16.gmra.mrb[0].mxu0 %v3448
      %v3542 = vpop.f32.mrb[0].mxu0
      %v3543 = vadd.f32 0.0, %v3542
      %v3544 = vpop.f32.mrb[0].mxu0
      %v3545 = vpop.f32.mrb[0].mxu0
      %v3546 = vadd.f32 0.0, %v3545
      %v3547 = vpop.f32.mrb[0].mxu0
      %3548 = vmatprep.mubr.bf16.mxu0 0
      %3549 = vmatmul.mubr.bf16.gmra.mrb[0].mxu0 %v3451
      %v3550 = vpop.f32.mrb[0].mxu0
      %v3551 = vadd.f32 0.0, %v3550
      %v3552 = vpop.f32.mrb[0].mxu0
      %v3553 = vpop.f32.mrb[0].mxu0
      %v3554 = vadd.f32 0.0, %v3553
      %v3555 = vpop.f32.mrb[0].mxu0
      %3556 = vmatprep.mubr.bf16.mxu0 0
      %3557 = vmatmul.mubr.bf16.gmra.mrb[0].mxu0 %v3454
      %v3558 = vpop.f32.mrb[0].mxu0
      %v3559 = vadd.f32 0.0, %v3558
      %v3560 = vpop.f32.mrb[0].mxu0
      %v3561 = vpop.f32.mrb[0].mxu0
      %v3562 = vadd.f32 0.0, %v3561
      %v3563 = vpop.f32.mrb[0].mxu0
      %3564 = vmatprep.mubr.bf16.mxu0 0
      %3565 = vmatmul.mubr.bf16.gmra.mrb[0].mxu0 %v3457
      %v3566 = vpop.f32.mrb[0].mxu0
      %v3567 = vadd.f32 0.0, %v3566
      %v3568 = vpop.f32.mrb[0].mxu0
      %v3569 = vpop.f32.mrb[0].mxu0
      %v3570 = vadd.f32 0.0, %v3569
      %v3571 = vpop.f32.mrb[0].mxu0
      %3572 = vmatprep.mubr.bf16.mxu0 0
      %3573 = vmatmul.mubr.bf16.gmra.mrb[0].mxu0 %v3460
      %v3574 = vpop.f32.mrb[0].mxu0
      %v3575 = vadd.f32 0.0, %v3574
      %v3576 = vpop.f32.mrb[0].mxu0
      %v3577 = vpop.f32.mrb[0].mxu0
      %v3578 = vadd.f32 0.0, %v3577
      %v3579 = vpop.f32.mrb[0].mxu0
      %3580 = vmatprep.mubr.bf16.mxu0 0
      %3581 = vmatmul.mubr.bf16.gmra.mrb[0].mxu0 %v3463
      %v3582 = vpop.f32.mrb[0].mxu0
      %v3583 = vadd.f32 0.0, %v3582
      %v3584 = vpop.f32.mrb[0].mxu0
      %v3585 = vpop.f32.mrb[0].mxu0
      %v3586 = vadd.f32 0.0, %v3585
      %v3587 = vpop.f32.mrb[0].mxu0
      %3588 = vmatprep.mubr.bf16.mxu0 0
      %3589 = vmatmul.mubr.bf16.gmra.mrb[0].mxu0 %v3466
      %v3590 = vpop.f32.mrb[0].mxu0
      %v3591 = vadd.f32 0.0, %v3590
      %v3592 = vpop.f32.mrb[0].mxu0
      %v3593 = vpop.f32.mrb[0].mxu0
      %v3594 = vadd.f32 0.0, %v3593
      %v3595 = vpop.f32.mrb[0].mxu0
      %3596 = vmatprep.mubr.bf16.mxu0 0
      %3597 = vmatmul.mubr.bf16.gmra.mrb[0].mxu0 %v3469
      %v3598 = vpop.f32.mrb[0].mxu0
      %v3599 = vadd.f32 0.0, %v3598
      %v3600 = vpop.f32.mrb[0].mxu0
      %v3601 = vpop.f32.mrb[0].mxu0
      %v3602 = vadd.f32 0.0, %v3601
      %v3603 = vpop.f32.mrb[0].mxu0
      %3604 = vmatprep.mubr.bf16.mxu0 0
      %3605 = vmatmul.mubr.bf16.gmra.mrb[0].mxu0 %v3472
      %v3606 = vpop.f32.mrb[0].mxu0
      %v3607 = vadd.f32 0.0, %v3606
      %v3608 = vpop.f32.mrb[0].mxu0
      %v3609 = vpop.f32.mrb[0].mxu0
      %v3610 = vadd.f32 0.0, %v3609
      %v3611 = vpop.f32.mrb[0].mxu0
      %3612 = vmatprep.mubr.bf16.mxu0 0
      %3613 = vmatmul.mubr.bf16.gmra.mrb[0].mxu0 %v3475
      %v3614 = vpop.f32.mrb[0].mxu0
      %v3615 = vadd.f32 0.0, %v3614
      %v3616 = vpop.f32.mrb[0].mxu0
      %v3617 = vpop.f32.mrb[0].mxu0
      %v3618 = vadd.f32 0.0, %v3617
      %v3619 = vpop.f32.mrb[0].mxu0
      %3620 = vmatprep.mubr.bf16.mxu0 0
      %3621 = vmatmul.mubr.bf16.gmra.mrb[0].mxu0 %v3478
      %v3622 = vpop.f32.mrb[0].mxu0
      %v3623 = vadd.f32 0.0, %v3622
      %v3624 = vpop.f32.mrb[0].mxu0
      %v3625 = vpop.f32.mrb[0].mxu0
      %v3626 = vadd.f32 0.0, %v3625
      %v3627 = vpop.f32.mrb[0].mxu0
      %3628 = vmatprep.mubr.bf16.mxu0 0
      %3629 = vmatmul.mubr.bf16.gmra.mrb[0].mxu0 %v3481
      %v3630 = vpop.f32.mrb[0].mxu0
      %v3631 = vadd.f32 0.0, %v3630
      %v3632 = vpop.f32.mrb[0].mxu0
      %v3633 = vpop.f32.mrb[0].mxu0
      %v3634 = vadd.f32 0.0, %v3633
      %v3635 = vpop.f32.mrb[0].mxu0
      %3636 = vmatprep.mubr.bf16.mxu0 0
      %3637 = vmatmul.mubr.bf16.gmra.mrb[0].mxu0 %v3484
      %v3638 = vpop.f32.mrb[0].mxu0
      %v3639 = vadd.f32 0.0, %v3638
      %v3640 = vpop.f32.mrb[0].mxu0
      %v3641 = vpop.f32.mrb[0].mxu0
      %v3642 = vadd.f32 0.0, %v3641
      %v3643 = vpop.f32.mrb[0].mxu0
      %3644 = vmatprep.mubr.bf16.mxu0 0
      %3645 = vmatmul.mubr.bf16.gmra.mrb[0].mxu0 %v3487
      %v3646 = vpop.f32.mrb[0].mxu0
      %v3647 = vadd.f32 0.0, %v3646
      %v3648 = vpop.f32.mrb[0].mxu0
      %v3649 = vpop.f32.mrb[0].mxu0
      %v3650 = vadd.f32 0.0, %v3649
      %v3651 = vpop.f32.mrb[0].mxu0
      %3652 = vdwg.mxu0
      %v3653 = vadd.f32 %v2399, %v3527
      %v3654 = vadd.f32 %v2400, %v3530
      %v3655 = vadd.f32 %v2401, %v3535
      %v3656 = vadd.f32 %v2402, %v3538
      %v3657 = vadd.f32 %v2403, %v3543
      %v3658 = vadd.f32 %v2404, %v3546
      %v3659 = vadd.f32 %v2405, %v3551
      %v3660 = vadd.f32 %v2406, %v3554
      %v3661 = vadd.f32 %v2407, %v3559
      %v3662 = vadd.f32 %v2408, %v3562
      %v3663 = vadd.f32 %v2409, %v3567
      %v3664 = vadd.f32 %v2410, %v3570
      %v3665 = vadd.f32 %v2411, %v3575
      %v3666 = vadd.f32 %v2412, %v3578
      %v3667 = vadd.f32 %v2413, %v3583
      %v3668 = vadd.f32 %v2414, %v3586
      %v3669 = vadd.f32 %v2415, %v3591
      %v3670 = vadd.f32 %v2416, %v3594
      %v3671 = vadd.f32 %v2417, %v3599
      %v3672 = vadd.f32 %v2418, %v3602
      %v3673 = vadd.f32 %v2419, %v3607
      %v3674 = vadd.f32 %v2420, %v3610
      %v3675 = vadd.f32 %v2421, %v3615
      %v3676 = vadd.f32 %v2422, %v3618
      %v3677 = vadd.f32 %v2423, %v3623
      %v3678 = vadd.f32 %v2424, %v3626
      %v3679 = vadd.f32 %v2425, %v3631
      %v3680 = vadd.f32 %v2426, %v3634
      %v3681 = vadd.f32 %v2427, %v3639
      %v3682 = vadd.f32 %v2428, %v3642
      %v3683 = vadd.f32 %v2429, %v3647
      %v3684 = vadd.f32 %v2430, %v3650
      %3685 = vst.msk [vmem:[#allocation3 + $0x8] sm:$0xff] %vm226, %v1463
      %3686 = vst.msk [vmem:[#allocation3 + $0x10] sm:$0xff] %vm226, %v1464
      %3687 = vst.msk [vmem:[#allocation3 + $0x28] sm:$0xff] %vm226, %v1465
      %3688 = vst.msk [vmem:[#allocation3 + $0x30] sm:$0xff] %vm226, %v1466
      %3689 = vst.msk [vmem:[#allocation3 + $0x48] sm:$0xff] %vm226, %v1467
      %3690 = vst.msk [vmem:[#allocation3 + $0x50] sm:$0xff] %vm226, %v1468
      %3691 = vst.msk [vmem:[#allocation3 + $0x68] sm:$0xff] %vm226, %v1469
      %3692 = vst.msk [vmem:[#allocation3 + $0x70] sm:$0xff] %vm226, %v1470
      %3693 = vst.msk [vmem:[#allocation3 + $0x88] sm:$0xff] %vm226, %v1471
      %3694 = vst.msk [vmem:[#allocation3 + $0x90] sm:$0xff] %vm226, %v1472
      %3695 = vst.msk [vmem:[#allocation3 + $0xa8] sm:$0xff] %vm226, %v1473
      %3696 = vst.msk [vmem:[#allocation3 + $0xb0] sm:$0xff] %vm226, %v1474
      %3697 = vst.msk [vmem:[#allocation3 + $0xc8] sm:$0xff] %vm226, %v1475
      %3698 = vst.msk [vmem:[#allocation3 + $0xd0] sm:$0xff] %vm226, %v1476
      %3699 = vst.msk [vmem:[#allocation3 + $0xe8] sm:$0xff] %vm226, %v1477
      %3700 = vst.msk [vmem:[#allocation3 + $0xf0] sm:$0xff] %vm226, %v1478
      %3701 = vst.msk [vmem:[#allocation3 + $0x108] sm:$0xff] %vm226, %v1479
      %3702 = vst.msk [vmem:[#allocation3 + $0x110] sm:$0xff] %vm226, %v1480
      %3703 = vst.msk [vmem:[#allocation3 + $0x128] sm:$0xff] %vm226, %v1481
      %3704 = vst.msk [vmem:[#allocation3 + $0x130] sm:$0xff] %vm226, %v1482
      %3705 = vst.msk [vmem:[#allocation3 + $0x148] sm:$0xff] %vm226, %v1483
      %3706 = vst.msk [vmem:[#allocation3 + $0x150] sm:$0xff] %vm226, %v1484
      %3707 = vst.msk [vmem:[#allocation3 + $0x168] sm:$0xff] %vm226, %v1485
      %3708 = vst.msk [vmem:[#allocation3 + $0x170] sm:$0xff] %vm226, %v1486
      %3709 = vst.msk [vmem:[#allocation3 + $0x188] sm:$0xff] %vm226, %v1487
      %3710 = vst.msk [vmem:[#allocation3 + $0x190] sm:$0xff] %vm226, %v1488
      %3711 = vst.msk [vmem:[#allocation3 + $0x1a8] sm:$0xff] %vm226, %v1489
      %3712 = vst.msk [vmem:[#allocation3 + $0x1b0] sm:$0xff] %vm226, %v1490
      %3713 = vst.msk [vmem:[#allocation3 + $0x1c8] sm:$0xff] %vm226, %v1491
      %3714 = vst.msk [vmem:[#allocation3 + $0x1d0] sm:$0xff] %vm226, %v1492
      %3715 = vst.msk [vmem:[#allocation3 + $0x1e8] sm:$0xff] %vm226, %v1493
      %3716 = vst.msk [vmem:[#allocation3 + $0x1f0] sm:$0xff] %vm226, %v1494
      %v3717 = vld [vmem:[#allocation3] sm:$0xff]
      %v3718 = vld [vmem:[#allocation3 + $0x8] sm:$0xff]
      %v3719 = vld [vmem:[#allocation3 + $0x10] sm:$0xff]
      %v3720 = vld [vmem:[#allocation3 + $0x18] sm:$0xff]
      %v3721 = vld [vmem:[#allocation3 + $0x20] sm:$0xff]
      %v3722 = vld [vmem:[#allocation3 + $0x28] sm:$0xff]
      %v3723 = vld [vmem:[#allocation3 + $0x30] sm:$0xff]
      %v3724 = vld [vmem:[#allocation3 + $0x38] sm:$0xff]
      %v3725 = vld [vmem:[#allocation3 + $0x40] sm:$0xff]
      %v3726 = vld [vmem:[#allocation3 + $0x48] sm:$0xff]
      %v3727 = vld [vmem:[#allocation3 + $0x50] sm:$0xff]
      %v3728 = vld [vmem:[#allocation3 + $0x58] sm:$0xff]
      %v3729 = vld [vmem:[#allocation3 + $0x60] sm:$0xff]
      %v3730 = vld [vmem:[#allocation3 + $0x68] sm:$0xff]
      %v3731 = vld [vmem:[#allocation3 + $0x70] sm:$0xff]
      %v3732 = vld [vmem:[#allocation3 + $0x78] sm:$0xff]
      %v3733 = vld [vmem:[#allocation3 + $0x80] sm:$0xff]
      %v3734 = vld [vmem:[#allocation3 + $0x88] sm:$0xff]
      %v3735 = vld [vmem:[#allocation3 + $0x90] sm:$0xff]
      %v3736 = vld [vmem:[#allocation3 + $0x98] sm:$0xff]
      %v3737 = vld [vmem:[#allocation3 + $0xa0] sm:$0xff]
      %v3738 = vld [vmem:[#allocation3 + $0xa8] sm:$0xff]
      %v3739 = vld [vmem:[#allocation3 + $0xb0] sm:$0xff]
      %v3740 = vld [vmem:[#allocation3 + $0xb8] sm:$0xff]
      %v3741 = vld [vmem:[#allocation3 + $0xc0] sm:$0xff]
      %v3742 = vld [vmem:[#allocation3 + $0xc8] sm:$0xff]
      %v3743 = vld [vmem:[#allocation3 + $0xd0] sm:$0xff]
      %v3744 = vld [vmem:[#allocation3 + $0xd8] sm:$0xff]
      %v3745 = vld [vmem:[#allocation3 + $0xe0] sm:$0xff]
      %v3746 = vld [vmem:[#allocation3 + $0xe8] sm:$0xff]
      %v3747 = vld [vmem:[#allocation3 + $0xf0] sm:$0xff]
      %v3748 = vld [vmem:[#allocation3 + $0xf8] sm:$0xff]
      %v3749 = vld [vmem:[#allocation3 + $0x100] sm:$0xff]
      %v3750 = vld [vmem:[#allocation3 + $0x108] sm:$0xff]
      %v3751 = vld [vmem:[#allocation3 + $0x110] sm:$0xff]
      %v3752 = vld [vmem:[#allocation3 + $0x118] sm:$0xff]
      %v3753 = vld [vmem:[#allocation3 + $0x120] sm:$0xff]
      %v3754 = vld [vmem:[#allocation3 + $0x128] sm:$0xff]
      %v3755 = vld [vmem:[#allocation3 + $0x130] sm:$0xff]
      %v3756 = vld [vmem:[#allocation3 + $0x138] sm:$0xff]
      %v3757 = vld [vmem:[#allocation3 + $0x140] sm:$0xff]
      %v3758 = vld [vmem:[#allocation3 + $0x148] sm:$0xff]
      %v3759 = vld [vmem:[#allocation3 + $0x150] sm:$0xff]
      %v3760 = vld [vmem:[#allocation3 + $0x158] sm:$0xff]
      %v3761 = vld [vmem:[#allocation3 + $0x160] sm:$0xff]
      %v3762 = vld [vmem:[#allocation3 + $0x168] sm:$0xff]
      %v3763 = vld [vmem:[#allocation3 + $0x170] sm:$0xff]
      %v3764 = vld [vmem:[#allocation3 + $0x178] sm:$0xff]
      %v3765 = vld [vmem:[#allocation3 + $0x180] sm:$0xff]
      %v3766 = vld [vmem:[#allocation3 + $0x188] sm:$0xff]
      %v3767 = vld [vmem:[#allocation3 + $0x190] sm:$0xff]
      %v3768 = vld [vmem:[#allocation3 + $0x198] sm:$0xff]
      %v3769 = vld [vmem:[#allocation3 + $0x1a0] sm:$0xff]
      %v3770 = vld [vmem:[#allocation3 + $0x1a8] sm:$0xff]
      %v3771 = vld [vmem:[#allocation3 + $0x1b0] sm:$0xff]
      %v3772 = vld [vmem:[#allocation3 + $0x1b8] sm:$0xff]
      %v3773 = vld [vmem:[#allocation3 + $0x1c0] sm:$0xff]
      %v3774 = vld [vmem:[#allocation3 + $0x1c8] sm:$0xff]
      %v3775 = vld [vmem:[#allocation3 + $0x1d0] sm:$0xff]
      %v3776 = vld [vmem:[#allocation3 + $0x1d8] sm:$0xff]
      %v3777 = vld [vmem:[#allocation3 + $0x1e0] sm:$0xff]
      %v3778 = vld [vmem:[#allocation3 + $0x1e8] sm:$0xff]
      %v3779 = vld [vmem:[#allocation3 + $0x1f0] sm:$0xff]
      %v3780 = vld [vmem:[#allocation3 + $0x1f8] sm:$0xff]
      %v3781 = vrot.slane %v3717, 7
      %v3782 = vrot.slane %v3721, 7
      %v3783 = vrot.slane %v3725, 7
      %v3784 = vrot.slane %v3729, 7
      %v3785 = vrot.slane %v3733, 7
      %v3786 = vrot.slane %v3737, 7
      %v3787 = vrot.slane %v3741, 7
      %v3788 = vrot.slane %v3745, 7
      %v3789 = vrot.slane %v3749, 7
      %v3790 = vrot.slane %v3753, 7
      %v3791 = vrot.slane %v3757, 7
      %v3792 = vrot.slane %v3761, 7
      %v3793 = vrot.slane %v3765, 7
      %v3794 = vrot.slane %v3769, 7
      %v3795 = vrot.slane %v3773, 7
      %v3796 = vrot.slane %v3777, 7
      %v3797 = vrot.slane %v3718, 7
      %v3798 = vrot.slane %v3722, 7
      %v3799 = vrot.slane %v3726, 7
      %v3800 = vrot.slane %v3730, 7
      %v3801 = vrot.slane %v3734, 7
      %v3802 = vrot.slane %v3738, 7
      %v3803 = vrot.slane %v3742, 7
      %v3804 = vrot.slane %v3746, 7
      %v3805 = vrot.slane %v3750, 7
      %v3806 = vrot.slane %v3754, 7
      %v3807 = vrot.slane %v3758, 7
      %v3808 = vrot.slane %v3762, 7
      %v3809 = vrot.slane %v3766, 7
      %v3810 = vrot.slane %v3770, 7
      %v3811 = vrot.slane %v3774, 7
      %v3812 = vrot.slane %v3778, 7
      %v3813 = vrot.slane %v3719, 7
      %v3814 = vrot.slane %v3723, 7
      %v3815 = vrot.slane %v3727, 7
      %v3816 = vrot.slane %v3731, 7
      %v3817 = vrot.slane %v3735, 7
      %v3818 = vrot.slane %v3739, 7
      %v3819 = vrot.slane %v3743, 7
      %v3820 = vrot.slane %v3747, 7
      %v3821 = vrot.slane %v3751, 7
      %v3822 = vrot.slane %v3755, 7
      %v3823 = vrot.slane %v3759, 7
      %v3824 = vrot.slane %v3763, 7
      %v3825 = vrot.slane %v3767, 7
      %v3826 = vrot.slane %v3771, 7
      %v3827 = vrot.slane %v3775, 7
      %v3828 = vrot.slane %v3779, 7
      %v3829 = vrot.slane %v3720, 7
      %v3830 = vrot.slane %v3724, 7
      %v3831 = vrot.slane %v3728, 7
      %v3832 = vrot.slane %v3732, 7
      %v3833 = vrot.slane %v3736, 7
      %v3834 = vrot.slane %v3740, 7
      %v3835 = vrot.slane %v3744, 7
      %v3836 = vrot.slane %v3748, 7
      %v3837 = vrot.slane %v3752, 7
      %v3838 = vrot.slane %v3756, 7
      %v3839 = vrot.slane %v3760, 7
      %v3840 = vrot.slane %v3764, 7
      %v3841 = vrot.slane %v3768, 7
      %v3842 = vrot.slane %v3772, 7
      %v3843 = vrot.slane %v3776, 7
      %v3844 = vrot.slane %v3780, 7
      %v3845 = vsel %vm1657, %v3813, %v3829
      %v3846 = vsel %vm1657, %v3814, %v3830
      %v3847 = vsel %vm1657, %v3815, %v3831
      %v3848 = vsel %vm1657, %v3816, %v3832
      %v3849 = vsel %vm1657, %v3817, %v3833
      %v3850 = vsel %vm1657, %v3818, %v3834
      %v3851 = vsel %vm1657, %v3819, %v3835
      %v3852 = vsel %vm1657, %v3820, %v3836
      %v3853 = vsel %vm1657, %v3821, %v3837
      %v3854 = vsel %vm1657, %v3822, %v3838
      %v3855 = vsel %vm1657, %v3823, %v3839
      %v3856 = vsel %vm1657, %v3824, %v3840
      %v3857 = vsel %vm1657, %v3825, %v3841
      %v3858 = vsel %vm1657, %v3826, %v3842
      %v3859 = vsel %vm1657, %v3827, %v3843
      %v3860 = vsel %vm1657, %v3828, %v3844
      %v3861 = vsel %vm1657, %v3797, %v3813
      %v3862 = vsel %vm1657, %v3798, %v3814
      %v3863 = vsel %vm1657, %v3799, %v3815
      %v3864 = vsel %vm1657, %v3800, %v3816
      %v3865 = vsel %vm1657, %v3801, %v3817
      %v3866 = vsel %vm1657, %v3802, %v3818
      %v3867 = vsel %vm1657, %v3803, %v3819
      %v3868 = vsel %vm1657, %v3804, %v3820
      %v3869 = vsel %vm1657, %v3805, %v3821
      %v3870 = vsel %vm1657, %v3806, %v3822
      %v3871 = vsel %vm1657, %v3807, %v3823
      %v3872 = vsel %vm1657, %v3808, %v3824
      %v3873 = vsel %vm1657, %v3809, %v3825
      %v3874 = vsel %vm1657, %v3810, %v3826
      %v3875 = vsel %vm1657, %v3811, %v3827
      %v3876 = vsel %vm1657, %v3812, %v3828
      %v3877 = vsel %vm1657, %v3781, %v3797
      %v3878 = vsel %vm1657, %v3782, %v3798
      %v3879 = vsel %vm1657, %v3783, %v3799
      %v3880 = vsel %vm1657, %v3784, %v3800
      %v3881 = vsel %vm1657, %v3785, %v3801
      %v3882 = vsel %vm1657, %v3786, %v3802
      %v3883 = vsel %vm1657, %v3787, %v3803
      %v3884 = vsel %vm1657, %v3788, %v3804
      %v3885 = vsel %vm1657, %v3789, %v3805
      %v3886 = vsel %vm1657, %v3790, %v3806
      %v3887 = vsel %vm1657, %v3791, %v3807
      %v3888 = vsel %vm1657, %v3792, %v3808
      %v3889 = vsel %vm1657, %v3793, %v3809
      %v3890 = vsel %vm1657, %v3794, %v3810
      %v3891 = vsel %vm1657, %v3795, %v3811
      %v3892 = vsel %vm1657, %v3796, %v3812
      %v3893 = vsel %vm1657, %v3829, %v3781
      %v3894 = vsel %vm1657, %v3830, %v3782
      %v3895 = vsel %vm1657, %v3831, %v3783
      %v3896 = vsel %vm1657, %v3832, %v3784
      %v3897 = vsel %vm1657, %v3833, %v3785
      %v3898 = vsel %vm1657, %v3834, %v3786
      %v3899 = vsel %vm1657, %v3835, %v3787
      %v3900 = vsel %vm1657, %v3836, %v3788
      %v3901 = vsel %vm1657, %v3837, %v3789
      %v3902 = vsel %vm1657, %v3838, %v3790
      %v3903 = vsel %vm1657, %v3839, %v3791
      %v3904 = vsel %vm1657, %v3840, %v3792
      %v3905 = vsel %vm1657, %v3841, %v3793
      %v3906 = vsel %vm1657, %v3842, %v3794
      %v3907 = vsel %vm1657, %v3843, %v3795
      %v3908 = vsel %vm1657, %v3844, %v3796
      %v3909 = vmax.f32 %v3893, %v3717
      %v3910 = vmax.f32 %v3877, %v3718
      %v3911 = vmax.f32 %v3861, %v3719
      %v3912 = vmax.f32 %v3845, %v3720
      %v3913 = vmax.f32 %v3894, %v3721
      %v3914 = vmax.f32 %v3878, %v3722
      %v3915 = vmax.f32 %v3862, %v3723
      %v3916 = vmax.f32 %v3846, %v3724
      %v3917 = vmax.f32 %v3895, %v3725
      %v3918 = vmax.f32 %v3879, %v3726
      %v3919 = vmax.f32 %v3863, %v3727
      %v3920 = vmax.f32 %v3847, %v3728
      %v3921 = vmax.f32 %v3896, %v3729
      %v3922 = vmax.f32 %v3880, %v3730
      %v3923 = vmax.f32 %v3864, %v3731
      %v3924 = vmax.f32 %v3848, %v3732
      %v3925 = vmax.f32 %v3897, %v3733
      %v3926 = vmax.f32 %v3881, %v3734
      %v3927 = vmax.f32 %v3865, %v3735
      %v3928 = vmax.f32 %v3849, %v3736
      %v3929 = vmax.f32 %v3898, %v3737
      %v3930 = vmax.f32 %v3882, %v3738
      %v3931 = vmax.f32 %v3866, %v3739
      %v3932 = vmax.f32 %v3850, %v3740
      %v3933 = vmax.f32 %v3899, %v3741
      %v3934 = vmax.f32 %v3883, %v3742
      %v3935 = vmax.f32 %v3867, %v3743
      %v3936 = vmax.f32 %v3851, %v3744
      %v3937 = vmax.f32 %v3900, %v3745
      %v3938 = vmax.f32 %v3884, %v3746
      %v3939 = vmax.f32 %v3868, %v3747
      %v3940 = vmax.f32 %v3852, %v3748
      %v3941 = vmax.f32 %v3901, %v3749
      %v3942 = vmax.f32 %v3885, %v3750
      %v3943 = vmax.f32 %v3869, %v3751
      %v3944 = vmax.f32 %v3853, %v3752
      %v3945 = vmax.f32 %v3902, %v3753
      %v3946 = vmax.f32 %v3886, %v3754
      %v3947 = vmax.f32 %v3870, %v3755
      %v3948 = vmax.f32 %v3854, %v3756
      %v3949 = vmax.f32 %v3903, %v3757
      %v3950 = vmax.f32 %v3887, %v3758
      %v3951 = vmax.f32 %v3871, %v3759
      %v3952 = vmax.f32 %v3855, %v3760
      %v3953 = vmax.f32 %v3904, %v3761
      %v3954 = vmax.f32 %v3888, %v3762
      %v3955 = vmax.f32 %v3872, %v3763
      %v3956 = vmax.f32 %v3856, %v3764
      %v3957 = vmax.f32 %v3905, %v3765
      %v3958 = vmax.f32 %v3889, %v3766
      %v3959 = vmax.f32 %v3873, %v3767
      %v3960 = vmax.f32 %v3857, %v3768
      %v3961 = vmax.f32 %v3906, %v3769
      %v3962 = vmax.f32 %v3890, %v3770
      %v3963 = vmax.f32 %v3874, %v3771
      %v3964 = vmax.f32 %v3858, %v3772
      %v3965 = vmax.f32 %v3907, %v3773
      %v3966 = vmax.f32 %v3891, %v3774
      %v3967 = vmax.f32 %v3875, %v3775
      %v3968 = vmax.f32 %v3859, %v3776
      %v3969 = vmax.f32 %v3908, %v3777
      %v3970 = vmax.f32 %v3892, %v3778
      %v3971 = vmax.f32 %v3876, %v3779
      %v3972 = vmax.f32 %v3860, %v3780
      %v3973 = vrot.slane %v3717, 1
      %v3974 = vrot.slane %v3721, 1
      %v3975 = vrot.slane %v3725, 1
      %v3976 = vrot.slane %v3729, 1
      %v3977 = vrot.slane %v3733, 1
      %v3978 = vrot.slane %v3737, 1
      %v3979 = vrot.slane %v3741, 1
      %v3980 = vrot.slane %v3745, 1
      %v3981 = vrot.slane %v3749, 1
      %v3982 = vrot.slane %v3753, 1
      %v3983 = vrot.slane %v3757, 1
      %v3984 = vrot.slane %v3761, 1
      %v3985 = vrot.slane %v3765, 1
      %v3986 = vrot.slane %v3769, 1
      %v3987 = vrot.slane %v3773, 1
      %v3988 = vrot.slane %v3777, 1
      %v3989 = vrot.slane %v3718, 1
      %v3990 = vrot.slane %v3722, 1
      %v3991 = vrot.slane %v3726, 1
      %v3992 = vrot.slane %v3730, 1
      %v3993 = vrot.slane %v3734, 1
      %v3994 = vrot.slane %v3738, 1
      %v3995 = vrot.slane %v3742, 1
      %v3996 = vrot.slane %v3746, 1
      %v3997 = vrot.slane %v3750, 1
      %v3998 = vrot.slane %v3754, 1
      %v3999 = vrot.slane %v3758, 1
      %v4000 = vrot.slane %v3762, 1
      %v4001 = vrot.slane %v3766, 1
      %v4002 = vrot.slane %v3770, 1
      %v4003 = vrot.slane %v3774, 1
      %v4004 = vrot.slane %v3778, 1
      %v4005 = vrot.slane %v3719, 1
      %v4006 = vrot.slane %v3723, 1
      %v4007 = vrot.slane %v3727, 1
      %v4008 = vrot.slane %v3731, 1
      %v4009 = vrot.slane %v3735, 1
      %v4010 = vrot.slane %v3739, 1
      %v4011 = vrot.slane %v3743, 1
      %v4012 = vrot.slane %v3747, 1
      %v4013 = vrot.slane %v3751, 1
      %v4014 = vrot.slane %v3755, 1
      %v4015 = vrot.slane %v3759, 1
      %v4016 = vrot.slane %v3763, 1
      %v4017 = vrot.slane %v3767, 1
      %v4018 = vrot.slane %v3771, 1
      %v4019 = vrot.slane %v3775, 1
      %v4020 = vrot.slane %v3779, 1
      %v4021 = vrot.slane %v3720, 1
      %v4022 = vrot.slane %v3724, 1
      %v4023 = vrot.slane %v3728, 1
      %v4024 = vrot.slane %v3732, 1
      %v4025 = vrot.slane %v3736, 1
      %v4026 = vrot.slane %v3740, 1
      %v4027 = vrot.slane %v3744, 1
      %v4028 = vrot.slane %v3748, 1
      %v4029 = vrot.slane %v3752, 1
      %v4030 = vrot.slane %v3756, 1
      %v4031 = vrot.slane %v3760, 1
      %v4032 = vrot.slane %v3764, 1
      %v4033 = vrot.slane %v3768, 1
      %v4034 = vrot.slane %v3772, 1
      %v4035 = vrot.slane %v3776, 1
      %v4036 = vrot.slane %v3780, 1
      %v4037 = vsel %vm1850, %v4005, %v4021
      %v4038 = vsel %vm1850, %v4006, %v4022
      %v4039 = vsel %vm1850, %v4007, %v4023
      %v4040 = vsel %vm1850, %v4008, %v4024
      %v4041 = vsel %vm1850, %v4009, %v4025
      %v4042 = vsel %vm1850, %v4010, %v4026
      %v4043 = vsel %vm1850, %v4011, %v4027
      %v4044 = vsel %vm1850, %v4012, %v4028
      %v4045 = vsel %vm1850, %v4013, %v4029
      %v4046 = vsel %vm1850, %v4014, %v4030
      %v4047 = vsel %vm1850, %v4015, %v4031
      %v4048 = vsel %vm1850, %v4016, %v4032
      %v4049 = vsel %vm1850, %v4017, %v4033
      %v4050 = vsel %vm1850, %v4018, %v4034
      %v4051 = vsel %vm1850, %v4019, %v4035
      %v4052 = vsel %vm1850, %v4020, %v4036
      %v4053 = vsel %vm1850, %v3989, %v4005
      %v4054 = vsel %vm1850, %v3990, %v4006
      %v4055 = vsel %vm1850, %v3991, %v4007
      %v4056 = vsel %vm1850, %v3992, %v4008
      %v4057 = vsel %vm1850, %v3993, %v4009
      %v4058 = vsel %vm1850, %v3994, %v4010
      %v4059 = vsel %vm1850, %v3995, %v4011
      %v4060 = vsel %vm1850, %v3996, %v4012
      %v4061 = vsel %vm1850, %v3997, %v4013
      %v4062 = vsel %vm1850, %v3998, %v4014
      %v4063 = vsel %vm1850, %v3999, %v4015
      %v4064 = vsel %vm1850, %v4000, %v4016
      %v4065 = vsel %vm1850, %v4001, %v4017
      %v4066 = vsel %vm1850, %v4002, %v4018
      %v4067 = vsel %vm1850, %v4003, %v4019
      %v4068 = vsel %vm1850, %v4004, %v4020
      %v4069 = vsel %vm1850, %v3973, %v3989
      %v4070 = vsel %vm1850, %v3974, %v3990
      %v4071 = vsel %vm1850, %v3975, %v3991
      %v4072 = vsel %vm1850, %v3976, %v3992
      %v4073 = vsel %vm1850, %v3977, %v3993
      %v4074 = vsel %vm1850, %v3978, %v3994
      %v4075 = vsel %vm1850, %v3979, %v3995
      %v4076 = vsel %vm1850, %v3980, %v3996
      %v4077 = vsel %vm1850, %v3981, %v3997
      %v4078 = vsel %vm1850, %v3982, %v3998
      %v4079 = vsel %vm1850, %v3983, %v3999
      %v4080 = vsel %vm1850, %v3984, %v4000
      %v4081 = vsel %vm1850, %v3985, %v4001
      %v4082 = vsel %vm1850, %v3986, %v4002
      %v4083 = vsel %vm1850, %v3987, %v4003
      %v4084 = vsel %vm1850, %v3988, %v4004
      %v4085 = vsel %vm1850, %v4021, %v3973
      %v4086 = vsel %vm1850, %v4022, %v3974
      %v4087 = vsel %vm1850, %v4023, %v3975
      %v4088 = vsel %vm1850, %v4024, %v3976
      %v4089 = vsel %vm1850, %v4025, %v3977
      %v4090 = vsel %vm1850, %v4026, %v3978
      %v4091 = vsel %vm1850, %v4027, %v3979
      %v4092 = vsel %vm1850, %v4028, %v3980
      %v4093 = vsel %vm1850, %v4029, %v3981
      %v4094 = vsel %vm1850, %v4030, %v3982
      %v4095 = vsel %vm1850, %v4031, %v3983
      %v4096 = vsel %vm1850, %v4032, %v3984
      %v4097 = vsel %vm1850, %v4033, %v3985
      %v4098 = vsel %vm1850, %v4034, %v3986
      %v4099 = vsel %vm1850, %v4035, %v3987
      %v4100 = vsel %vm1850, %v4036, %v3988
      %v4101 = vmax.f32 %v3909, %v4069
      %v4102 = vmax.f32 %v3910, %v4053
      %v4103 = vmax.f32 %v3911, %v4037
      %v4104 = vmax.f32 %v3912, %v4085
      %v4105 = vmax.f32 %v3913, %v4070
      %v4106 = vmax.f32 %v3914, %v4054
      %v4107 = vmax.f32 %v3915, %v4038
      %v4108 = vmax.f32 %v3916, %v4086
      %v4109 = vmax.f32 %v3917, %v4071
      %v4110 = vmax.f32 %v3918, %v4055
      %v4111 = vmax.f32 %v3919, %v4039
      %v4112 = vmax.f32 %v3920, %v4087
      %v4113 = vmax.f32 %v3921, %v4072
      %v4114 = vmax.f32 %v3922, %v4056
      %v4115 = vmax.f32 %v3923, %v4040
      %v4116 = vmax.f32 %v3924, %v4088
      %v4117 = vmax.f32 %v3925, %v4073
      %v4118 = vmax.f32 %v3926, %v4057
      %v4119 = vmax.f32 %v3927, %v4041
      %v4120 = vmax.f32 %v3928, %v4089
      %v4121 = vmax.f32 %v3929, %v4074
      %v4122 = vmax.f32 %v3930, %v4058
      %v4123 = vmax.f32 %v3931, %v4042
      %v4124 = vmax.f32 %v3932, %v4090
      %v4125 = vmax.f32 %v3933, %v4075
      %v4126 = vmax.f32 %v3934, %v4059
      %v4127 = vmax.f32 %v3935, %v4043
      %v4128 = vmax.f32 %v3936, %v4091
      %v4129 = vmax.f32 %v3937, %v4076
      %v4130 = vmax.f32 %v3938, %v4060
      %v4131 = vmax.f32 %v3939, %v4044
      %v4132 = vmax.f32 %v3940, %v4092
      %v4133 = vmax.f32 %v3941, %v4077
      %v4134 = vmax.f32 %v3942, %v4061
      %v4135 = vmax.f32 %v3943, %v4045
      %v4136 = vmax.f32 %v3944, %v4093
      %v4137 = vmax.f32 %v3945, %v4078
      %v4138 = vmax.f32 %v3946, %v4062
      %v4139 = vmax.f32 %v3947, %v4046
      %v4140 = vmax.f32 %v3948, %v4094
      %v4141 = vmax.f32 %v3949, %v4079
      %v4142 = vmax.f32 %v3950, %v4063
      %v4143 = vmax.f32 %v3951, %v4047
      %v4144 = vmax.f32 %v3952, %v4095
      %v4145 = vmax.f32 %v3953, %v4080
      %v4146 = vmax.f32 %v3954, %v4064
      %v4147 = vmax.f32 %v3955, %v4048
      %v4148 = vmax.f32 %v3956, %v4096
      %v4149 = vmax.f32 %v3957, %v4081
      %v4150 = vmax.f32 %v3958, %v4065
      %v4151 = vmax.f32 %v3959, %v4049
      %v4152 = vmax.f32 %v3960, %v4097
      %v4153 = vmax.f32 %v3961, %v4082
      %v4154 = vmax.f32 %v3962, %v4066
      %v4155 = vmax.f32 %v3963, %v4050
      %v4156 = vmax.f32 %v3964, %v4098
      %v4157 = vmax.f32 %v3965, %v4083
      %v4158 = vmax.f32 %v3966, %v4067
      %v4159 = vmax.f32 %v3967, %v4051
      %v4160 = vmax.f32 %v3968, %v4099
      %v4161 = vmax.f32 %v3969, %v4084
      %v4162 = vmax.f32 %v3970, %v4068
      %v4163 = vmax.f32 %v3971, %v4052
      %v4164 = vmax.f32 %v3972, %v4100
      %v4165 = vrot.slane %v4101, 7
      %v4166 = vrot.slane %v4105, 7
      %v4167 = vrot.slane %v4109, 7
      %v4168 = vrot.slane %v4113, 7
      %v4169 = vrot.slane %v4117, 7
      %v4170 = vrot.slane %v4121, 7
      %v4171 = vrot.slane %v4125, 7
      %v4172 = vrot.slane %v4129, 7
      %v4173 = vrot.slane %v4133, 7
      %v4174 = vrot.slane %v4137, 7
      %v4175 = vrot.slane %v4141, 7
      %v4176 = vrot.slane %v4145, 7
      %v4177 = vrot.slane %v4149, 7
      %v4178 = vrot.slane %v4153, 7
      %v4179 = vrot.slane %v4157, 7
      %v4180 = vrot.slane %v4161, 7
      %v4181 = vrot.slane %v4102, 7
      %v4182 = vrot.slane %v4106, 7
      %v4183 = vrot.slane %v4110, 7
      %v4184 = vrot.slane %v4114, 7
      %v4185 = vrot.slane %v4118, 7
      %v4186 = vrot.slane %v4122, 7
      %v4187 = vrot.slane %v4126, 7
      %v4188 = vrot.slane %v4130, 7
      %v4189 = vrot.slane %v4134, 7
      %v4190 = vrot.slane %v4138, 7
      %v4191 = vrot.slane %v4142, 7
      %v4192 = vrot.slane %v4146, 7
      %v4193 = vrot.slane %v4150, 7
      %v4194 = vrot.slane %v4154, 7
      %v4195 = vrot.slane %v4158, 7
      %v4196 = vrot.slane %v4162, 7
      %v4197 = vrot.slane %v4103, 7
      %v4198 = vrot.slane %v4107, 7
      %v4199 = vrot.slane %v4111, 7
      %v4200 = vrot.slane %v4115, 7
      %v4201 = vrot.slane %v4119, 7
      %v4202 = vrot.slane %v4123, 7
      %v4203 = vrot.slane %v4127, 7
      %v4204 = vrot.slane %v4131, 7
      %v4205 = vrot.slane %v4135, 7
      %v4206 = vrot.slane %v4139, 7
      %v4207 = vrot.slane %v4143, 7
      %v4208 = vrot.slane %v4147, 7
      %v4209 = vrot.slane %v4151, 7
      %v4210 = vrot.slane %v4155, 7
      %v4211 = vrot.slane %v4159, 7
      %v4212 = vrot.slane %v4163, 7
      %v4213 = vrot.slane %v4104, 7
      %v4214 = vrot.slane %v4108, 7
      %v4215 = vrot.slane %v4112, 7
      %v4216 = vrot.slane %v4116, 7
      %v4217 = vrot.slane %v4120, 7
      %v4218 = vrot.slane %v4124, 7
      %v4219 = vrot.slane %v4128, 7
      %v4220 = vrot.slane %v4132, 7
      %v4221 = vrot.slane %v4136, 7
      %v4222 = vrot.slane %v4140, 7
      %v4223 = vrot.slane %v4144, 7
      %v4224 = vrot.slane %v4148, 7
      %v4225 = vrot.slane %v4152, 7
      %v4226 = vrot.slane %v4156, 7
      %v4227 = vrot.slane %v4160, 7
      %v4228 = vrot.slane %v4164, 7
      %v4229 = vsel %vm1657, %v4197, %v4213
      %v4230 = vsel %vm1657, %v4198, %v4214
      %v4231 = vsel %vm1657, %v4199, %v4215
      %v4232 = vsel %vm1657, %v4200, %v4216
      %v4233 = vsel %vm1657, %v4201, %v4217
      %v4234 = vsel %vm1657, %v4202, %v4218
      %v4235 = vsel %vm1657, %v4203, %v4219
      %v4236 = vsel %vm1657, %v4204, %v4220
      %v4237 = vsel %vm1657, %v4205, %v4221
      %v4238 = vsel %vm1657, %v4206, %v4222
      %v4239 = vsel %vm1657, %v4207, %v4223
      %v4240 = vsel %vm1657, %v4208, %v4224
      %v4241 = vsel %vm1657, %v4209, %v4225
      %v4242 = vsel %vm1657, %v4210, %v4226
      %v4243 = vsel %vm1657, %v4211, %v4227
      %v4244 = vsel %vm1657, %v4212, %v4228
      %v4245 = vsel %vm1657, %v4181, %v4197
      %v4246 = vsel %vm1657, %v4182, %v4198
      %v4247 = vsel %vm1657, %v4183, %v4199
      %v4248 = vsel %vm1657, %v4184, %v4200
      %v4249 = vsel %vm1657, %v4185, %v4201
      %v4250 = vsel %vm1657, %v4186, %v4202
      %v4251 = vsel %vm1657, %v4187, %v4203
      %v4252 = vsel %vm1657, %v4188, %v4204
      %v4253 = vsel %vm1657, %v4189, %v4205
      %v4254 = vsel %vm1657, %v4190, %v4206
      %v4255 = vsel %vm1657, %v4191, %v4207
      %v4256 = vsel %vm1657, %v4192, %v4208
      %v4257 = vsel %vm1657, %v4193, %v4209
      %v4258 = vsel %vm1657, %v4194, %v4210
      %v4259 = vsel %vm1657, %v4195, %v4211
      %v4260 = vsel %vm1657, %v4196, %v4212
      %v4261 = vsel %vm1657, %v4165, %v4181
      %v4262 = vsel %vm1657, %v4166, %v4182
      %v4263 = vsel %vm1657, %v4167, %v4183
      %v4264 = vsel %vm1657, %v4168, %v4184
      %v4265 = vsel %vm1657, %v4169, %v4185
      %v4266 = vsel %vm1657, %v4170, %v4186
      %v4267 = vsel %vm1657, %v4171, %v4187
      %v4268 = vsel %vm1657, %v4172, %v4188
      %v4269 = vsel %vm1657, %v4173, %v4189
      %v4270 = vsel %vm1657, %v4174, %v4190
      %v4271 = vsel %vm1657, %v4175, %v4191
      %v4272 = vsel %vm1657, %v4176, %v4192
      %v4273 = vsel %vm1657, %v4177, %v4193
      %v4274 = vsel %vm1657, %v4178, %v4194
      %v4275 = vsel %vm1657, %v4179, %v4195
      %v4276 = vsel %vm1657, %v4180, %v4196
      %v4277 = vsel %vm1657, %v4213, %v4165
      %v4278 = vsel %vm1657, %v4214, %v4166
      %v4279 = vsel %vm1657, %v4215, %v4167
      %v4280 = vsel %vm1657, %v4216, %v4168
      %v4281 = vsel %vm1657, %v4217, %v4169
      %v4282 = vsel %vm1657, %v4218, %v4170
      %v4283 = vsel %vm1657, %v4219, %v4171
      %v4284 = vsel %vm1657, %v4220, %v4172
      %v4285 = vsel %vm1657, %v4221, %v4173
      %v4286 = vsel %vm1657, %v4222, %v4174
      %v4287 = vsel %vm1657, %v4223, %v4175
      %v4288 = vsel %vm1657, %v4224, %v4176
      %v4289 = vsel %vm1657, %v4225, %v4177
      %v4290 = vsel %vm1657, %v4226, %v4178
      %v4291 = vsel %vm1657, %v4227, %v4179
      %v4292 = vsel %vm1657, %v4228, %v4180
      %v4293 = vrot.slane %v4101, 1
      %v4294 = vrot.slane %v4105, 1
      %v4295 = vrot.slane %v4109, 1
      %v4296 = vrot.slane %v4113, 1
      %v4297 = vrot.slane %v4117, 1
      %v4298 = vrot.slane %v4121, 1
      %v4299 = vrot.slane %v4125, 1
      %v4300 = vrot.slane %v4129, 1
      %v4301 = vrot.slane %v4133, 1
      %v4302 = vrot.slane %v4137, 1
      %v4303 = vrot.slane %v4141, 1
      %v4304 = vrot.slane %v4145, 1
      %v4305 = vrot.slane %v4149, 1
      %v4306 = vrot.slane %v4153, 1
      %v4307 = vrot.slane %v4157, 1
      %v4308 = vrot.slane %v4161, 1
      %v4309 = vrot.slane %v4102, 1
      %v4310 = vrot.slane %v4106, 1
      %v4311 = vrot.slane %v4110, 1
      %v4312 = vrot.slane %v4114, 1
      %v4313 = vrot.slane %v4118, 1
      %v4314 = vrot.slane %v4122, 1
      %v4315 = vrot.slane %v4126, 1
      %v4316 = vrot.slane %v4130, 1
      %v4317 = vrot.slane %v4134, 1
      %v4318 = vrot.slane %v4138, 1
      %v4319 = vrot.slane %v4142, 1
      %v4320 = vrot.slane %v4146, 1
      %v4321 = vrot.slane %v4150, 1
      %v4322 = vrot.slane %v4154, 1
      %v4323 = vrot.slane %v4158, 1
      %v4324 = vrot.slane %v4162, 1
      %v4325 = vrot.slane %v4103, 1
      %v4326 = vrot.slane %v4107, 1
      %v4327 = vrot.slane %v4111, 1
      %v4328 = vrot.slane %v4115, 1
      %v4329 = vrot.slane %v4119, 1
      %v4330 = vrot.slane %v4123, 1
      %v4331 = vrot.slane %v4127, 1
      %v4332 = vrot.slane %v4131, 1
      %v4333 = vrot.slane %v4135, 1
      %v4334 = vrot.slane %v4139, 1
      %v4335 = vrot.slane %v4143, 1
      %v4336 = vrot.slane %v4147, 1
      %v4337 = vrot.slane %v4151, 1
      %v4338 = vrot.slane %v4155, 1
      %v4339 = vrot.slane %v4159, 1
      %v4340 = vrot.slane %v4163, 1
      %v4341 = vrot.slane %v4104, 1
      %v4342 = vrot.slane %v4108, 1
      %v4343 = vrot.slane %v4112, 1
      %v4344 = vrot.slane %v4116, 1
      %v4345 = vrot.slane %v4120, 1
      %v4346 = vrot.slane %v4124, 1
      %v4347 = vrot.slane %v4128, 1
      %v4348 = vrot.slane %v4132, 1
      %v4349 = vrot.slane %v4136, 1
      %v4350 = vrot.slane %v4140, 1
      %v4351 = vrot.slane %v4144, 1
      %v4352 = vrot.slane %v4148, 1
      %v4353 = vrot.slane %v4152, 1
      %v4354 = vrot.slane %v4156, 1
      %v4355 = vrot.slane %v4160, 1
      %v4356 = vrot.slane %v4164, 1
      %v4357 = vsel %vm1850, %v4325, %v4341
      %v4358 = vsel %vm1850, %v4326, %v4342
      %v4359 = vsel %vm1850, %v4327, %v4343
      %v4360 = vsel %vm1850, %v4328, %v4344
      %v4361 = vsel %vm1850, %v4329, %v4345
      %v4362 = vsel %vm1850, %v4330, %v4346
      %v4363 = vsel %vm1850, %v4331, %v4347
      %v4364 = vsel %vm1850, %v4332, %v4348
      %v4365 = vsel %vm1850, %v4333, %v4349
      %v4366 = vsel %vm1850, %v4334, %v4350
      %v4367 = vsel %vm1850, %v4335, %v4351
      %v4368 = vsel %vm1850, %v4336, %v4352
      %v4369 = vsel %vm1850, %v4337, %v4353
      %v4370 = vsel %vm1850, %v4338, %v4354
      %v4371 = vsel %vm1850, %v4339, %v4355
      %v4372 = vsel %vm1850, %v4340, %v4356
      %v4373 = vsel %vm1850, %v4309, %v4325
      %v4374 = vsel %vm1850, %v4310, %v4326
      %v4375 = vsel %vm1850, %v4311, %v4327
      %v4376 = vsel %vm1850, %v4312, %v4328
      %v4377 = vsel %vm1850, %v4313, %v4329
      %v4378 = vsel %vm1850, %v4314, %v4330
      %v4379 = vsel %vm1850, %v4315, %v4331
      %v4380 = vsel %vm1850, %v4316, %v4332
      %v4381 = vsel %vm1850, %v4317, %v4333
      %v4382 = vsel %vm1850, %v4318, %v4334
      %v4383 = vsel %vm1850, %v4319, %v4335
      %v4384 = vsel %vm1850, %v4320, %v4336
      %v4385 = vsel %vm1850, %v4321, %v4337
      %v4386 = vsel %vm1850, %v4322, %v4338
      %v4387 = vsel %vm1850, %v4323, %v4339
      %v4388 = vsel %vm1850, %v4324, %v4340
      %v4389 = vsel %vm1850, %v4293, %v4309
      %v4390 = vsel %vm1850, %v4294, %v4310
      %v4391 = vsel %vm1850, %v4295, %v4311
      %v4392 = vsel %vm1850, %v4296, %v4312
      %v4393 = vsel %vm1850, %v4297, %v4313
      %v4394 = vsel %vm1850, %v4298, %v4314
      %v4395 = vsel %vm1850, %v4299, %v4315
      %v4396 = vsel %vm1850, %v4300, %v4316
      %v4397 = vsel %vm1850, %v4301, %v4317
      %v4398 = vsel %vm1850, %v4302, %v4318
      %v4399 = vsel %vm1850, %v4303, %v4319
      %v4400 = vsel %vm1850, %v4304, %v4320
      %v4401 = vsel %vm1850, %v4305, %v4321
      %v4402 = vsel %vm1850, %v4306, %v4322
      %v4403 = vsel %vm1850, %v4307, %v4323
      %v4404 = vsel %vm1850, %v4308, %v4324
      %v4405 = vsel %vm1850, %v4341, %v4293
      %v4406 = vsel %vm1850, %v4342, %v4294
      %v4407 = vsel %vm1850, %v4343, %v4295
      %v4408 = vsel %vm1850, %v4344, %v4296
      %v4409 = vsel %vm1850, %v4345, %v4297
      %v4410 = vsel %vm1850, %v4346, %v4298
      %v4411 = vsel %vm1850, %v4347, %v4299
      %v4412 = vsel %vm1850, %v4348, %v4300
      %v4413 = vsel %vm1850, %v4349, %v4301
      %v4414 = vsel %vm1850, %v4350, %v4302
      %v4415 = vsel %vm1850, %v4351, %v4303
      %v4416 = vsel %vm1850, %v4352, %v4304
      %v4417 = vsel %vm1850, %v4353, %v4305
      %v4418 = vsel %vm1850, %v4354, %v4306
      %v4419 = vsel %vm1850, %v4355, %v4307
      %v4420 = vsel %vm1850, %v4356, %v4308
      %v4421 = vmax.f32 %v4277, %v4389
      %v4422 = vmax.f32 %v4261, %v4373
      %v4423 = vmax.f32 %v4245, %v4357
      %v4424 = vmax.f32 %v4229, %v4405
      %v4425 = vmax.f32 %v4278, %v4390
      %v4426 = vmax.f32 %v4262, %v4374
      %v4427 = vmax.f32 %v4246, %v4358
      %v4428 = vmax.f32 %v4230, %v4406
      %v4429 = vmax.f32 %v4279, %v4391
      %v4430 = vmax.f32 %v4263, %v4375
      %v4431 = vmax.f32 %v4247, %v4359
      %v4432 = vmax.f32 %v4231, %v4407
      %v4433 = vmax.f32 %v4280, %v4392
      %v4434 = vmax.f32 %v4264, %v4376
      %v4435 = vmax.f32 %v4248, %v4360
      %v4436 = vmax.f32 %v4232, %v4408
      %v4437 = vmax.f32 %v4281, %v4393
      %v4438 = vmax.f32 %v4265, %v4377
      %v4439 = vmax.f32 %v4249, %v4361
      %v4440 = vmax.f32 %v4233, %v4409
      %v4441 = vmax.f32 %v4282, %v4394
      %v4442 = vmax.f32 %v4266, %v4378
      %v4443 = vmax.f32 %v4250, %v4362
      %v4444 = vmax.f32 %v4234, %v4410
      %v4445 = vmax.f32 %v4283, %v4395
      %v4446 = vmax.f32 %v4267, %v4379
      %v4447 = vmax.f32 %v4251, %v4363
      %v4448 = vmax.f32 %v4235, %v4411
      %v4449 = vmax.f32 %v4284, %v4396
      %v4450 = vmax.f32 %v4268, %v4380
      %v4451 = vmax.f32 %v4252, %v4364
      %v4452 = vmax.f32 %v4236, %v4412
      %v4453 = vmax.f32 %v4285, %v4397
      %v4454 = vmax.f32 %v4269, %v4381
      %v4455 = vmax.f32 %v4253, %v4365
      %v4456 = vmax.f32 %v4237, %v4413
      %v4457 = vmax.f32 %v4286, %v4398
      %v4458 = vmax.f32 %v4270, %v4382
      %v4459 = vmax.f32 %v4254, %v4366
      %v4460 = vmax.f32 %v4238, %v4414
      %v4461 = vmax.f32 %v4287, %v4399
      %v4462 = vmax.f32 %v4271, %v4383
      %v4463 = vmax.f32 %v4255, %v4367
      %v4464 = vmax.f32 %v4239, %v4415
      %v4465 = vmax.f32 %v4288, %v4400
      %v4466 = vmax.f32 %v4272, %v4384
      %v4467 = vmax.f32 %v4256, %v4368
      %v4468 = vmax.f32 %v4240, %v4416
      %v4469 = vmax.f32 %v4289, %v4401
      %v4470 = vmax.f32 %v4273, %v4385
      %v4471 = vmax.f32 %v4257, %v4369
      %v4472 = vmax.f32 %v4241, %v4417
      %v4473 = vmax.f32 %v4290, %v4402
      %v4474 = vmax.f32 %v4274, %v4386
      %v4475 = vmax.f32 %v4258, %v4370
      %v4476 = vmax.f32 %v4242, %v4418
      %v4477 = vmax.f32 %v4291, %v4403
      %v4478 = vmax.f32 %v4275, %v4387
      %v4479 = vmax.f32 %v4259, %v4371
      %v4480 = vmax.f32 %v4243, %v4419
      %v4481 = vmax.f32 %v4292, %v4404
      %v4482 = vmax.f32 %v4276, %v4388
      %v4483 = vmax.f32 %v4260, %v4372
      %v4484 = vmax.f32 %v4244, %v4420
      %v4485 = vrot.slane %v4421, 6
      %v4486 = vrot.slane %v4425, 6
      %v4487 = vrot.slane %v4429, 6
      %v4488 = vrot.slane %v4433, 6
      %v4489 = vrot.slane %v4437, 6
      %v4490 = vrot.slane %v4441, 6
      %v4491 = vrot.slane %v4445, 6
      %v4492 = vrot.slane %v4449, 6
      %v4493 = vrot.slane %v4453, 6
      %v4494 = vrot.slane %v4457, 6
      %v4495 = vrot.slane %v4461, 6
      %v4496 = vrot.slane %v4465, 6
      %v4497 = vrot.slane %v4469, 6
      %v4498 = vrot.slane %v4473, 6
      %v4499 = vrot.slane %v4477, 6
      %v4500 = vrot.slane %v4481, 6
      %v4501 = vrot.slane %v4422, 6
      %v4502 = vrot.slane %v4426, 6
      %v4503 = vrot.slane %v4430, 6
      %v4504 = vrot.slane %v4434, 6
      %v4505 = vrot.slane %v4438, 6
      %v4506 = vrot.slane %v4442, 6
      %v4507 = vrot.slane %v4446, 6
      %v4508 = vrot.slane %v4450, 6
      %v4509 = vrot.slane %v4454, 6
      %v4510 = vrot.slane %v4458, 6
      %v4511 = vrot.slane %v4462, 6
      %v4512 = vrot.slane %v4466, 6
      %v4513 = vrot.slane %v4470, 6
      %v4514 = vrot.slane %v4474, 6
      %v4515 = vrot.slane %v4478, 6
      %v4516 = vrot.slane %v4482, 6
      %v4517 = vrot.slane %v4423, 6
      %v4518 = vrot.slane %v4427, 6
      %v4519 = vrot.slane %v4431, 6
      %v4520 = vrot.slane %v4435, 6
      %v4521 = vrot.slane %v4439, 6
      %v4522 = vrot.slane %v4443, 6
      %v4523 = vrot.slane %v4447, 6
      %v4524 = vrot.slane %v4451, 6
      %v4525 = vrot.slane %v4455, 6
      %v4526 = vrot.slane %v4459, 6
      %v4527 = vrot.slane %v4463, 6
      %v4528 = vrot.slane %v4467, 6
      %v4529 = vrot.slane %v4471, 6
      %v4530 = vrot.slane %v4475, 6
      %v4531 = vrot.slane %v4479, 6
      %v4532 = vrot.slane %v4483, 6
      %v4533 = vrot.slane %v4424, 6
      %v4534 = vrot.slane %v4428, 6
      %v4535 = vrot.slane %v4432, 6
      %v4536 = vrot.slane %v4436, 6
      %v4537 = vrot.slane %v4440, 6
      %v4538 = vrot.slane %v4444, 6
      %v4539 = vrot.slane %v4448, 6
      %v4540 = vrot.slane %v4452, 6
      %v4541 = vrot.slane %v4456, 6
      %v4542 = vrot.slane %v4460, 6
      %v4543 = vrot.slane %v4464, 6
      %v4544 = vrot.slane %v4468, 6
      %v4545 = vrot.slane %v4472, 6
      %v4546 = vrot.slane %v4476, 6
      %v4547 = vrot.slane %v4480, 6
      %v4548 = vrot.slane %v4484, 6
      %v4549 = vsel %vm3279, %v4517, %v4533
      %v4550 = vsel %vm3279, %v4518, %v4534
      %v4551 = vsel %vm3279, %v4519, %v4535
      %v4552 = vsel %vm3279, %v4520, %v4536
      %v4553 = vsel %vm3279, %v4521, %v4537
      %v4554 = vsel %vm3279, %v4522, %v4538
      %v4555 = vsel %vm3279, %v4523, %v4539
      %v4556 = vsel %vm3279, %v4524, %v4540
      %v4557 = vsel %vm3279, %v4525, %v4541
      %v4558 = vsel %vm3279, %v4526, %v4542
      %v4559 = vsel %vm3279, %v4527, %v4543
      %v4560 = vsel %vm3279, %v4528, %v4544
      %v4561 = vsel %vm3279, %v4529, %v4545
      %v4562 = vsel %vm3279, %v4530, %v4546
      %v4563 = vsel %vm3279, %v4531, %v4547
      %v4564 = vsel %vm3279, %v4532, %v4548
      %v4565 = vsel %vm3279, %v4501, %v4517
      %v4566 = vsel %vm3279, %v4502, %v4518
      %v4567 = vsel %vm3279, %v4503, %v4519
      %v4568 = vsel %vm3279, %v4504, %v4520
      %v4569 = vsel %vm3279, %v4505, %v4521
      %v4570 = vsel %vm3279, %v4506, %v4522
      %v4571 = vsel %vm3279, %v4507, %v4523
      %v4572 = vsel %vm3279, %v4508, %v4524
      %v4573 = vsel %vm3279, %v4509, %v4525
      %v4574 = vsel %vm3279, %v4510, %v4526
      %v4575 = vsel %vm3279, %v4511, %v4527
      %v4576 = vsel %vm3279, %v4512, %v4528
      %v4577 = vsel %vm3279, %v4513, %v4529
      %v4578 = vsel %vm3279, %v4514, %v4530
      %v4579 = vsel %vm3279, %v4515, %v4531
      %v4580 = vsel %vm3279, %v4516, %v4532
      %v4581 = vsel %vm3279, %v4485, %v4501
      %v4582 = vsel %vm3279, %v4486, %v4502
      %v4583 = vsel %vm3279, %v4487, %v4503
      %v4584 = vsel %vm3279, %v4488, %v4504
      %v4585 = vsel %vm3279, %v4489, %v4505
      %v4586 = vsel %vm3279, %v4490, %v4506
      %v4587 = vsel %vm3279, %v4491, %v4507
      %v4588 = vsel %vm3279, %v4492, %v4508
      %v4589 = vsel %vm3279, %v4493, %v4509
      %v4590 = vsel %vm3279, %v4494, %v4510
      %v4591 = vsel %vm3279, %v4495, %v4511
      %v4592 = vsel %vm3279, %v4496, %v4512
      %v4593 = vsel %vm3279, %v4497, %v4513
      %v4594 = vsel %vm3279, %v4498, %v4514
      %v4595 = vsel %vm3279, %v4499, %v4515
      %v4596 = vsel %vm3279, %v4500, %v4516
      %v4597 = vsel %vm3279, %v4533, %v4485
      %v4598 = vsel %vm3279, %v4534, %v4486
      %v4599 = vsel %vm3279, %v4535, %v4487
      %v4600 = vsel %vm3279, %v4536, %v4488
      %v4601 = vsel %vm3279, %v4537, %v4489
      %v4602 = vsel %vm3279, %v4538, %v4490
      %v4603 = vsel %vm3279, %v4539, %v4491
      %v4604 = vsel %vm3279, %v4540, %v4492
      %v4605 = vsel %vm3279, %v4541, %v4493
      %v4606 = vsel %vm3279, %v4542, %v4494
      %v4607 = vsel %vm3279, %v4543, %v4495
      %v4608 = vsel %vm3279, %v4544, %v4496
      %v4609 = vsel %vm3279, %v4545, %v4497
      %v4610 = vsel %vm3279, %v4546, %v4498
      %v4611 = vsel %vm3279, %v4547, %v4499
      %v4612 = vsel %vm3279, %v4548, %v4500
      %v4613 = vrot.slane %v4421, 2
      %v4614 = vrot.slane %v4425, 2
      %v4615 = vrot.slane %v4429, 2
      %v4616 = vrot.slane %v4433, 2
      %v4617 = vrot.slane %v4437, 2
      %v4618 = vrot.slane %v4441, 2
      %v4619 = vrot.slane %v4445, 2
      %v4620 = vrot.slane %v4449, 2
      %v4621 = vrot.slane %v4453, 2
      %v4622 = vrot.slane %v4457, 2
      %v4623 = vrot.slane %v4461, 2
      %v4624 = vrot.slane %v4465, 2
      %v4625 = vrot.slane %v4469, 2
      %v4626 = vrot.slane %v4473, 2
      %v4627 = vrot.slane %v4477, 2
      %v4628 = vrot.slane %v4481, 2
      %v4629 = vrot.slane %v4422, 2
      %v4630 = vrot.slane %v4426, 2
      %v4631 = vrot.slane %v4430, 2
      %v4632 = vrot.slane %v4434, 2
      %v4633 = vrot.slane %v4438, 2
      %v4634 = vrot.slane %v4442, 2
      %v4635 = vrot.slane %v4446, 2
      %v4636 = vrot.slane %v4450, 2
      %v4637 = vrot.slane %v4454, 2
      %v4638 = vrot.slane %v4458, 2
      %v4639 = vrot.slane %v4462, 2
      %v4640 = vrot.slane %v4466, 2
      %v4641 = vrot.slane %v4470, 2
      %v4642 = vrot.slane %v4474, 2
      %v4643 = vrot.slane %v4478, 2
      %v4644 = vrot.slane %v4482, 2
      %v4645 = vrot.slane %v4423, 2
      %v4646 = vrot.slane %v4427, 2
      %v4647 = vrot.slane %v4431, 2
      %v4648 = vrot.slane %v4435, 2
      %v4649 = vrot.slane %v4439, 2
      %v4650 = vrot.slane %v4443, 2
      %v4651 = vrot.slane %v4447, 2
      %v4652 = vrot.slane %v4451, 2
      %v4653 = vrot.slane %v4455, 2
      %v4654 = vrot.slane %v4459, 2
      %v4655 = vrot.slane %v4463, 2
      %v4656 = vrot.slane %v4467, 2
      %v4657 = vrot.slane %v4471, 2
      %v4658 = vrot.slane %v4475, 2
      %v4659 = vrot.slane %v4479, 2
      %v4660 = vrot.slane %v4483, 2
      %v4661 = vrot.slane %v4424, 2
      %v4662 = vrot.slane %v4428, 2
      %v4663 = vrot.slane %v4432, 2
      %v4664 = vrot.slane %v4436, 2
      %v4665 = vrot.slane %v4440, 2
      %v4666 = vrot.slane %v4444, 2
      %v4667 = vrot.slane %v4448, 2
      %v4668 = vrot.slane %v4452, 2
      %v4669 = vrot.slane %v4456, 2
      %v4670 = vrot.slane %v4460, 2
      %v4671 = vrot.slane %v4464, 2
      %v4672 = vrot.slane %v4468, 2
      %v4673 = vrot.slane %v4472, 2
      %v4674 = vrot.slane %v4476, 2
      %v4675 = vrot.slane %v4480, 2
      %v4676 = vrot.slane %v4484, 2
      %v4677 = vsel %vm3360, %v4645, %v4661
      %v4678 = vsel %vm3360, %v4646, %v4662
      %v4679 = vsel %vm3360, %v4647, %v4663
      %v4680 = vsel %vm3360, %v4648, %v4664
      %v4681 = vsel %vm3360, %v4649, %v4665
      %v4682 = vsel %vm3360, %v4650, %v4666
      %v4683 = vsel %vm3360, %v4651, %v4667
      %v4684 = vsel %vm3360, %v4652, %v4668
      %v4685 = vsel %vm3360, %v4653, %v4669
      %v4686 = vsel %vm3360, %v4654, %v4670
      %v4687 = vsel %vm3360, %v4655, %v4671
      %v4688 = vsel %vm3360, %v4656, %v4672
      %v4689 = vsel %vm3360, %v4657, %v4673
      %v4690 = vsel %vm3360, %v4658, %v4674
      %v4691 = vsel %vm3360, %v4659, %v4675
      %v4692 = vsel %vm3360, %v4660, %v4676
      %v4693 = vsel %vm3360, %v4629, %v4645
      %v4694 = vsel %vm3360, %v4630, %v4646
      %v4695 = vsel %vm3360, %v4631, %v4647
      %v4696 = vsel %vm3360, %v4632, %v4648
      %v4697 = vsel %vm3360, %v4633, %v4649
      %v4698 = vsel %vm3360, %v4634, %v4650
      %v4699 = vsel %vm3360, %v4635, %v4651
      %v4700 = vsel %vm3360, %v4636, %v4652
      %v4701 = vsel %vm3360, %v4637, %v4653
      %v4702 = vsel %vm3360, %v4638, %v4654
      %v4703 = vsel %vm3360, %v4639, %v4655
      %v4704 = vsel %vm3360, %v4640, %v4656
      %v4705 = vsel %vm3360, %v4641, %v4657
      %v4706 = vsel %vm3360, %v4642, %v4658
      %v4707 = vsel %vm3360, %v4643, %v4659
      %v4708 = vsel %vm3360, %v4644, %v4660
      %v4709 = vsel %vm3360, %v4613, %v4629
      %v4710 = vsel %vm3360, %v4614, %v4630
      %v4711 = vsel %vm3360, %v4615, %v4631
      %v4712 = vsel %vm3360, %v4616, %v4632
      %v4713 = vsel %vm3360, %v4617, %v4633
      %v4714 = vsel %vm3360, %v4618, %v4634
      %v4715 = vsel %vm3360, %v4619, %v4635
      %v4716 = vsel %vm3360, %v4620, %v4636
      %v4717 = vsel %vm3360, %v4621, %v4637
      %v4718 = vsel %vm3360, %v4622, %v4638
      %v4719 = vsel %vm3360, %v4623, %v4639
      %v4720 = vsel %vm3360, %v4624, %v4640
      %v4721 = vsel %vm3360, %v4625, %v4641
      %v4722 = vsel %vm3360, %v4626, %v4642
      %v4723 = vsel %vm3360, %v4627, %v4643
      %v4724 = vsel %vm3360, %v4628, %v4644
      %v4725 = vsel %vm3360, %v4661, %v4613
      %v4726 = vsel %vm3360, %v4662, %v4614
      %v4727 = vsel %vm3360, %v4663, %v4615
      %v4728 = vsel %vm3360, %v4664, %v4616
      %v4729 = vsel %vm3360, %v4665, %v4617
      %v4730 = vsel %vm3360, %v4666, %v4618
      %v4731 = vsel %vm3360, %v4667, %v4619
      %v4732 = vsel %vm3360, %v4668, %v4620
      %v4733 = vsel %vm3360, %v4669, %v4621
      %v4734 = vsel %vm3360, %v4670, %v4622
      %v4735 = vsel %vm3360, %v4671, %v4623
      %v4736 = vsel %vm3360, %v4672, %v4624
      %v4737 = vsel %vm3360, %v4673, %v4625
      %v4738 = vsel %vm3360, %v4674, %v4626
      %v4739 = vsel %vm3360, %v4675, %v4627
      %v4740 = vsel %vm3360, %v4676, %v4628
      %v4741 = vmax.f32 %v4597, %v4709
      %v4742 = vmax.f32 %v4581, %v4693
      %v4743 = vmax.f32 %v4565, %v4677
      %v4744 = vmax.f32 %v4549, %v4725
      %v4745 = vmax.f32 %v4598, %v4710
      %v4746 = vmax.f32 %v4582, %v4694
      %v4747 = vmax.f32 %v4566, %v4678
      %v4748 = vmax.f32 %v4550, %v4726
      %v4749 = vmax.f32 %v4599, %v4711
      %v4750 = vmax.f32 %v4583, %v4695
      %v4751 = vmax.f32 %v4567, %v4679
      %v4752 = vmax.f32 %v4551, %v4727
      %v4753 = vmax.f32 %v4600, %v4712
      %v4754 = vmax.f32 %v4584, %v4696
      %v4755 = vmax.f32 %v4568, %v4680
      %v4756 = vmax.f32 %v4552, %v4728
      %v4757 = vmax.f32 %v4601, %v4713
      %v4758 = vmax.f32 %v4585, %v4697
      %v4759 = vmax.f32 %v4569, %v4681
      %v4760 = vmax.f32 %v4553, %v4729
      %v4761 = vmax.f32 %v4602, %v4714
      %v4762 = vmax.f32 %v4586, %v4698
      %v4763 = vmax.f32 %v4570, %v4682
      %v4764 = vmax.f32 %v4554, %v4730
      %v4765 = vmax.f32 %v4603, %v4715
      %v4766 = vmax.f32 %v4587, %v4699
      %v4767 = vmax.f32 %v4571, %v4683
      %v4768 = vmax.f32 %v4555, %v4731
      %v4769 = vmax.f32 %v4604, %v4716
      %v4770 = vmax.f32 %v4588, %v4700
      %v4771 = vmax.f32 %v4572, %v4684
      %v4772 = vmax.f32 %v4556, %v4732
      %v4773 = vmax.f32 %v4605, %v4717
      %v4774 = vmax.f32 %v4589, %v4701
      %v4775 = vmax.f32 %v4573, %v4685
      %v4776 = vmax.f32 %v4557, %v4733
      %v4777 = vmax.f32 %v4606, %v4718
      %v4778 = vmax.f32 %v4590, %v4702
      %v4779 = vmax.f32 %v4574, %v4686
      %v4780 = vmax.f32 %v4558, %v4734
      %v4781 = vmax.f32 %v4607, %v4719
      %v4782 = vmax.f32 %v4591, %v4703
      %v4783 = vmax.f32 %v4575, %v4687
      %v4784 = vmax.f32 %v4559, %v4735
      %v4785 = vmax.f32 %v4608, %v4720
      %v4786 = vmax.f32 %v4592, %v4704
      %v4787 = vmax.f32 %v4576, %v4688
      %v4788 = vmax.f32 %v4560, %v4736
      %v4789 = vmax.f32 %v4609, %v4721
      %v4790 = vmax.f32 %v4593, %v4705
      %v4791 = vmax.f32 %v4577, %v4689
      %v4792 = vmax.f32 %v4561, %v4737
      %v4793 = vmax.f32 %v4610, %v4722
      %v4794 = vmax.f32 %v4594, %v4706
      %v4795 = vmax.f32 %v4578, %v4690
      %v4796 = vmax.f32 %v4562, %v4738
      %v4797 = vmax.f32 %v4611, %v4723
      %v4798 = vmax.f32 %v4595, %v4707
      %v4799 = vmax.f32 %v4579, %v4691
      %v4800 = vmax.f32 %v4563, %v4739
      %v4801 = vmax.f32 %v4612, %v4724
      %v4802 = vmax.f32 %v4596, %v4708
      %v4803 = vmax.f32 %v4580, %v4692
      %v4804 = vmax.f32 %v4564, %v4740
      %v4805 = vrot.slane %v4741, 6
      %v4806 = vrot.slane %v4745, 6
      %v4807 = vrot.slane %v4749, 6
      %v4808 = vrot.slane %v4753, 6
      %v4809 = vrot.slane %v4757, 6
      %v4810 = vrot.slane %v4761, 6
      %v4811 = vrot.slane %v4765, 6
      %v4812 = vrot.slane %v4769, 6
      %v4813 = vrot.slane %v4773, 6
      %v4814 = vrot.slane %v4777, 6
      %v4815 = vrot.slane %v4781, 6
      %v4816 = vrot.slane %v4785, 6
      %v4817 = vrot.slane %v4789, 6
      %v4818 = vrot.slane %v4793, 6
      %v4819 = vrot.slane %v4797, 6
      %v4820 = vrot.slane %v4801, 6
      %v4821 = vrot.slane %v4742, 6
      %v4822 = vrot.slane %v4746, 6
      %v4823 = vrot.slane %v4750, 6
      %v4824 = vrot.slane %v4754, 6
      %v4825 = vrot.slane %v4758, 6
      %v4826 = vrot.slane %v4762, 6
      %v4827 = vrot.slane %v4766, 6
      %v4828 = vrot.slane %v4770, 6
      %v4829 = vrot.slane %v4774, 6
      %v4830 = vrot.slane %v4778, 6
      %v4831 = vrot.slane %v4782, 6
      %v4832 = vrot.slane %v4786, 6
      %v4833 = vrot.slane %v4790, 6
      %v4834 = vrot.slane %v4794, 6
      %v4835 = vrot.slane %v4798, 6
      %v4836 = vrot.slane %v4802, 6
      %v4837 = vrot.slane %v4743, 6
      %v4838 = vrot.slane %v4747, 6
      %v4839 = vrot.slane %v4751, 6
      %v4840 = vrot.slane %v4755, 6
      %v4841 = vrot.slane %v4759, 6
      %v4842 = vrot.slane %v4763, 6
      %v4843 = vrot.slane %v4767, 6
      %v4844 = vrot.slane %v4771, 6
      %v4845 = vrot.slane %v4775, 6
      %v4846 = vrot.slane %v4779, 6
      %v4847 = vrot.slane %v4783, 6
      %v4848 = vrot.slane %v4787, 6
      %v4849 = vrot.slane %v4791, 6
      %v4850 = vrot.slane %v4795, 6
      %v4851 = vrot.slane %v4799, 6
      %v4852 = vrot.slane %v4803, 6
      %v4853 = vsel %vm3279, %v4821, %v4837
      %v4854 = vsel %vm3279, %v4822, %v4838
      %v4855 = vsel %vm3279, %v4823, %v4839
      %v4856 = vsel %vm3279, %v4824, %v4840
      %v4857 = vsel %vm3279, %v4825, %v4841
      %v4858 = vsel %vm3279, %v4826, %v4842
      %v4859 = vsel %vm3279, %v4827, %v4843
      %v4860 = vsel %vm3279, %v4828, %v4844
      %v4861 = vsel %vm3279, %v4829, %v4845
      %v4862 = vsel %vm3279, %v4830, %v4846
      %v4863 = vsel %vm3279, %v4831, %v4847
      %v4864 = vsel %vm3279, %v4832, %v4848
      %v4865 = vsel %vm3279, %v4833, %v4849
      %v4866 = vsel %vm3279, %v4834, %v4850
      %v4867 = vsel %vm3279, %v4835, %v4851
      %v4868 = vsel %vm3279, %v4836, %v4852
      %v4869 = vsel %vm3279, %v4805, %v4821
      %v4870 = vsel %vm3279, %v4806, %v4822
      %v4871 = vsel %vm3279, %v4807, %v4823
      %v4872 = vsel %vm3279, %v4808, %v4824
      %v4873 = vsel %vm3279, %v4809, %v4825
      %v4874 = vsel %vm3279, %v4810, %v4826
      %v4875 = vsel %vm3279, %v4811, %v4827
      %v4876 = vsel %vm3279, %v4812, %v4828
      %v4877 = vsel %vm3279, %v4813, %v4829
      %v4878 = vsel %vm3279, %v4814, %v4830
      %v4879 = vsel %vm3279, %v4815, %v4831
      %v4880 = vsel %vm3279, %v4816, %v4832
      %v4881 = vsel %vm3279, %v4817, %v4833
      %v4882 = vsel %vm3279, %v4818, %v4834
      %v4883 = vsel %vm3279, %v4819, %v4835
      %v4884 = vsel %vm3279, %v4820, %v4836
      %v4885 = vrot.slane %v4742, 2
      %v4886 = vrot.slane %v4746, 2
      %v4887 = vrot.slane %v4750, 2
      %v4888 = vrot.slane %v4754, 2
      %v4889 = vrot.slane %v4758, 2
      %v4890 = vrot.slane %v4762, 2
      %v4891 = vrot.slane %v4766, 2
      %v4892 = vrot.slane %v4770, 2
      %v4893 = vrot.slane %v4774, 2
      %v4894 = vrot.slane %v4778, 2
      %v4895 = vrot.slane %v4782, 2
      %v4896 = vrot.slane %v4786, 2
      %v4897 = vrot.slane %v4790, 2
      %v4898 = vrot.slane %v4794, 2
      %v4899 = vrot.slane %v4798, 2
      %v4900 = vrot.slane %v4802, 2
      %v4901 = vrot.slane %v4743, 2
      %v4902 = vrot.slane %v4747, 2
      %v4903 = vrot.slane %v4751, 2
      %v4904 = vrot.slane %v4755, 2
      %v4905 = vrot.slane %v4759, 2
      %v4906 = vrot.slane %v4763, 2
      %v4907 = vrot.slane %v4767, 2
      %v4908 = vrot.slane %v4771, 2
      %v4909 = vrot.slane %v4775, 2
      %v4910 = vrot.slane %v4779, 2
      %v4911 = vrot.slane %v4783, 2
      %v4912 = vrot.slane %v4787, 2
      %v4913 = vrot.slane %v4791, 2
      %v4914 = vrot.slane %v4795, 2
      %v4915 = vrot.slane %v4799, 2
      %v4916 = vrot.slane %v4803, 2
      %v4917 = vrot.slane %v4744, 2
      %v4918 = vrot.slane %v4748, 2
      %v4919 = vrot.slane %v4752, 2
      %v4920 = vrot.slane %v4756, 2
      %v4921 = vrot.slane %v4760, 2
      %v4922 = vrot.slane %v4764, 2
      %v4923 = vrot.slane %v4768, 2
      %v4924 = vrot.slane %v4772, 2
      %v4925 = vrot.slane %v4776, 2
      %v4926 = vrot.slane %v4780, 2
      %v4927 = vrot.slane %v4784, 2
      %v4928 = vrot.slane %v4788, 2
      %v4929 = vrot.slane %v4792, 2
      %v4930 = vrot.slane %v4796, 2
      %v4931 = vrot.slane %v4800, 2
      %v4932 = vrot.slane %v4804, 2
      %v4933 = vsel %vm3360, %v4901, %v4917
      %v4934 = vsel %vm3360, %v4902, %v4918
      %v4935 = vsel %vm3360, %v4903, %v4919
      %v4936 = vsel %vm3360, %v4904, %v4920
      %v4937 = vsel %vm3360, %v4905, %v4921
      %v4938 = vsel %vm3360, %v4906, %v4922
      %v4939 = vsel %vm3360, %v4907, %v4923
      %v4940 = vsel %vm3360, %v4908, %v4924
      %v4941 = vsel %vm3360, %v4909, %v4925
      %v4942 = vsel %vm3360, %v4910, %v4926
      %v4943 = vsel %vm3360, %v4911, %v4927
      %v4944 = vsel %vm3360, %v4912, %v4928
      %v4945 = vsel %vm3360, %v4913, %v4929
      %v4946 = vsel %vm3360, %v4914, %v4930
      %v4947 = vsel %vm3360, %v4915, %v4931
      %v4948 = vsel %vm3360, %v4916, %v4932
      %v4949 = vsel %vm3360, %v4885, %v4901
      %v4950 = vsel %vm3360, %v4886, %v4902
      %v4951 = vsel %vm3360, %v4887, %v4903
      %v4952 = vsel %vm3360, %v4888, %v4904
      %v4953 = vsel %vm3360, %v4889, %v4905
      %v4954 = vsel %vm3360, %v4890, %v4906
      %v4955 = vsel %vm3360, %v4891, %v4907
      %v4956 = vsel %vm3360, %v4892, %v4908
      %v4957 = vsel %vm3360, %v4893, %v4909
      %v4958 = vsel %vm3360, %v4894, %v4910
      %v4959 = vsel %vm3360, %v4895, %v4911
      %v4960 = vsel %vm3360, %v4896, %v4912
      %v4961 = vsel %vm3360, %v4897, %v4913
      %v4962 = vsel %vm3360, %v4898, %v4914
      %v4963 = vsel %vm3360, %v4899, %v4915
      %v4964 = vsel %vm3360, %v4900, %v4916
      %v4965 = vmax.f32 %v4869, %v4949
      %v4966 = vmax.f32 %v4853, %v4933
      %v4967 = vmax.f32 %v4870, %v4950
      %v4968 = vmax.f32 %v4854, %v4934
      %v4969 = vmax.f32 %v4871, %v4951
      %v4970 = vmax.f32 %v4855, %v4935
      %v4971 = vmax.f32 %v4872, %v4952
      %v4972 = vmax.f32 %v4856, %v4936
      %v4973 = vmax.f32 %v4873, %v4953
      %v4974 = vmax.f32 %v4857, %v4937
      %v4975 = vmax.f32 %v4874, %v4954
      %v4976 = vmax.f32 %v4858, %v4938
      %v4977 = vmax.f32 %v4875, %v4955
      %v4978 = vmax.f32 %v4859, %v4939
      %v4979 = vmax.f32 %v4876, %v4956
      %v4980 = vmax.f32 %v4860, %v4940
      %v4981 = vmax.f32 %v4877, %v4957
      %v4982 = vmax.f32 %v4861, %v4941
      %v4983 = vmax.f32 %v4878, %v4958
      %v4984 = vmax.f32 %v4862, %v4942
      %v4985 = vmax.f32 %v4879, %v4959
      %v4986 = vmax.f32 %v4863, %v4943
      %v4987 = vmax.f32 %v4880, %v4960
      %v4988 = vmax.f32 %v4864, %v4944
      %v4989 = vmax.f32 %v4881, %v4961
      %v4990 = vmax.f32 %v4865, %v4945
      %v4991 = vmax.f32 %v4882, %v4962
      %v4992 = vmax.f32 %v4866, %v4946
      %v4993 = vmax.f32 %v4883, %v4963
      %v4994 = vmax.f32 %v4867, %v4947
      %v4995 = vmax.f32 %v4884, %v4964
      %v4996 = vmax.f32 %v4868, %v4948
      %v4997 = vpack.c.bf16 %v4966, %v4965
      %v4998 = vpack.c.bf16 %v4968, %v4967
      %v4999 = vpack.c.bf16 %v4970, %v4969
      %v5000 = vpack.c.bf16 %v4972, %v4971
      %v5001 = vpack.c.bf16 %v4974, %v4973
      %v5002 = vpack.c.bf16 %v4976, %v4975
      %v5003 = vpack.c.bf16 %v4978, %v4977
      %v5004 = vpack.c.bf16 %v4980, %v4979
      %v5005 = vpack.c.bf16 %v4982, %v4981
      %v5006 = vpack.c.bf16 %v4984, %v4983
      %v5007 = vpack.c.bf16 %v4986, %v4985
      %v5008 = vpack.c.bf16 %v4988, %v4987
      %v5009 = vpack.c.bf16 %v4990, %v4989
      %v5010 = vpack.c.bf16 %v4992, %v4991
      %v5011 = vpack.c.bf16 %v4994, %v4993
      %v5012 = vpack.c.bf16 %v4996, %v4995
      %v5014 = vsel %vm226, %v4997, 0
      %v5017 = vsel %vm226, %v4998, 0
      %v5020 = vsel %vm226, %v4999, 0
      %v5023 = vsel %vm226, %v5000, 0
      %v5026 = vsel %vm226, %v5001, 0
      %v5029 = vsel %vm226, %v5002, 0
      %v5032 = vsel %vm226, %v5003, 0
      %v5035 = vsel %vm226, %v5004, 0
      %v5038 = vsel %vm226, %v5005, 0
      %v5041 = vsel %vm226, %v5006, 0
      %v5044 = vsel %vm226, %v5007, 0
      %v5047 = vsel %vm226, %v5008, 0
      %v5050 = vsel %vm226, %v5009, 0
      %v5053 = vsel %vm226, %v5010, 0
      %v5056 = vsel %vm226, %v5011, 0
      %v5059 = vsel %vm226, %v5012, 0
      %v5062 = vsel %vm789, %v717, 0
      %5064 = vmatprep.subr.bf16.mxu0 0
      %5065 = vmatpush1.bf16.msra.mxu0 %v5062
      %5066 = vmatprep.subr.bf16.mxu0 0
      %5067 = vmatpush1.bf16.msra.mxu0 0
      %5068 = vmatprep.subr.bf16.mxu0 0
      %5069 = vmatpush1.bf16.msra.mxu0 0
      %5070 = vmatprep.subr.bf16.mxu0 0
      %5071 = vmatpush1.bf16.msra.mxu0 0
      %5072 = vmatprep.subr.bf16.mxu0 0
      %5073 = vmatpush1.bf16.msra.mxu0 0
      %5074 = vmatprep.subr.bf16.mxu0 0
      %5075 = vmatpush1.bf16.msra.mxu0 0
      %5076 = vmatprep.subr.bf16.mxu0 0
      %5077 = vmatpush1.bf16.msra.mxu0 0
      %5078 = vmatprep.subr.bf16.mxu0 0
      %5079 = vmatpush1.bf16.msra.mxu0 0
      %5080 = vmatprep.subr.bf16.mxu0 0
      %5081 = vmatpush1.bf16.msra.mxu0 0
      %5082 = vmatprep.subr.bf16.mxu0 0
      %5083 = vmatpush1.bf16.msra.mxu0 0
      %5084 = vmatprep.subr.bf16.mxu0 0
      %5085 = vmatpush1.bf16.msra.mxu0 0
      %5086 = vmatprep.subr.bf16.mxu0 0
      %5087 = vmatpush1.bf16.msra.mxu0 0
      %5088 = vmatprep.subr.bf16.mxu0 0
      %5089 = vmatpush1.bf16.msra.mxu0 0
      %5090 = vmatprep.subr.bf16.mxu0 0
      %5091 = vmatpush1.bf16.msra.mxu0 0
      %5092 = vmatprep.subr.bf16.mxu0 0
      %5093 = vmatpush1.bf16.msra.mxu0 0
      %5094 = vmatprep.subr.bf16.mxu0 0
      %5095 = vmatpush1.bf16.msra.mxu0 0
      %5096 = vmatprep.mubr.bf16.mxu0 0
      %5097 = vmatmul.mubr.bf16.gmra.mrb[0].mxu0 %v5014
      %v5098 = vpop.f32.mrb[0].mxu0
      %v5099 = vadd.f32 0.0, %v5098
      %v5100 = vpop.f32.mrb[0].mxu0
      %v5101 = vpop.f32.mrb[0].mxu0
      %v5102 = vadd.f32 0.0, %v5101
      %v5103 = vpop.f32.mrb[0].mxu0
      %5104 = vmatprep.mubr.bf16.mxu0 0
      %5105 = vmatmul.mubr.bf16.gmra.mrb[0].mxu0 %v5017
      %v5106 = vpop.f32.mrb[0].mxu0
      %v5107 = vadd.f32 0.0, %v5106
      %v5108 = vpop.f32.mrb[0].mxu0
      %v5109 = vpop.f32.mrb[0].mxu0
      %v5110 = vadd.f32 0.0, %v5109
      %v5111 = vpop.f32.mrb[0].mxu0
      %5112 = vmatprep.mubr.bf16.mxu0 0
      %5113 = vmatmul.mubr.bf16.gmra.mrb[0].mxu0 %v5020
      %v5114 = vpop.f32.mrb[0].mxu0
      %v5115 = vadd.f32 0.0, %v5114
      %v5116 = vpop.f32.mrb[0].mxu0
      %v5117 = vpop.f32.mrb[0].mxu0
      %v5118 = vadd.f32 0.0, %v5117
      %v5119 = vpop.f32.mrb[0].mxu0
      %5120 = vmatprep.mubr.bf16.mxu0 0
      %5121 = vmatmul.mubr.bf16.gmra.mrb[0].mxu0 %v5023
      %v5122 = vpop.f32.mrb[0].mxu0
      %v5123 = vadd.f32 0.0, %v5122
      %v5124 = vpop.f32.mrb[0].mxu0
      %v5125 = vpop.f32.mrb[0].mxu0
      %v5126 = vadd.f32 0.0, %v5125
      %v5127 = vpop.f32.mrb[0].mxu0
      %5128 = vmatprep.mubr.bf16.mxu0 0
      %5129 = vmatmul.mubr.bf16.gmra.mrb[0].mxu0 %v5026
      %v5130 = vpop.f32.mrb[0].mxu0
      %v5131 = vadd.f32 0.0, %v5130
      %v5132 = vpop.f32.mrb[0].mxu0
      %v5133 = vpop.f32.mrb[0].mxu0
      %v5134 = vadd.f32 0.0, %v5133
      %v5135 = vpop.f32.mrb[0].mxu0
      %5136 = vmatprep.mubr.bf16.mxu0 0
      %5137 = vmatmul.mubr.bf16.gmra.mrb[0].mxu0 %v5029
      %v5138 = vpop.f32.mrb[0].mxu0
      %v5139 = vadd.f32 0.0, %v5138
      %v5140 = vpop.f32.mrb[0].mxu0
      %v5141 = vpop.f32.mrb[0].mxu0
      %v5142 = vadd.f32 0.0, %v5141
      %v5143 = vpop.f32.mrb[0].mxu0
      %5144 = vmatprep.mubr.bf16.mxu0 0
      %5145 = vmatmul.mubr.bf16.gmra.mrb[0].mxu0 %v5032
      %v5146 = vpop.f32.mrb[0].mxu0
      %v5147 = vadd.f32 0.0, %v5146
      %v5148 = vpop.f32.mrb[0].mxu0
      %v5149 = vpop.f32.mrb[0].mxu0
      %v5150 = vadd.f32 0.0, %v5149
      %v5151 = vpop.f32.mrb[0].mxu0
      %5152 = vmatprep.mubr.bf16.mxu0 0
      %5153 = vmatmul.mubr.bf16.gmra.mrb[0].mxu0 %v5035
      %v5154 = vpop.f32.mrb[0].mxu0
      %v5155 = vadd.f32 0.0, %v5154
      %v5156 = vpop.f32.mrb[0].mxu0
      %v5157 = vpop.f32.mrb[0].mxu0
      %v5158 = vadd.f32 0.0, %v5157
      %v5159 = vpop.f32.mrb[0].mxu0
      %5160 = vmatprep.mubr.bf16.mxu0 0
      %5161 = vmatmul.mubr.bf16.gmra.mrb[0].mxu0 %v5038
      %v5162 = vpop.f32.mrb[0].mxu0
      %v5163 = vadd.f32 0.0, %v5162
      %v5164 = vpop.f32.mrb[0].mxu0
      %v5165 = vpop.f32.mrb[0].mxu0
      %v5166 = vadd.f32 0.0, %v5165
      %v5167 = vpop.f32.mrb[0].mxu0
      %5168 = vmatprep.mubr.bf16.mxu0 0
      %5169 = vmatmul.mubr.bf16.gmra.mrb[0].mxu0 %v5041
      %v5170 = vpop.f32.mrb[0].mxu0
      %v5171 = vadd.f32 0.0, %v5170
      %v5172 = vpop.f32.mrb[0].mxu0
      %v5173 = vpop.f32.mrb[0].mxu0
      %v5174 = vadd.f32 0.0, %v5173
      %v5175 = vpop.f32.mrb[0].mxu0
      %5176 = vmatprep.mubr.bf16.mxu0 0
      %5177 = vmatmul.mubr.bf16.gmra.mrb[0].mxu0 %v5044
      %v5178 = vpop.f32.mrb[0].mxu0
      %v5179 = vadd.f32 0.0, %v5178
      %v5180 = vpop.f32.mrb[0].mxu0
      %v5181 = vpop.f32.mrb[0].mxu0
      %v5182 = vadd.f32 0.0, %v5181
      %v5183 = vpop.f32.mrb[0].mxu0
      %5184 = vmatprep.mubr.bf16.mxu0 0
      %5185 = vmatmul.mubr.bf16.gmra.mrb[0].mxu0 %v5047
      %v5186 = vpop.f32.mrb[0].mxu0
      %v5187 = vadd.f32 0.0, %v5186
      %v5188 = vpop.f32.mrb[0].mxu0
      %v5189 = vpop.f32.mrb[0].mxu0
      %v5190 = vadd.f32 0.0, %v5189
      %v5191 = vpop.f32.mrb[0].mxu0
      %5192 = vmatprep.mubr.bf16.mxu0 0
      %5193 = vmatmul.mubr.bf16.gmra.mrb[0].mxu0 %v5050
      %v5194 = vpop.f32.mrb[0].mxu0
      %v5195 = vadd.f32 0.0, %v5194
      %v5196 = vpop.f32.mrb[0].mxu0
      %v5197 = vpop.f32.mrb[0].mxu0
      %v5198 = vadd.f32 0.0, %v5197
      %v5199 = vpop.f32.mrb[0].mxu0
      %5200 = vmatprep.mubr.bf16.mxu0 0
      %5201 = vmatmul.mubr.bf16.gmra.mrb[0].mxu0 %v5053
      %v5202 = vpop.f32.mrb[0].mxu0
      %v5203 = vadd.f32 0.0, %v5202
      %v5204 = vpop.f32.mrb[0].mxu0
      %v5205 = vpop.f32.mrb[0].mxu0
      %v5206 = vadd.f32 0.0, %v5205
      %v5207 = vpop.f32.mrb[0].mxu0
      %5208 = vmatprep.mubr.bf16.mxu0 0
      %5209 = vmatmul.mubr.bf16.gmra.mrb[0].mxu0 %v5056
      %v5210 = vpop.f32.mrb[0].mxu0
      %v5211 = vadd.f32 0.0, %v5210
      %v5212 = vpop.f32.mrb[0].mxu0
      %v5213 = vpop.f32.mrb[0].mxu0
      %v5214 = vadd.f32 0.0, %v5213
      %v5215 = vpop.f32.mrb[0].mxu0
      %5216 = vmatprep.mubr.bf16.mxu0 0
      %5217 = vmatmul.mubr.bf16.gmra.mrb[0].mxu0 %v5059
      %v5218 = vpop.f32.mrb[0].mxu0
      %v5219 = vadd.f32 0.0, %v5218
      %v5220 = vpop.f32.mrb[0].mxu0
      %v5221 = vpop.f32.mrb[0].mxu0
      %v5222 = vadd.f32 0.0, %v5221
      %v5223 = vpop.f32.mrb[0].mxu0
      %5224 = vdwg.mxu0
      %v5225 = vadd.f32 %v3653, %v5099
      %v5226 = vadd.f32 %v3654, %v5102
      %v5227 = vadd.f32 %v3655, %v5107
      %v5228 = vadd.f32 %v3656, %v5110
      %v5229 = vadd.f32 %v3657, %v5115
      %v5230 = vadd.f32 %v3658, %v5118
      %v5231 = vadd.f32 %v3659, %v5123
      %v5232 = vadd.f32 %v3660, %v5126
      %v5233 = vadd.f32 %v3661, %v5131
      %v5234 = vadd.f32 %v3662, %v5134
      %v5235 = vadd.f32 %v3663, %v5139
      %v5236 = vadd.f32 %v3664, %v5142
      %v5237 = vadd.f32 %v3665, %v5147
      %v5238 = vadd.f32 %v3666, %v5150
      %v5239 = vadd.f32 %v3667, %v5155
      %v5240 = vadd.f32 %v3668, %v5158
      %v5241 = vadd.f32 %v3669, %v5163
      %v5242 = vadd.f32 %v3670, %v5166
      %v5243 = vadd.f32 %v3671, %v5171
      %v5244 = vadd.f32 %v3672, %v5174
      %v5245 = vadd.f32 %v3673, %v5179
      %v5246 = vadd.f32 %v3674, %v5182
      %v5247 = vadd.f32 %v3675, %v5187
      %v5248 = vadd.f32 %v3676, %v5190
      %v5249 = vadd.f32 %v3677, %v5195
      %v5250 = vadd.f32 %v3678, %v5198
      %v5251 = vadd.f32 %v3679, %v5203
      %v5252 = vadd.f32 %v3680, %v5206
      %v5253 = vadd.f32 %v3681, %v5211
      %v5254 = vadd.f32 %v3682, %v5214
      %v5255 = vadd.f32 %v3683, %v5219
      %v5256 = vadd.f32 %v3684, %v5222
      %vm5257 = vcmp.gt.f32.partialorder %v5225, 0.0
      %vm5258 = vcmp.gt.f32.partialorder %v5226, 0.0
      %vm5259 = vcmp.gt.f32.partialorder %v5227, 0.0
      %vm5260 = vcmp.gt.f32.partialorder %v5228, 0.0
      %vm5261 = vcmp.gt.f32.partialorder %v5229, 0.0
      %vm5262 = vcmp.gt.f32.partialorder %v5230, 0.0
      %vm5263 = vcmp.gt.f32.partialorder %v5231, 0.0
      %vm5264 = vcmp.gt.f32.partialorder %v5232, 0.0
      %vm5265 = vcmp.gt.f32.partialorder %v5233, 0.0
      %vm5266 = vcmp.gt.f32.partialorder %v5234, 0.0
      %vm5267 = vcmp.gt.f32.partialorder %v5235, 0.0
      %vm5268 = vcmp.gt.f32.partialorder %v5236, 0.0
      %vm5269 = vcmp.gt.f32.partialorder %v5237, 0.0
      %vm5270 = vcmp.gt.f32.partialorder %v5238, 0.0
      %vm5271 = vcmp.gt.f32.partialorder %v5239, 0.0
      %vm5272 = vcmp.gt.f32.partialorder %v5240, 0.0
      %vm5273 = vcmp.gt.f32.partialorder %v5241, 0.0
      %vm5274 = vcmp.gt.f32.partialorder %v5242, 0.0
      %vm5275 = vcmp.gt.f32.partialorder %v5243, 0.0
      %vm5276 = vcmp.gt.f32.partialorder %v5244, 0.0
      %vm5277 = vcmp.gt.f32.partialorder %v5245, 0.0
      %vm5278 = vcmp.gt.f32.partialorder %v5246, 0.0
      %vm5279 = vcmp.gt.f32.partialorder %v5247, 0.0
      %vm5280 = vcmp.gt.f32.partialorder %v5248, 0.0
      %vm5281 = vcmp.gt.f32.partialorder %v5249, 0.0
      %vm5282 = vcmp.gt.f32.partialorder %v5250, 0.0
      %vm5283 = vcmp.gt.f32.partialorder %v5251, 0.0
      %vm5284 = vcmp.gt.f32.partialorder %v5252, 0.0
      %vm5285 = vcmp.gt.f32.partialorder %v5253, 0.0
      %vm5286 = vcmp.gt.f32.partialorder %v5254, 0.0
      %vm5287 = vcmp.gt.f32.partialorder %v5255, 0.0
      %vm5288 = vcmp.gt.f32.partialorder %v5256, 0.0
      %v5289 = vmul.f32 %v5225, 0.1
      %v5290 = vmul.f32 %v5226, 0.1
      %v5291 = vmul.f32 %v5227, 0.1
      %v5292 = vmul.f32 %v5228, 0.1
      %v5293 = vmul.f32 %v5229, 0.1
      %v5294 = vmul.f32 %v5230, 0.1
      %v5295 = vmul.f32 %v5231, 0.1
      %v5296 = vmul.f32 %v5232, 0.1
      %v5297 = vmul.f32 %v5233, 0.1
      %v5298 = vmul.f32 %v5234, 0.1
      %v5299 = vmul.f32 %v5235, 0.1
      %v5300 = vmul.f32 %v5236, 0.1
      %v5301 = vmul.f32 %v5237, 0.1
      %v5302 = vmul.f32 %v5238, 0.1
      %v5303 = vmul.f32 %v5239, 0.1
      %v5304 = vmul.f32 %v5240, 0.1
      %v5305 = vmul.f32 %v5241, 0.1
      %v5306 = vmul.f32 %v5242, 0.1
      %v5307 = vmul.f32 %v5243, 0.1
      %v5308 = vmul.f32 %v5244, 0.1
      %v5309 = vmul.f32 %v5245, 0.1
      %v5310 = vmul.f32 %v5246, 0.1
      %v5311 = vmul.f32 %v5247, 0.1
      %v5312 = vmul.f32 %v5248, 0.1
      %v5313 = vmul.f32 %v5249, 0.1
      %v5314 = vmul.f32 %v5250, 0.1
      %v5315 = vmul.f32 %v5251, 0.1
      %v5316 = vmul.f32 %v5252, 0.1
      %v5317 = vmul.f32 %v5253, 0.1
      %v5318 = vmul.f32 %v5254, 0.1
      %v5319 = vmul.f32 %v5255, 0.1
      %v5320 = vmul.f32 %v5256, 0.1
      %v5321 = vsel %vm5257, %v5225, %v5289
      %v5322 = vsel %vm5258, %v5226, %v5290
      %v5323 = vsel %vm5259, %v5227, %v5291
      %v5324 = vsel %vm5260, %v5228, %v5292
      %v5325 = vsel %vm5261, %v5229, %v5293
      %v5326 = vsel %vm5262, %v5230, %v5294
      %v5327 = vsel %vm5263, %v5231, %v5295
      %v5328 = vsel %vm5264, %v5232, %v5296
      %v5329 = vsel %vm5265, %v5233, %v5297
      %v5330 = vsel %vm5266, %v5234, %v5298
      %v5331 = vsel %vm5267, %v5235, %v5299
      %v5332 = vsel %vm5268, %v5236, %v5300
      %v5333 = vsel %vm5269, %v5237, %v5301
      %v5334 = vsel %vm5270, %v5238, %v5302
      %v5335 = vsel %vm5271, %v5239, %v5303
      %v5336 = vsel %vm5272, %v5240, %v5304
      %v5337 = vsel %vm5273, %v5241, %v5305
      %v5338 = vsel %vm5274, %v5242, %v5306
      %v5339 = vsel %vm5275, %v5243, %v5307
      %v5340 = vsel %vm5276, %v5244, %v5308
      %v5341 = vsel %vm5277, %v5245, %v5309
      %v5342 = vsel %vm5278, %v5246, %v5310
      %v5343 = vsel %vm5279, %v5247, %v5311
      %v5344 = vsel %vm5280, %v5248, %v5312
      %v5345 = vsel %vm5281, %v5249, %v5313
      %v5346 = vsel %vm5282, %v5250, %v5314
      %v5347 = vsel %vm5283, %v5251, %v5315
      %v5348 = vsel %vm5284, %v5252, %v5316
      %v5349 = vsel %vm5285, %v5253, %v5317
      %v5350 = vsel %vm5286, %v5254, %v5318
      %v5351 = vsel %vm5287, %v5255, %v5319
      %v5352 = vsel %vm5288, %v5256, %v5320
      %vm5353 = vcmask 64512
      %5354 = vst.msk [vmem:[%s224] sm:$0xff] %vm5353, %v5321
      %5355 = vst.msk [vmem:[%s224 + $0x8] sm:$0xff] %vm5353, %v5322
      %5356 = vst.msk [vmem:[%s224 + $0x10] sm:$0xff] %vm5353, %v5323
      %5357 = vst.msk [vmem:[%s224 + $0x18] sm:$0xff] %vm5353, %v5324
      %5358 = vst.msk [vmem:[%s224 + $0x20] sm:$0xff] %vm5353, %v5325
      %5359 = vst.msk [vmem:[%s224 + $0x28] sm:$0xff] %vm5353, %v5326
      %5360 = vst.msk [vmem:[%s224 + $0x30] sm:$0xff] %vm5353, %v5327
      %5361 = vst.msk [vmem:[%s224 + $0x38] sm:$0xff] %vm5353, %v5328
      %5362 = vst.msk [vmem:[%s224 + $0x40] sm:$0xff] %vm5353, %v5329
      %5363 = vst.msk [vmem:[%s224 + $0x48] sm:$0xff] %vm5353, %v5330
      %5364 = vst.msk [vmem:[%s224 + $0x50] sm:$0xff] %vm5353, %v5331
      %5365 = vst.msk [vmem:[%s224 + $0x58] sm:$0xff] %vm5353, %v5332
      %5366 = vst.msk [vmem:[%s224 + $0x60] sm:$0xff] %vm5353, %v5333
      %5367 = vst.msk [vmem:[%s224 + $0x68] sm:$0xff] %vm5353, %v5334
      %5368 = vst.msk [vmem:[%s224 + $0x70] sm:$0xff] %vm5353, %v5335
      %5369 = vst.msk [vmem:[%s224 + $0x78] sm:$0xff] %vm5353, %v5336
      %5370 = vst.msk [vmem:[%s224 + $0x80] sm:$0xff] %vm5353, %v5337
      %5371 = vst.msk [vmem:[%s224 + $0x88] sm:$0xff] %vm5353, %v5338
      %5372 = vst.msk [vmem:[%s224 + $0x90] sm:$0xff] %vm5353, %v5339
      %5373 = vst.msk [vmem:[%s224 + $0x98] sm:$0xff] %vm5353, %v5340
      %5374 = vst.msk [vmem:[%s224 + $0xa0] sm:$0xff] %vm5353, %v5341
      %5375 = vst.msk [vmem:[%s224 + $0xa8] sm:$0xff] %vm5353, %v5342
      %5376 = vst.msk [vmem:[%s224 + $0xb0] sm:$0xff] %vm5353, %v5343
      %5377 = vst.msk [vmem:[%s224 + $0xb8] sm:$0xff] %vm5353, %v5344
      %5378 = vst.msk [vmem:[%s224 + $0xc0] sm:$0xff] %vm5353, %v5345
      %5379 = vst.msk [vmem:[%s224 + $0xc8] sm:$0xff] %vm5353, %v5346
      %5380 = vst.msk [vmem:[%s224 + $0xd0] sm:$0xff] %vm5353, %v5347
      %5381 = vst.msk [vmem:[%s224 + $0xd8] sm:$0xff] %vm5353, %v5348
      %5382 = vst.msk [vmem:[%s224 + $0xe0] sm:$0xff] %vm5353, %v5349
      %5383 = vst.msk [vmem:[%s224 + $0xe8] sm:$0xff] %vm5353, %v5350
      %5384 = vst.msk [vmem:[%s224 + $0xf0] sm:$0xff] %vm5353, %v5351
      %5385 = vst.msk [vmem:[%s224 + $0xf8] sm:$0xff] %vm5353, %v5352
      %p5386 = scmp.lt.s32.totalorder %s16, 1
      %s5387 = scalar_select %p5386, %s16, 1
      %s5388 = smul.addr %s5387, 32
      %s5389 = smul.addr %s5388, 8
      %s5390 = scalar_lea.vmem %s5, %s5389
      // Predicated region
      $region41: #{tpu_custom_call.1} parent=39 // pred_check
        %p5391 = pneg %p144
      $region42: #{tpu_custom_call.1} parent=39 // pred_check_branch
        %5393 = sbr.rel (%p5391) target = $region44
      $region43: #{tpu_custom_call.1} parent=39 // pred_region
        _
      $region44: #{tpu_custom_call.1} parent=39 // pred_fallthru
        _
    $region40: #{tpu_custom_call.1} parent=5 // pred_fallthru
      _
    %p5394 = scmp.le.s32.totalorder 2, %s11
    // Predicated region
    $region45: #{tpu_custom_call.1} parent=5 // pred_check
      %p5395 = pneg %p5394
    $region46: #{tpu_custom_call.1} parent=5 // pred_check_branch
      %5397 = sbr.rel (%p5395) target = $region48
    $region47: #{tpu_custom_call.1} parent=5 // pred_region
      %s5398 = ssub.s32 %s11, 2
      // Predicated region
      $region49: #{tpu_custom_call.1} parent=47 // pred_check
        %p5399 = pneg %p150
      $region50: #{tpu_custom_call.1} parent=47 // pred_check_branch
        %5401 = sbr.rel (%p5399) target = $region52
      $region51: #{tpu_custom_call.1} parent=47 // pred_region
        %p5402 = scmp.lt.s32.totalorder %s17, 1
        %s5403 = scalar_select %p5402, %s17, 1
        %s5404 = smul.addr %s5403, 32
        %s5405 = smul.addr %s5404, 8
        %s5406 = scalar_lea.vmem %s5, %s5405
      $region52: #{tpu_custom_call.1} parent=47 // pred_fallthru
        _
    $region48: #{tpu_custom_call.1} parent=5 // pred_fallthru
      _
  $region6: #{tpu_custom_call.1} parent=0 // loop_footer
    %s15 = sadd.s32 1, %s11
  $region7: #{tpu_custom_call.1} parent=0 // loop_footer_branch
    %10 = sbr.rel target = $region3
  $region8: #{tpu_custom_call.1} parent=0 // loop_exit
    _

</llo_original>
